<compile_context>
chip_gen: v7x
topology: tpu7x:2x2x1
jax: 0.10.0
libtpu: 0.0.40
codegen_flags: <defaults>
</compile_context>

<pallas_src>
import math

import jax
import jax.numpy as jnp
from jax import lax
from jax.experimental import pallas as pl
from jax.experimental.pallas import tpu as pltpu


NUM_HIDDENS = 256      # required: FFN outputs 256 and is residual-added to num_hiddens
NUM_HEADS = 4
FFN_HIDDENS = 1024


def _layer_norm(x, gamma, beta, eps=1e-5):
    """PyTorch nn.LayerNorm over the last dim (biased variance, eps=1e-5), f32."""
    mu = jnp.mean(x, axis=-1, keepdims=True)
    xc = x - mu
    var = jnp.mean(xc * xc, axis=-1, keepdims=True)
    return xc * lax.rsqrt(var + eps) * gamma + beta


# Row layout of the (14, 256) f32 vector slab.
_VB_BV_C1, _VB_BV_C2, _VB_BV_S1, _VB_BV_S2 = 0, 1, 2, 3
_VB_G3, _VB_BE3, _VB_G4, _VB_BE4 = 4, 5, 6, 7
_VB_G5, _VB_BE5, _VB_G6, _VB_BE6 = 8, 9, 10, 11
_VB_B12, _VB_B22 = 12, 13


def _bridge_tower_kernel(
    m1_ref, m2_ref,          # (block_n, 256) f32 row tiles
    wval_ref,                # (256, 4*256)  bf16: [wv_c1 | wv_c2 | wv_s1 | wv_s2]
    wup_ref,                 # (256, 2*1024) bf16: [w11 | w21]
    wdown_ref,               # (1024, 2*256) bf16: [w12 | w22]
    vec_ref,                 # (14, 256)     f32 vector slab (biases / gamma / beta)
    bup_ref,                 # (2, 1024)     f32: [b11 ; b21]
    out1_ref, out2_ref,      # (block_n, 256) f32
):
    f32 = jnp.float32
    bf16 = jnp.bfloat16
    D = NUM_HIDDENS
    F = FFN_HIDDENS

    m1 = m1_ref[...]
    m2 = m2_ref[...]

    def vrow(i):
        return vec_ref[i, :]  # (256,) f32, static index -> free slice

    def vproj(values_f32, col, bias_row, queries_f32):
        # Degenerate MHA: softmax over the singleton key axis is identically 1,
        # so the output is exactly ReLU(values @ Wv + bv) + queries.
        w = wval_ref[:, col * D:(col + 1) * D]                         # bf16
        y = jnp.dot(values_f32.astype(bf16), w, preferred_element_type=f32)
        return jax.nn.relu(y + vrow(bias_row)) + queries_f32

    # cross attention
    a1 = vproj(m2, 0, _VB_BV_C1, m1)
    a2 = vproj(m1, 1, _VB_BV_C2, m2)
    # TODO(synk): np.save('layers_features/*.npy', ...) host file I/O is not
    # representable inside a TPU kernel; intermediates are not dumped.

    # AddNorm3 / AddNorm4 (dropout == identity at inference), f32 math
    n1 = _layer_norm(a1 + m1, vrow(_VB_G3), vrow(_VB_BE3))
    n2 = _layer_norm(a2 + m2, vrow(_VB_G4), vrow(_VB_BE4))

    # self attention
    s1 = vproj(n1, 2, _VB_BV_S1, n1)
    s2 = vproj(n2, 3, _VB_BV_S2, n2)

    # FFN: 256 -> 1024 -> 256, bf16 operands, f32 accumulation
    def ffn(x_f32, k):
        wu = wup_ref[:, k * F:(k + 1) * F]
        wd = wdown_ref[:, k * D:(k + 1) * D]
        bu = bup_ref[k, :]
        bd = vrow(_VB_B12 if k == 0 else _VB_B22)
        h = jax.nn.relu(
            jnp.dot(x_f32.astype(bf16), wu, preferred_element_type=f32) + bu)
        return jnp.dot(h.astype(bf16), wd, preferred_element_type=f32) + bd

    f1 = ffn(s1, 0)
    f2 = ffn(s2, 1)

    # AddNorm5 / AddNorm6
    out1_ref[...] = _layer_norm(f1 + s1, vrow(_VB_G5), vrow(_VB_BE5))
    out2_ref[...] = _layer_norm(f2 + s2, vrow(_VB_G6), vrow(_VB_BE6))


def prepare_weights(params):
    """Pack the 24 parameter arrays into 5 lane-dense slabs (weights in bf16).

    Call once per set of weights; the result can be reused across calls/layers.
    """
    bf16 = jnp.bfloat16
    f32 = jnp.float32
    w_val = jnp.concatenate(
        [params["wv_c1"], params["wv_c2"], params["wv_s1"], params["wv_s2"]],
        axis=1).astype(bf16)                                  # (256, 1024)
    w_up = jnp.concatenate([params["w11"], params["w21"]], axis=1).astype(bf16)   # (256, 2048)
    w_down = jnp.concatenate([params["w12"], params["w22"]], axis=1).astype(bf16)  # (1024, 512)
    vecs = jnp.concatenate(
        [params["bv_c1"], params["bv_c2"], params["bv_s1"], params["bv_s2"],
         params["g3"], params["be3"], params["g4"], params["be4"],
         params["g5"], params["be5"], params["g6"], params["be6"],
         params["b12"], params["b22"]], axis=0).astype(f32)   # (14, 256)
    b_up = jnp.concatenate([params["b11"], params["b21"]], axis=0).astype(f32)      # (2, 1024)
    return (w_val, w_up, w_down, vecs, b_up)


def bridge_tower_block2_forward(modality_1, modality_2, params=None, *,
                                prepared=None, block_n=None):
    """modality_1, modality_2: (N, 256) float32.  Returns (out1, out2), each (N, 256)."""
    m1 = modality_1.astype(jnp.float32)
    m2 = modality_2.astype(jnp.float32)
    N, D = m1.shape

    if prepared is None:
        prepared = prepare_weights(params)
    w_val, w_up, w_down, vecs, b_up = prepared

    if block_n is None:
        # Single tile for small N (avoids duplicating resident weights across
        # TensorCores on v7x); 512-row tiles for large N (fills the MXU M dim
        # and amortizes per-grid-step overhead) while staying well inside VMEM.
        block_n = N if N <= 512 else 512
    grid = (pl.cdiv(N, block_n),)

    row_spec = pl.BlockSpec((block_n, D), lambda i: (i, 0))
    full_vmem = pl.BlockSpec(memory_space=pltpu.MemorySpace.VMEM)
    weight_args = [w_val, w_up, w_down, vecs, b_up]

    # Advisory cost estimate: 8 matmuls per row + 4 LayerNorm rsqrt per row.
    matmul_flops = N * (4 * 2 * D * D + 2 * 2 * D * FFN_HIDDENS + 2 * 2 * FFN_HIDDENS * D)
    bytes_accessed = int(sum(int(a.size) * a.dtype.itemsize for a in weight_args)
                         + 4 * N * D * 4)
    cost = pl.CostEstimate(flops=int(matmul_flops),
                           transcendentals=int(4 * N),
                           bytes_accessed=bytes_accessed)

    dim_sem = ("arbitrary",) if grid[0] == 1 else ("parallel",)

    out1, out2 = pl.pallas_call(
        _bridge_tower_kernel,
        out_shape=(jax.ShapeDtypeStruct((N, D), jnp.float32),
                   jax.ShapeDtypeStruct((N, D), jnp.float32)),
        grid=grid,
        in_specs=[row_spec, row_spec] + [full_vmem] * len(weight_args),
        out_specs=(row_spec, row_spec),
        compiler_params=pltpu.CompilerParams(
            dimension_semantics=dim_sem,
            vmem_limit_bytes=48 * 1024 * 1024),
        cost_estimate=cost,
    )(m1, m2, *weight_args)
    return out1, out2


# ---------------- pure-JAX reference (literal translation, for checking) ----------------
_HI = lax.Precision.HIGHEST


def _ref_mha(p, queries, keys, values, num_heads):
    q = jax.nn.relu(jnp.dot(queries, p["wq"], precision=_HI) + p["bq"])
    k = jax.nn.relu(jnp.dot(keys, p["wk"], precision=_HI) + p["bk"])
    v = jax.nn.relu(jnp.dot(values, p["wv"], precision=_HI) + p["bv"])
    n, h = q.shape
    hh = h // num_heads
    q_s = q.reshape(n, num_heads, 1, hh)
    k_s = k.reshape(n, num_heads, 1, hh)
    v_s = v.reshape(n, num_heads, 1, hh)
    score = jnp.matmul(q_s, jnp.swapaxes(k_s, -1, -2), precision=_HI) / math.sqrt(hh)
    score = jax.nn.softmax(score, axis=-1)           # size-1 axis -> all ones
    a = jnp.matmul(score, v_s, precision=_HI)        # (n, heads, 1, hh)
    a = jnp.transpose(a, (0, 1, 3, 2)).reshape(n, h)
    return a + queries


def _ref_layer_norm(x, g, b, eps=1e-5):
    mu = jnp.mean(x, axis=-1, keepdims=True)
    var = jnp.mean((x - mu) ** 2, axis=-1, keepdims=True)
    return (x - mu) / jnp.sqrt(var + eps) * g + b


def reference_forward(m1, m2, params, num_heads=NUM_HEADS):
    a1 = _ref_mha(params["cross1"], m1, m2, m2, num_heads)
    a2 = _ref_mha(params["cross2"], m2, m2, m1, num_heads)
    n1 = _ref_layer_norm(a1 + m1, params["g3"], params["be3"])
    n2 = _ref_layer_norm(a2 + m2, params["g4"], params["be4"])
    s1 = _ref_mha(params["self1"], n1, n1, n1, num_heads)
    s2 = _ref_mha(params["self2"], n2, n2, n2, num_heads)
    f1 = (jnp.dot(jax.nn.relu(jnp.dot(s1, params["w11"], precision=_HI) + params["b11"]),
                  params["w12"], precision=_HI) + params["b12"])
    f2 = (jnp.dot(jax.nn.relu(jnp.dot(s2, params["w21"], precision=_HI) + params["b21"]),
                  params["w22"], precision=_HI) + params["b22"])
    o1 = _ref_layer_norm(f1 + s1, params["g5"], params["be5"])
    o2 = _ref_layer_norm(f2 + s2, params["g6"], params["be6"])
    return o1, o2


def init_params(key, num_hiddens=NUM_HIDDENS, ffn_hiddens=FFN_HIDDENS):
    keys = iter(jax.random.split(key, 64))

    def linear(in_dim, out_dim):
        # PyTorch nn.Linear default init, weight stored pre-transposed (in, out).
        s = 1.0 / math.sqrt(in_dim)
        w = jax.random.uniform(next(keys), (in_dim, out_dim), jnp.float32, -s, s)
        b = jax.random.uniform(next(keys), (1, out_dim), jnp.float32, -s, s)
        return w, b

    def attention():
        wq, bq = linear(num_hiddens, num_hiddens)   # numerically dead in forward
        wk, bk = linear(num_hiddens, num_hiddens)   # numerically dead in forward
        wv, bv = linear(num_hiddens, num_hiddens)
        return dict(wq=wq, bq=bq, wk=wk, bk=bk, wv=wv, bv=bv)

    def layernorm():
        # learnable affine; perturbed away from (1, 0) so the test exercises it
        g = 1.0 + 0.1 * jax.random.uniform(next(keys), (1, num_hiddens), jnp.float32, -1.0, 1.0)
        b = 0.1 * jax.random.uniform(next(keys), (1, num_hiddens), jnp.float32, -1.0, 1.0)
        return g, b

    cross1, cross2 = attention(), attention()
    self1, self2 = attention(), attention()
    g3, be3 = layernorm()
    g4, be4 = layernorm()
    g5, be5 = layernorm()
    g6, be6 = layernorm()
    w11, b11 = linear(num_hiddens, ffn_hiddens)
    w12, b12 = linear(ffn_hiddens, num_hiddens)
    w21, b21 = linear(num_hiddens, ffn_hiddens)
    w22, b22 = linear(ffn_hiddens, num_hiddens)

    return dict(
        cross1=cross1, cross2=cross2, self1=self1, self2=self2,
        wv_c1=cross1["wv"], bv_c1=cross1["bv"],
        wv_c2=cross2["wv"], bv_c2=cross2["bv"],
        wv_s1=self1["wv"], bv_s1=self1["bv"],
        wv_s2=self2["wv"], bv_s2=self2["bv"],
        g3=g3, be3=be3, g4=g4, be4=be4, g5=g5, be5=be5, g6=g6, be6=be6,
        w11=w11, b11=b11, w12=w12, b12=b12,
        w21=w21, b21=b21, w22=w22, b22=b22,
    )


if __name__ == "__main__":
    N = 8  # number of rows (tokens); num_hiddens must be 256 (FFN output dim)
    key = jax.random.PRNGKey(0)
    k1, k2, kp = jax.random.split(key, 3)
    modality_1 = jax.random.normal(k1, (N, NUM_HIDDENS), dtype=jnp.float32)
    modality_2 = jax.random.normal(k2, (N, NUM_HIDDENS), dtype=jnp.float32)
    params = init_params(kp)

    # Pack/cast weights once (bf16 matmul slabs, f32 vector slab); reusable.
    prepared = prepare_weights(params)

    out1, out2 = bridge_tower_block2_forward(modality_1, modality_2, params,
                                             prepared=prepared)
    out1 = jax.block_until_ready(out1)
    out2 = jax.block_until_ready(out2)

    ref1, ref2 = reference_forward(modality_1, modality_2, params)
    assert out1.shape == (N, NUM_HIDDENS) and out2.shape == (N, NUM_HIDDENS)
    # bf16 weights/operands with f32 accumulation vs. full-f32 reference:
    # LayerNorm outputs are O(1), so a 3e-2 abs/rel tolerance is appropriate.
    err1 = jnp.max(jnp.abs(out1 - ref1))
    err2 = jnp.max(jnp.abs(out2 - ref2))
    assert jnp.allclose(out1, ref1, rtol=3e-2, atol=3e-2), f"max abs diff out1 {err1}"
    assert jnp.allclose(out2, ref2, rtol=3e-2, atol=3e-2), f"max abs diff out2 {err2}"

    print("KERNEL_OK")
</pallas_src>

<mosaic_0001>
module attributes {stable_mosaic.version = 11 : i64} {
  func.func @_bridge_tower_kernel(%arg0: i32, %arg1: memref<8x256xf32, #tpu.memory_space<vmem>>, %arg2: memref<8x256xf32, #tpu.memory_space<vmem>>, %arg3: memref<256x1024xbf16, #tpu.memory_space<vmem>>, %arg4: memref<256x2048xbf16, #tpu.memory_space<vmem>>, %arg5: memref<1024x512xbf16, #tpu.memory_space<vmem>>, %arg6: memref<14x256xf32, #tpu.memory_space<vmem>>, %arg7: memref<2x1024xf32, #tpu.memory_space<vmem>>, %arg8: memref<8x256xf32, #tpu.memory_space<vmem>>, %arg9: memref<8x256xf32, #tpu.memory_space<vmem>>) attributes {dimension_semantics = [#tpu.dimension_semantics<arbitrary>], iteration_bounds = array<i64: 1>, scalar_prefetch = 0 : i64, scratch_operands = 0 : i64, tpu.core_type = #tpu.core_type<tc>, window_params = [{transform_indices = @transform_0, window_bounds = array<i64: 8, 256>}, {transform_indices = @transform_1, window_bounds = array<i64: 8, 256>}, {pipeline_mode = #tpu.pipeline_mode<synchronous>, transform_indices = @transform_2, window_bounds = array<i64: 256, 1024>}, {pipeline_mode = #tpu.pipeline_mode<synchronous>, transform_indices = @transform_3, window_bounds = array<i64: 256, 2048>}, {pipeline_mode = #tpu.pipeline_mode<synchronous>, transform_indices = @transform_4, window_bounds = array<i64: 1024, 512>}, {pipeline_mode = #tpu.pipeline_mode<synchronous>, transform_indices = @transform_5, window_bounds = array<i64: 14, 256>}, {pipeline_mode = #tpu.pipeline_mode<synchronous>, transform_indices = @transform_6, window_bounds = array<i64: 2, 1024>}, {transform_indices = @transform_7, window_bounds = array<i64: 8, 256>}, {transform_indices = @transform_8, window_bounds = array<i64: 8, 256>}]} {
    %c0 = arith.constant 0 : index
    %c0_0 = arith.constant 0 : index
    %0 = vector.load %arg1[%c0, %c0_0] : memref<8x256xf32, #tpu.memory_space<vmem>>, vector<8x256xf32>
    %c0_1 = arith.constant 0 : index
    %c0_2 = arith.constant 0 : index
    %1 = vector.load %arg2[%c0_1, %c0_2] : memref<8x256xf32, #tpu.memory_space<vmem>>, vector<8x256xf32>
    %c0_3 = arith.constant 0 : index
    %c0_4 = arith.constant 0 : index
    %2 = vector.load %arg3[%c0_3, %c0_4] : memref<256x1024xbf16, #tpu.memory_space<vmem>>, vector<256x256xbf16>
    %3 = arith.truncf %1 : vector<8x256xf32> to vector<8x256xbf16>
    %cst = arith.constant dense<0.000000e+00> : vector<8x256xf32>
    %4 = tpu.matmul %3, %2, %cst {dimension_numbers = #tpu.dot_dimension_numbers<[1], [0], [0], [1], [0, 0, 1, 1], [], []>} : vector<8x256xbf16>, vector<256x256xbf16>, vector<8x256xf32> -> vector<8x256xf32>
    %c0_5 = arith.constant 0 : index
    %c0_6 = arith.constant 0 : index
    %5 = vector.load %arg6[%c0_5, %c0_6] : memref<14x256xf32, #tpu.memory_space<vmem>>, vector<1x256xf32>
    %6 = vector.shape_cast %5 : vector<1x256xf32> to vector<256xf32>
    %7 = vector.shape_cast %6 : vector<256xf32> to vector<1x256xf32>
    %8 = vector.broadcast %7 : vector<1x256xf32> to vector<8x256xf32>
    %9 = arith.addf %4, %8 : vector<8x256xf32>
    %cst_7 = arith.constant 0.000000e+00 : f32
    %10 = vector.broadcast %cst_7 : f32 to vector<8x256xf32>
    %11 = arith.maximumf %9, %10 : vector<8x256xf32>
    %12 = arith.addf %11, %0 : vector<8x256xf32>
    %c0_8 = arith.constant 0 : index
    %c256 = arith.constant 256 : index
    %13 = vector.load %arg3[%c0_8, %c256] : memref<256x1024xbf16, #tpu.memory_space<vmem>>, vector<256x256xbf16>
    %14 = arith.truncf %0 : vector<8x256xf32> to vector<8x256xbf16>
    %cst_9 = arith.constant dense<0.000000e+00> : vector<8x256xf32>
    %15 = tpu.matmul %14, %13, %cst_9 {dimension_numbers = #tpu.dot_dimension_numbers<[1], [0], [0], [1], [0, 0, 1, 1], [], []>} : vector<8x256xbf16>, vector<256x256xbf16>, vector<8x256xf32> -> vector<8x256xf32>
    %c1 = arith.constant 1 : index
    %c0_10 = arith.constant 0 : index
    %16 = vector.load %arg6[%c1, %c0_10] : memref<14x256xf32, #tpu.memory_space<vmem>>, vector<1x256xf32>
    %17 = vector.shape_cast %16 : vector<1x256xf32> to vector<256xf32>
    %18 = vector.shape_cast %17 : vector<256xf32> to vector<1x256xf32>
    %19 = vector.broadcast %18 : vector<1x256xf32> to vector<8x256xf32>
    %20 = arith.addf %15, %19 : vector<8x256xf32>
    %cst_11 = arith.constant 0.000000e+00 : f32
    %21 = vector.broadcast %cst_11 : f32 to vector<8x256xf32>
    %22 = arith.maximumf %20, %21 : vector<8x256xf32>
    %23 = arith.addf %22, %1 : vector<8x256xf32>
    %24 = arith.addf %12, %0 : vector<8x256xf32>
    %c4 = arith.constant 4 : index
    %c0_12 = arith.constant 0 : index
    %25 = vector.load %arg6[%c4, %c0_12] : memref<14x256xf32, #tpu.memory_space<vmem>>, vector<1x256xf32>
    %26 = vector.shape_cast %25 : vector<1x256xf32> to vector<256xf32>
    %c5 = arith.constant 5 : index
    %c0_13 = arith.constant 0 : index
    %27 = vector.load %arg6[%c5, %c0_13] : memref<14x256xf32, #tpu.memory_space<vmem>>, vector<1x256xf32>
    %28 = vector.shape_cast %27 : vector<1x256xf32> to vector<256xf32>
    %cst_14 = arith.constant dense<0.000000e+00> : vector<8xf32>
    %29 = vector.multi_reduction <add>, %24, %cst_14 [1] : vector<8x256xf32> to vector<8xf32>
    %30 = vector.shape_cast %29 : vector<8xf32> to vector<8x1xf32>
    %cst_15 = arith.constant 2.560000e+02 : f32
    %31 = vector.broadcast %cst_15 : f32 to vector<8x1xf32>
    %32 = arith.divf %30, %31 : vector<8x1xf32>
    %33 = vector.broadcast %32 : vector<8x1xf32> to vector<8x256xf32>
    %34 = arith.subf %24, %33 : vector<8x256xf32>
    %35 = arith.mulf %34, %34 : vector<8x256xf32>
    %cst_16 = arith.constant dense<0.000000e+00> : vector<8xf32>
    %36 = vector.multi_reduction <add>, %35, %cst_16 [1] : vector<8x256xf32> to vector<8xf32>
    %37 = vector.shape_cast %36 : vector<8xf32> to vector<8x1xf32>
    %cst_17 = arith.constant 2.560000e+02 : f32
    %38 = vector.broadcast %cst_17 : f32 to vector<8x1xf32>
    %39 = arith.divf %37, %38 : vector<8x1xf32>
    %cst_18 = arith.constant 9.99999974E-6 : f32
    %40 = vector.broadcast %cst_18 : f32 to vector<8x1xf32>
    %41 = arith.addf %39, %40 : vector<8x1xf32>
    %42 = math.rsqrt %41 : vector<8x1xf32>
    %43 = vector.broadcast %42 : vector<8x1xf32> to vector<8x256xf32>
    %44 = arith.mulf %34, %43 : vector<8x256xf32>
    %45 = vector.shape_cast %26 : vector<256xf32> to vector<1x256xf32>
    %46 = vector.broadcast %45 : vector<1x256xf32> to vector<8x256xf32>
    %47 = arith.mulf %44, %46 : vector<8x256xf32>
    %48 = vector.shape_cast %28 : vector<256xf32> to vector<1x256xf32>
    %49 = vector.broadcast %48 : vector<1x256xf32> to vector<8x256xf32>
    %50 = arith.addf %47, %49 : vector<8x256xf32>
    %51 = arith.addf %23, %1 : vector<8x256xf32>
    %c6 = arith.constant 6 : index
    %c0_19 = arith.constant 0 : index
    %52 = vector.load %arg6[%c6, %c0_19] : memref<14x256xf32, #tpu.memory_space<vmem>>, vector<1x256xf32>
    %53 = vector.shape_cast %52 : vector<1x256xf32> to vector<256xf32>
    %c7 = arith.constant 7 : index
    %c0_20 = arith.constant 0 : index
    %54 = vector.load %arg6[%c7, %c0_20] : memref<14x256xf32, #tpu.memory_space<vmem>>, vector<1x256xf32>
    %55 = vector.shape_cast %54 : vector<1x256xf32> to vector<256xf32>
    %cst_21 = arith.constant dense<0.000000e+00> : vector<8xf32>
    %56 = vector.multi_reduction <add>, %51, %cst_21 [1] : vector<8x256xf32> to vector<8xf32>
    %57 = vector.shape_cast %56 : vector<8xf32> to vector<8x1xf32>
    %cst_22 = arith.constant 2.560000e+02 : f32
    %58 = vector.broadcast %cst_22 : f32 to vector<8x1xf32>
    %59 = arith.divf %57, %58 : vector<8x1xf32>
    %60 = vector.broadcast %59 : vector<8x1xf32> to vector<8x256xf32>
    %61 = arith.subf %51, %60 : vector<8x256xf32>
    %62 = arith.mulf %61, %61 : vector<8x256xf32>
    %cst_23 = arith.constant dense<0.000000e+00> : vector<8xf32>
    %63 = vector.multi_reduction <add>, %62, %cst_23 [1] : vector<8x256xf32> to vector<8xf32>
    %64 = vector.shape_cast %63 : vector<8xf32> to vector<8x1xf32>
    %cst_24 = arith.constant 2.560000e+02 : f32
    %65 = vector.broadcast %cst_24 : f32 to vector<8x1xf32>
    %66 = arith.divf %64, %65 : vector<8x1xf32>
    %cst_25 = arith.constant 9.99999974E-6 : f32
    %67 = vector.broadcast %cst_25 : f32 to vector<8x1xf32>
    %68 = arith.addf %66, %67 : vector<8x1xf32>
    %69 = math.rsqrt %68 : vector<8x1xf32>
    %70 = vector.broadcast %69 : vector<8x1xf32> to vector<8x256xf32>
    %71 = arith.mulf %61, %70 : vector<8x256xf32>
    %72 = vector.shape_cast %53 : vector<256xf32> to vector<1x256xf32>
    %73 = vector.broadcast %72 : vector<1x256xf32> to vector<8x256xf32>
    %74 = arith.mulf %71, %73 : vector<8x256xf32>
    %75 = vector.shape_cast %55 : vector<256xf32> to vector<1x256xf32>
    %76 = vector.broadcast %75 : vector<1x256xf32> to vector<8x256xf32>
    %77 = arith.addf %74, %76 : vector<8x256xf32>
    %c0_26 = arith.constant 0 : index
    %c512 = arith.constant 512 : index
    %78 = vector.load %arg3[%c0_26, %c512] : memref<256x1024xbf16, #tpu.memory_space<vmem>>, vector<256x256xbf16>
    %79 = arith.truncf %50 : vector<8x256xf32> to vector<8x256xbf16>
    %cst_27 = arith.constant dense<0.000000e+00> : vector<8x256xf32>
    %80 = tpu.matmul %79, %78, %cst_27 {dimension_numbers = #tpu.dot_dimension_numbers<[1], [0], [0], [1], [0, 0, 1, 1], [], []>} : vector<8x256xbf16>, vector<256x256xbf16>, vector<8x256xf32> -> vector<8x256xf32>
    %c2 = arith.constant 2 : index
    %c0_28 = arith.constant 0 : index
    %81 = vector.load %arg6[%c2, %c0_28] : memref<14x256xf32, #tpu.memory_space<vmem>>, vector<1x256xf32>
    %82 = vector.shape_cast %81 : vector<1x256xf32> to vector<256xf32>
    %83 = vector.shape_cast %82 : vector<256xf32> to vector<1x256xf32>
    %84 = vector.broadcast %83 : vector<1x256xf32> to vector<8x256xf32>
    %85 = arith.addf %80, %84 : vector<8x256xf32>
    %cst_29 = arith.constant 0.000000e+00 : f32
    %86 = vector.broadcast %cst_29 : f32 to vector<8x256xf32>
    %87 = arith.maximumf %85, %86 : vector<8x256xf32>
    %88 = arith.addf %87, %50 : vector<8x256xf32>
    %c0_30 = arith.constant 0 : index
    %c768 = arith.constant 768 : index
    %89 = vector.load %arg3[%c0_30, %c768] : memref<256x1024xbf16, #tpu.memory_space<vmem>>, vector<256x256xbf16>
    %90 = arith.truncf %77 : vector<8x256xf32> to vector<8x256xbf16>
    %cst_31 = arith.constant dense<0.000000e+00> : vector<8x256xf32>
    %91 = tpu.matmul %90, %89, %cst_31 {dimension_numbers = #tpu.dot_dimension_numbers<[1], [0], [0], [1], [0, 0, 1, 1], [], []>} : vector<8x256xbf16>, vector<256x256xbf16>, vector<8x256xf32> -> vector<8x256xf32>
    %c3 = arith.constant 3 : index
    %c0_32 = arith.constant 0 : index
    %92 = vector.load %arg6[%c3, %c0_32] : memref<14x256xf32, #tpu.memory_space<vmem>>, vector<1x256xf32>
    %93 = vector.shape_cast %92 : vector<1x256xf32> to vector<256xf32>
    %94 = vector.shape_cast %93 : vector<256xf32> to vector<1x256xf32>
    %95 = vector.broadcast %94 : vector<1x256xf32> to vector<8x256xf32>
    %96 = arith.addf %91, %95 : vector<8x256xf32>
    %cst_33 = arith.constant 0.000000e+00 : f32
    %97 = vector.broadcast %cst_33 : f32 to vector<8x256xf32>
    %98 = arith.maximumf %96, %97 : vector<8x256xf32>
    %99 = arith.addf %98, %77 : vector<8x256xf32>
    %c0_34 = arith.constant 0 : index
    %c0_35 = arith.constant 0 : index
    %100 = vector.load %arg4[%c0_34, %c0_35] : memref<256x2048xbf16, #tpu.memory_space<vmem>>, vector<256x1024xbf16>
    %c0_36 = arith.constant 0 : index
    %c0_37 = arith.constant 0 : index
    %101 = vector.load %arg5[%c0_36, %c0_37] : memref<1024x512xbf16, #tpu.memory_space<vmem>>, vector<1024x256xbf16>
    %c0_38 = arith.constant 0 : index
    %c0_39 = arith.constant 0 : index
    %102 = vector.load %arg7[%c0_38, %c0_39] : memref<2x1024xf32, #tpu.memory_space<vmem>>, vector<1x1024xf32>
    %103 = vector.shape_cast %102 : vector<1x1024xf32> to vector<1024xf32>
    %c12 = arith.constant 12 : index
    %c0_40 = arith.constant 0 : index
    %104 = vector.load %arg6[%c12, %c0_40] : memref<14x256xf32, #tpu.memory_space<vmem>>, vector<1x256xf32>
    %105 = vector.shape_cast %104 : vector<1x256xf32> to vector<256xf32>
    %106 = arith.truncf %88 : vector<8x256xf32> to vector<8x256xbf16>
    %cst_41 = arith.constant dense<0.000000e+00> : vector<8x1024xf32>
    %107 = tpu.matmul %106, %100, %cst_41 {dimension_numbers = #tpu.dot_dimension_numbers<[1], [0], [0], [1], [0, 0, 1, 1], [], []>} : vector<8x256xbf16>, vector<256x1024xbf16>, vector<8x1024xf32> -> vector<8x1024xf32>
    %108 = vector.shape_cast %103 : vector<1024xf32> to vector<1x1024xf32>
    %109 = vector.broadcast %108 : vector<1x1024xf32> to vector<8x1024xf32>
    %110 = arith.addf %107, %109 : vector<8x1024xf32>
    %cst_42 = arith.constant 0.000000e+00 : f32
    %111 = vector.broadcast %cst_42 : f32 to vector<8x1024xf32>
    %112 = arith.maximumf %110, %111 : vector<8x1024xf32>
    %113 = arith.truncf %112 : vector<8x1024xf32> to vector<8x1024xbf16>
    %cst_43 = arith.constant dense<0.000000e+00> : vector<8x256xf32>
    %114 = tpu.matmul %113, %101, %cst_43 {dimension_numbers = #tpu.dot_dimension_numbers<[1], [0], [0], [1], [0, 0, 1, 1], [], []>} : vector<8x1024xbf16>, vector<1024x256xbf16>, vector<8x256xf32> -> vector<8x256xf32>
    %115 = vector.shape_cast %105 : vector<256xf32> to vector<1x256xf32>
    %116 = vector.broadcast %115 : vector<1x256xf32> to vector<8x256xf32>
    %117 = arith.addf %114, %116 : vector<8x256xf32>
    %c0_44 = arith.constant 0 : index
    %c1024 = arith.constant 1024 : index
    %118 = vector.load %arg4[%c0_44, %c1024] : memref<256x2048xbf16, #tpu.memory_space<vmem>>, vector<256x1024xbf16>
    %c0_45 = arith.constant 0 : index
    %c256_46 = arith.constant 256 : index
    %119 = vector.load %arg5[%c0_45, %c256_46] : memref<1024x512xbf16, #tpu.memory_space<vmem>>, vector<1024x256xbf16>
    %c1_47 = arith.constant 1 : index
    %c0_48 = arith.constant 0 : index
    %120 = vector.load %arg7[%c1_47, %c0_48] : memref<2x1024xf32, #tpu.memory_space<vmem>>, vector<1x1024xf32>
    %121 = vector.shape_cast %120 : vector<1x1024xf32> to vector<1024xf32>
    %c13 = arith.constant 13 : index
    %c0_49 = arith.constant 0 : index
    %122 = vector.load %arg6[%c13, %c0_49] : memref<14x256xf32, #tpu.memory_space<vmem>>, vector<1x256xf32>
    %123 = vector.shape_cast %122 : vector<1x256xf32> to vector<256xf32>
    %124 = arith.truncf %99 : vector<8x256xf32> to vector<8x256xbf16>
    %cst_50 = arith.constant dense<0.000000e+00> : vector<8x1024xf32>
    %125 = tpu.matmul %124, %118, %cst_50 {dimension_numbers = #tpu.dot_dimension_numbers<[1], [0], [0], [1], [0, 0, 1, 1], [], []>} : vector<8x256xbf16>, vector<256x1024xbf16>, vector<8x1024xf32> -> vector<8x1024xf32>
    %126 = vector.shape_cast %121 : vector<1024xf32> to vector<1x1024xf32>
    %127 = vector.broadcast %126 : vector<1x1024xf32> to vector<8x1024xf32>
    %128 = arith.addf %125, %127 : vector<8x1024xf32>
    %cst_51 = arith.constant 0.000000e+00 : f32
    %129 = vector.broadcast %cst_51 : f32 to vector<8x1024xf32>
    %130 = arith.maximumf %128, %129 : vector<8x1024xf32>
    %131 = arith.truncf %130 : vector<8x1024xf32> to vector<8x1024xbf16>
    %cst_52 = arith.constant dense<0.000000e+00> : vector<8x256xf32>
    %132 = tpu.matmul %131, %119, %cst_52 {dimension_numbers = #tpu.dot_dimension_numbers<[1], [0], [0], [1], [0, 0, 1, 1], [], []>} : vector<8x1024xbf16>, vector<1024x256xbf16>, vector<8x256xf32> -> vector<8x256xf32>
    %133 = vector.shape_cast %123 : vector<256xf32> to vector<1x256xf32>
    %134 = vector.broadcast %133 : vector<1x256xf32> to vector<8x256xf32>
    %135 = arith.addf %132, %134 : vector<8x256xf32>
    %136 = arith.addf %117, %88 : vector<8x256xf32>
    %c8 = arith.constant 8 : index
    %c0_53 = arith.constant 0 : index
    %137 = vector.load %arg6[%c8, %c0_53] : memref<14x256xf32, #tpu.memory_space<vmem>>, vector<1x256xf32>
    %138 = vector.shape_cast %137 : vector<1x256xf32> to vector<256xf32>
    %c9 = arith.constant 9 : index
    %c0_54 = arith.constant 0 : index
    %139 = vector.load %arg6[%c9, %c0_54] : memref<14x256xf32, #tpu.memory_space<vmem>>, vector<1x256xf32>
    %140 = vector.shape_cast %139 : vector<1x256xf32> to vector<256xf32>
    %cst_55 = arith.constant dense<0.000000e+00> : vector<8xf32>
    %141 = vector.multi_reduction <add>, %136, %cst_55 [1] : vector<8x256xf32> to vector<8xf32>
    %142 = vector.shape_cast %141 : vector<8xf32> to vector<8x1xf32>
    %cst_56 = arith.constant 2.560000e+02 : f32
    %143 = vector.broadcast %cst_56 : f32 to vector<8x1xf32>
    %144 = arith.divf %142, %143 : vector<8x1xf32>
    %145 = vector.broadcast %144 : vector<8x1xf32> to vector<8x256xf32>
    %146 = arith.subf %136, %145 : vector<8x256xf32>
    %147 = arith.mulf %146, %146 : vector<8x256xf32>
    %cst_57 = arith.constant dense<0.000000e+00> : vector<8xf32>
    %148 = vector.multi_reduction <add>, %147, %cst_57 [1] : vector<8x256xf32> to vector<8xf32>
    %149 = vector.shape_cast %148 : vector<8xf32> to vector<8x1xf32>
    %cst_58 = arith.constant 2.560000e+02 : f32
    %150 = vector.broadcast %cst_58 : f32 to vector<8x1xf32>
    %151 = arith.divf %149, %150 : vector<8x1xf32>
    %cst_59 = arith.constant 9.99999974E-6 : f32
    %152 = vector.broadcast %cst_59 : f32 to vector<8x1xf32>
    %153 = arith.addf %151, %152 : vector<8x1xf32>
    %154 = math.rsqrt %153 : vector<8x1xf32>
    %155 = vector.broadcast %154 : vector<8x1xf32> to vector<8x256xf32>
    %156 = arith.mulf %146, %155 : vector<8x256xf32>
    %157 = vector.shape_cast %138 : vector<256xf32> to vector<1x256xf32>
    %158 = vector.broadcast %157 : vector<1x256xf32> to vector<8x256xf32>
    %159 = arith.mulf %156, %158 : vector<8x256xf32>
    %160 = vector.shape_cast %140 : vector<256xf32> to vector<1x256xf32>
    %161 = vector.broadcast %160 : vector<1x256xf32> to vector<8x256xf32>
    %162 = arith.addf %159, %161 : vector<8x256xf32>
    %c0_60 = arith.constant 0 : index
    %c0_61 = arith.constant 0 : index
    %163 = vector.load %arg8[%c0_60, %c0_61] : memref<8x256xf32, #tpu.memory_space<vmem>>, vector<8x256xf32>
    tpu.vector_store %arg8[%c0_60, %c0_61], %162 {strides = array<i32>} : memref<8x256xf32, #tpu.memory_space<vmem>>, vector<8x256xf32>,
    %164 = arith.addf %135, %99 : vector<8x256xf32>
    %c10 = arith.constant 10 : index
    %c0_62 = arith.constant 0 : index
    %165 = vector.load %arg6[%c10, %c0_62] : memref<14x256xf32, #tpu.memory_space<vmem>>, vector<1x256xf32>
    %166 = vector.shape_cast %165 : vector<1x256xf32> to vector<256xf32>
    %c11 = arith.constant 11 : index
    %c0_63 = arith.constant 0 : index
    %167 = vector.load %arg6[%c11, %c0_63] : memref<14x256xf32, #tpu.memory_space<vmem>>, vector<1x256xf32>
    %168 = vector.shape_cast %167 : vector<1x256xf32> to vector<256xf32>
    %cst_64 = arith.constant dense<0.000000e+00> : vector<8xf32>
    %169 = vector.multi_reduction <add>, %164, %cst_64 [1] : vector<8x256xf32> to vector<8xf32>
    %170 = vector.shape_cast %169 : vector<8xf32> to vector<8x1xf32>
    %cst_65 = arith.constant 2.560000e+02 : f32
    %171 = vector.broadcast %cst_65 : f32 to vector<8x1xf32>
    %172 = arith.divf %170, %171 : vector<8x1xf32>
    %173 = vector.broadcast %172 : vector<8x1xf32> to vector<8x256xf32>
    %174 = arith.subf %164, %173 : vector<8x256xf32>
    %175 = arith.mulf %174, %174 : vector<8x256xf32>
    %cst_66 = arith.constant dense<0.000000e+00> : vector<8xf32>
    %176 = vector.multi_reduction <add>, %175, %cst_66 [1] : vector<8x256xf32> to vector<8xf32>
    %177 = vector.shape_cast %176 : vector<8xf32> to vector<8x1xf32>
    %cst_67 = arith.constant 2.560000e+02 : f32
    %178 = vector.broadcast %cst_67 : f32 to vector<8x1xf32>
    %179 = arith.divf %177, %178 : vector<8x1xf32>
    %cst_68 = arith.constant 9.99999974E-6 : f32
    %180 = vector.broadcast %cst_68 : f32 to vector<8x1xf32>
    %181 = arith.addf %179, %180 : vector<8x1xf32>
    %182 = math.rsqrt %181 : vector<8x1xf32>
    %183 = vector.broadcast %182 : vector<8x1xf32> to vector<8x256xf32>
    %184 = arith.mulf %174, %183 : vector<8x256xf32>
    %185 = vector.shape_cast %166 : vector<256xf32> to vector<1x256xf32>
    %186 = vector.broadcast %185 : vector<1x256xf32> to vector<8x256xf32>
    %187 = arith.mulf %184, %186 : vector<8x256xf32>
    %188 = vector.shape_cast %168 : vector<256xf32> to vector<1x256xf32>
    %189 = vector.broadcast %188 : vector<1x256xf32> to vector<8x256xf32>
    %190 = arith.addf %187, %189 : vector<8x256xf32>
    %c0_69 = arith.constant 0 : index
    %c0_70 = arith.constant 0 : index
    %191 = vector.load %arg9[%c0_69, %c0_70] : memref<8x256xf32, #tpu.memory_space<vmem>>, vector<8x256xf32>
    tpu.vector_store %arg9[%c0_69, %c0_70], %190 {strides = array<i32>} : memref<8x256xf32, #tpu.memory_space<vmem>>, vector<8x256xf32>,
    return
  }
  func.func @transform_0(%arg0: i32) -> (i32, i32) {
    %c0_i32 = arith.constant 0 : i32
    %c0_i32_0 = arith.constant 0 : i32
    return %arg0, %c0_i32 : i32, i32
  }
  func.func @transform_1(%arg0: i32) -> (i32, i32) {
    %c0_i32 = arith.constant 0 : i32
    %c0_i32_0 = arith.constant 0 : i32
    return %arg0, %c0_i32 : i32, i32
  }
  func.func @transform_2(%arg0: i32) -> (i32, i32) {
    %c0_i32 = arith.constant 0 : i32
    %c0_i32_0 = arith.constant 0 : i32
    %c0_i32_1 = arith.constant 0 : i32
    return %c0_i32, %c0_i32_0 : i32, i32
  }
  func.func @transform_3(%arg0: i32) -> (i32, i32) {
    %c0_i32 = arith.constant 0 : i32
    %c0_i32_0 = arith.constant 0 : i32
    %c0_i32_1 = arith.constant 0 : i32
    return %c0_i32, %c0_i32_0 : i32, i32
  }
  func.func @transform_4(%arg0: i32) -> (i32, i32) {
    %c0_i32 = arith.constant 0 : i32
    %c0_i32_0 = arith.constant 0 : i32
    %c0_i32_1 = arith.constant 0 : i32
    return %c0_i32, %c0_i32_0 : i32, i32
  }
  func.func @transform_5(%arg0: i32) -> (i32, i32) {
    %c0_i32 = arith.constant 0 : i32
    %c0_i32_0 = arith.constant 0 : i32
    %c0_i32_1 = arith.constant 0 : i32
    return %c0_i32, %c0_i32_0 : i32, i32
  }
  func.func @transform_6(%arg0: i32) -> (i32, i32) {
    %c0_i32 = arith.constant 0 : i32
    %c0_i32_0 = arith.constant 0 : i32
    %c0_i32_1 = arith.constant 0 : i32
    return %c0_i32, %c0_i32_0 : i32, i32
  }
  func.func @transform_7(%arg0: i32) -> (i32, i32) {
    %c0_i32 = arith.constant 0 : i32
    %c0_i32_0 = arith.constant 0 : i32
    return %arg0, %c0_i32 : i32, i32
  }
  func.func @transform_8(%arg0: i32) -> (i32, i32) {
    %c0_i32 = arith.constant 0 : i32
    %c0_i32_0 = arith.constant 0 : i32
    return %arg0, %c0_i32 : i32, i32
  }
}

</mosaic_0001>

<llo_original>
// kernel: tpu_custom_call.1
$region0: #{tpu_custom_call.1}
  #allocation0 [shape = 'u32[]', space=smem, size = 0x4, offset = 0x4, fixed_abs, tag = 'smem constant byte address 0x4 - core index']
  #allocation1 [shape = 'u32[144,128]{1,0:T(1,128)}', space=vmem, size = 0x12000, scoped, tag = 'internal scratch']
  %s0 = inlined_call_operand.hbm [shape: f32[8,256], index: 0, kind: input, shape index: {}]
  %s1 = inlined_call_operand.hbm [shape: f32[8,256], index: 1, kind: input, shape index: {}]
  %s2 = inlined_call_operand.hbm [shape: bf16[256,1024], index: 2, kind: input, shape index: {}]
  %s3 = inlined_call_operand.hbm [shape: bf16[256,2048], index: 3, kind: input, shape index: {}]
  %s4 = inlined_call_operand.hbm [shape: bf16[1024,512], index: 4, kind: input, shape index: {}]
  %s5 = inlined_call_operand.hbm [shape: f32[14,256], index: 5, kind: input, shape index: {}]
  %s6 = inlined_call_operand.vmem [shape: f32[2,1024], index: 6, kind: input, shape index: {}]
  %s7 = inlined_call_operand.hbm [shape: f32[8,256], index: 7, kind: output, shape index: {0}]
  %s8 = inlined_call_operand.hbm [shape: f32[8,256], index: 8, kind: output, shape index: {1}]
  %9 = xla_tuple %s7, %s8
  %s10 = sld [smem:[#allocation0]]
  $region70: #{tpu_custom_call.1} parent=0
    _
  %s12 = ssub.s32 1, %s10
  %s13 = scalar_select 0, %s12, %s10
  $region1: #{tpu_custom_call.1} parent=0
    #allocation2 [shape = 'u8[8192]{0}', space=vmem, size = 0x2000, scoped, tag = 'input window, operand 0, single buffered']
    #allocation3 [shape = 's32[1]{0}', space=sflag, size = 0x4, scoped, tag = 'scoped memory for tpu_custom_call.1']
    #allocation4 [shape = 's32[1]{0}', space=sflag, size = 0x4, scoped, tag = 'scoped memory for tpu_custom_call.1']
    #allocation5 [shape = 'u8[8192]{0}', space=vmem, size = 0x2000, scoped, tag = 'input window, operand 1, single buffered']
    #allocation6 [shape = 's32[1]{0}', space=sflag, size = 0x4, scoped, tag = 'scoped memory for tpu_custom_call.1']
    #allocation7 [shape = 'u8[524288]{0}', space=vmem, size = 0x80000, scoped, tag = 'input window, operand 2, single buffered']
    #allocation8 [shape = 'u8[1048576]{0}', space=vmem, size = 0x100000, scoped, tag = 'input window, operand 3, single buffered']
    #allocation9 [shape = 's32[1]{0}', space=sflag, size = 0x4, scoped, tag = 'scoped memory for tpu_custom_call.1']
    #allocation10 [shape = 'u8[1048576]{0}', space=vmem, size = 0x100000, scoped, tag = 'input window, operand 4, single buffered']
    #allocation11 [shape = 'u8[16384]{0}', space=vmem, size = 0x4000, scoped, tag = 'input window, operand 5, single buffered']
    #allocation12 [shape = 's32[1]{0}', space=sflag, size = 0x4, scoped, tag = 'scoped memory for tpu_custom_call.1']
    #allocation13 [shape = 'u8[8192]{0}', space=vmem, size = 0x2000, scoped, tag = 'output window, operand 0, single buffered']
    #allocation14 [shape = 'u8[8192]{0}', space=vmem, size = 0x2000, scoped, tag = 'output window, operand 1, single buffered']
    #allocation15 [shape = 's32[1]{0}', space=sflag, size = 0x4, scoped, tag = 'scoped memory for tpu_custom_call.1']
    %14 = vsyncpa [#allocation3], 0
    %15 = vsyncpa [#allocation6], 0
    %16 = vsyncpa [#allocation9], 0
    %17 = vsyncpa [#allocation12], 0
    %18 = vsyncpa [#allocation4], 0
    %19 = vsyncpa [#allocation15], 0
    // Predicated region
    $region2: #{tpu_custom_call.1} parent=1 // pred_check
      _
    $region3: #{tpu_custom_call.1} parent=1 // pred_check_branch
      %21 = sbr.rel (0) target = $region5
    $region4: #{tpu_custom_call.1} parent=1 // pred_region
      %s23 = ssub.s32 256, 256
      %24 = vsyncadd [#allocation3], %s23
      %s26 = sshll.u32 [#allocation2], 4
      %s27 = int_to_ptr.vmem [resolvable:$true] %s26
      %29 = dma.hbm_to_vmem [thread:$0]  %s0, 256, %s27, [#allocation3]
    $region5: #{tpu_custom_call.1} parent=1 // pred_fallthru
      _
    // Predicated region
    $region6: #{tpu_custom_call.1} parent=1 // pred_check
      _
    $region7: #{tpu_custom_call.1} parent=1 // pred_check_branch
      %31 = sbr.rel (0) target = $region9
    $region8: #{tpu_custom_call.1} parent=1 // pred_region
      %s33 = ssub.s32 256, 256
      %34 = vsyncadd [#allocation6], %s33
      %s36 = sshll.u32 [#allocation5], 4
      %s37 = int_to_ptr.vmem [resolvable:$true] %s36
      %39 = dma.hbm_to_vmem [thread:$0]  %s1, 256, %s37, [#allocation6]
    $region9: #{tpu_custom_call.1} parent=1 // pred_fallthru
      _
    // Predicated region
    $region10: #{tpu_custom_call.1} parent=1 // pred_check
      _
    $region11: #{tpu_custom_call.1} parent=1 // pred_check_branch
      %41 = sbr.rel (0) target = $region13
    $region12: #{tpu_custom_call.1} parent=1 // pred_region
      %s43 = ssub.s32 16384, 16384
      %44 = vsyncadd [#allocation6], %s43
      %s45 = sshll.u32 [#allocation7], 4
      %s46 = int_to_ptr.vmem [resolvable:$true] %s45
      %51 = dma.hbm_to_vmem [thread:$0]  %s2, 16384, %s46, [#allocation6], 512, 512, 32
    $region13: #{tpu_custom_call.1} parent=1 // pred_fallthru
      _
    // Predicated region
    $region14: #{tpu_custom_call.1} parent=1 // pred_check
      _
    $region15: #{tpu_custom_call.1} parent=1 // pred_check_branch
      %53 = sbr.rel (0) target = $region17
    $region16: #{tpu_custom_call.1} parent=1 // pred_region
      %s55 = ssub.s32 32768, 32768
      %56 = vsyncadd [#allocation9], %s55
      %s57 = sshll.u32 [#allocation8], 4
      %s58 = int_to_ptr.vmem [resolvable:$true] %s57
      %63 = dma.hbm_to_vmem [thread:$0]  %s3, 32768, %s58, [#allocation9], 1024, 1024, 64
    $region17: #{tpu_custom_call.1} parent=1 // pred_fallthru
      _
    // Predicated region
    $region18: #{tpu_custom_call.1} parent=1 // pred_check
      _
    $region19: #{tpu_custom_call.1} parent=1 // pred_check_branch
      %65 = sbr.rel (0) target = $region21
    $region20: #{tpu_custom_call.1} parent=1 // pred_region
      %s67 = ssub.s32 32768, 32768
      %68 = vsyncadd [#allocation9], %s67
      %s69 = sshll.u32 [#allocation10], 4
      %s70 = int_to_ptr.vmem [resolvable:$true] %s69
      %75 = dma.hbm_to_vmem [thread:$0]  %s4, 32768, %s70, [#allocation9], 256, 256, 16
    $region21: #{tpu_custom_call.1} parent=1 // pred_fallthru
      _
    // Predicated region
    $region22: #{tpu_custom_call.1} parent=1 // pred_check
      _
    $region23: #{tpu_custom_call.1} parent=1 // pred_check_branch
      %77 = sbr.rel (0) target = $region25
    $region24: #{tpu_custom_call.1} parent=1 // pred_region
      %s79 = ssub.s32 512, 512
      %80 = vsyncadd [#allocation12], %s79
      %s81 = sshll.u32 [#allocation11], 4
      %s82 = int_to_ptr.vmem [resolvable:$true] %s81
      %87 = dma.hbm_to_vmem [thread:$0]  %s5, 512, %s82, [#allocation12], 256, 256, 16
    $region25: #{tpu_custom_call.1} parent=1 // pred_fallthru
      _
    // Predicated region
    $region26: #{tpu_custom_call.1} parent=1 // pred_check
      _
    $region27: #{tpu_custom_call.1} parent=1 // pred_check_branch
      %89 = sbr.rel (0) target = $region29
    $region28: #{tpu_custom_call.1} parent=1 // pred_region
      _
    $region29: #{tpu_custom_call.1} parent=1 // pred_fallthru
      _
    // Predicated region
    $region30: #{tpu_custom_call.1} parent=1 // pred_check
      _
    $region31: #{tpu_custom_call.1} parent=1 // pred_check_branch
      %91 = sbr.rel (0) target = $region33
    $region32: #{tpu_custom_call.1} parent=1 // pred_region
      %92 = dma.done [#allocation3], 256
    $region33: #{tpu_custom_call.1} parent=1 // pred_fallthru
      _
    // Predicated region
    $region34: #{tpu_custom_call.1} parent=1 // pred_check
      _
    $region35: #{tpu_custom_call.1} parent=1 // pred_check_branch
      %94 = sbr.rel (0) target = $region37
    $region36: #{tpu_custom_call.1} parent=1 // pred_region
      %95 = dma.done [#allocation6], 256
    $region37: #{tpu_custom_call.1} parent=1 // pred_fallthru
      _
    // Predicated region
    $region38: #{tpu_custom_call.1} parent=1 // pred_check
      _
    $region39: #{tpu_custom_call.1} parent=1 // pred_check_branch
      %97 = sbr.rel (0) target = $region41
    $region40: #{tpu_custom_call.1} parent=1 // pred_region
      %98 = dma.done [#allocation6], 16384
    $region41: #{tpu_custom_call.1} parent=1 // pred_fallthru
      _
    // Predicated region
    $region42: #{tpu_custom_call.1} parent=1 // pred_check
      _
    $region43: #{tpu_custom_call.1} parent=1 // pred_check_branch
      %100 = sbr.rel (0) target = $region45
    $region44: #{tpu_custom_call.1} parent=1 // pred_region
      %101 = dma.done [#allocation9], 32768
    $region45: #{tpu_custom_call.1} parent=1 // pred_fallthru
      _
    // Predicated region
    $region46: #{tpu_custom_call.1} parent=1 // pred_check
      _
    $region47: #{tpu_custom_call.1} parent=1 // pred_check_branch
      %103 = sbr.rel (0) target = $region49
    $region48: #{tpu_custom_call.1} parent=1 // pred_region
      %104 = dma.done [#allocation9], 32768
    $region49: #{tpu_custom_call.1} parent=1 // pred_fallthru
      _
    // Predicated region
    $region50: #{tpu_custom_call.1} parent=1 // pred_check
      _
    $region51: #{tpu_custom_call.1} parent=1 // pred_check_branch
      %106 = sbr.rel (0) target = $region53
    $region52: #{tpu_custom_call.1} parent=1 // pred_region
      %107 = dma.done [#allocation12], 512
    $region53: #{tpu_custom_call.1} parent=1 // pred_fallthru
      _
    %v108 = vld [vmem:[#allocation2] sm:$0xff]
    %v109 = vld [vmem:[#allocation2 + $0x8] sm:$0xff]
    %v110 = vld [vmem:[#allocation5] sm:$0xff]
    %v111 = vld [vmem:[#allocation5 + $0x8] sm:$0xff]
    %v112 = vld [vmem:[#allocation7] sm:$0xff]
    %v113 = vld [vmem:[#allocation7 + $0x20] sm:$0xff]
    %v114 = vld [vmem:[#allocation7 + $0x40] sm:$0xff]
    %v115 = vld [vmem:[#allocation7 + $0x60] sm:$0xff]
    %v116 = vld [vmem:[#allocation7 + $0x80] sm:$0xff]
    %v117 = vld [vmem:[#allocation7 + $0xa0] sm:$0xff]
    %v118 = vld [vmem:[#allocation7 + $0xc0] sm:$0xff]
    %v119 = vld [vmem:[#allocation7 + $0xe0] sm:$0xff]
    %v120 = vld [vmem:[#allocation7 + $0x100] sm:$0xff]
    %v121 = vld [vmem:[#allocation7 + $0x120] sm:$0xff]
    %v122 = vld [vmem:[#allocation7 + $0x140] sm:$0xff]
    %v123 = vld [vmem:[#allocation7 + $0x160] sm:$0xff]
    %v124 = vld [vmem:[#allocation7 + $0x180] sm:$0xff]
    %v125 = vld [vmem:[#allocation7 + $0x1a0] sm:$0xff]
    %v126 = vld [vmem:[#allocation7 + $0x1c0] sm:$0xff]
    %v127 = vld [vmem:[#allocation7 + $0x1e0] sm:$0xff]
    %v128 = vld [vmem:[#allocation7 + $0x200] sm:$0xff]
    %v129 = vld [vmem:[#allocation7 + $0x220] sm:$0xff]
    %v130 = vld [vmem:[#allocation7 + $0x240] sm:$0xff]
    %v131 = vld [vmem:[#allocation7 + $0x260] sm:$0xff]
    %v132 = vld [vmem:[#allocation7 + $0x280] sm:$0xff]
    %v133 = vld [vmem:[#allocation7 + $0x2a0] sm:$0xff]
    %v134 = vld [vmem:[#allocation7 + $0x2c0] sm:$0xff]
    %v135 = vld [vmem:[#allocation7 + $0x2e0] sm:$0xff]
    %v136 = vld [vmem:[#allocation7 + $0x300] sm:$0xff]
    %v137 = vld [vmem:[#allocation7 + $0x320] sm:$0xff]
    %v138 = vld [vmem:[#allocation7 + $0x340] sm:$0xff]
    %v139 = vld [vmem:[#allocation7 + $0x360] sm:$0xff]
    %v140 = vld [vmem:[#allocation7 + $0x380] sm:$0xff]
    %v141 = vld [vmem:[#allocation7 + $0x3a0] sm:$0xff]
    %v142 = vld [vmem:[#allocation7 + $0x3c0] sm:$0xff]
    %v143 = vld [vmem:[#allocation7 + $0x3e0] sm:$0xff]
    %v144 = vpack.c.bf16 %v110, %v110
    %v145 = vpack.c.bf16 %v111, %v111
    %v146 = vld [vmem:[#allocation11] ss:$8 sm:$0x3]
    %v148 = vlaneseq
    %v149 = vshrl.u32 %v148, 7
    %v150 = vsub.s32 0, %v149
    %v151 = vrot.slane %v146, %v150
    %v152 = vlaneseq
    %v153 = vshrl.u32 %v152, 7
    %v154 = vsub.s32 1, %v153
    %v155 = vrot.slane %v146, %v154
    %v190 = vunpack.c.l.b16 %v112
    %v191 = vunpack.c.h.b16 %v112
    %v192 = vunpack.c.l.b16 %v113
    %v193 = vunpack.c.h.b16 %v113
    %v194 = vunpack.c.l.b16 %v114
    %v195 = vunpack.c.h.b16 %v114
    %v196 = vunpack.c.l.b16 %v115
    %v197 = vunpack.c.h.b16 %v115
    %v198 = vunpack.c.l.b16 %v116
    %v199 = vunpack.c.h.b16 %v116
    %v200 = vunpack.c.l.b16 %v117
    %v201 = vunpack.c.h.b16 %v117
    %v202 = vunpack.c.l.b16 %v118
    %v203 = vunpack.c.h.b16 %v118
    %v204 = vunpack.c.l.b16 %v119
    %v205 = vunpack.c.h.b16 %v119
    %v206 = vunpack.c.l.b16 %v120
    %v207 = vunpack.c.h.b16 %v120
    %v208 = vunpack.c.l.b16 %v121
    %v209 = vunpack.c.h.b16 %v121
    %v210 = vunpack.c.l.b16 %v122
    %v211 = vunpack.c.h.b16 %v122
    %v212 = vunpack.c.l.b16 %v123
    %v213 = vunpack.c.h.b16 %v123
    %v214 = vunpack.c.l.b16 %v124
    %v215 = vunpack.c.h.b16 %v124
    %v216 = vunpack.c.l.b16 %v125
    %v217 = vunpack.c.h.b16 %v125
    %v218 = vunpack.c.l.b16 %v126
    %v219 = vunpack.c.h.b16 %v126
    %v220 = vunpack.c.l.b16 %v127
    %v221 = vunpack.c.h.b16 %v127
    %v222 = vunpack.c.l.b16 %v128
    %v223 = vunpack.c.h.b16 %v128
    %v224 = vunpack.c.l.b16 %v129
    %v225 = vunpack.c.h.b16 %v129
    %v226 = vunpack.c.l.b16 %v130
    %v227 = vunpack.c.h.b16 %v130
    %v228 = vunpack.c.l.b16 %v131
    %v229 = vunpack.c.h.b16 %v131
    %v230 = vunpack.c.l.b16 %v132
    %v231 = vunpack.c.h.b16 %v132
    %v232 = vunpack.c.l.b16 %v133
    %v233 = vunpack.c.h.b16 %v133
    %v234 = vunpack.c.l.b16 %v134
    %v235 = vunpack.c.h.b16 %v134
    %v236 = vunpack.c.l.b16 %v135
    %v237 = vunpack.c.h.b16 %v135
    %v238 = vunpack.c.l.b16 %v136
    %v239 = vunpack.c.h.b16 %v136
    %v240 = vunpack.c.l.b16 %v137
    %v241 = vunpack.c.h.b16 %v137
    %v242 = vunpack.c.l.b16 %v138
    %v243 = vunpack.c.h.b16 %v138
    %v244 = vunpack.c.l.b16 %v139
    %v245 = vunpack.c.h.b16 %v139
    %v246 = vunpack.c.l.b16 %v140
    %v247 = vunpack.c.h.b16 %v140
    %v248 = vunpack.c.l.b16 %v141
    %v249 = vunpack.c.h.b16 %v141
    %v250 = vunpack.c.l.b16 %v142
    %v251 = vunpack.c.h.b16 %v142
    %v252 = vunpack.c.l.b16 %v143
    %v253 = vunpack.c.h.b16 %v143
    %v254 = vpack.c.b16 %v192, %v190
    %v255 = vpack.c.b16 %v193, %v191
    %v256 = vpack.c.b16 %v196, %v194
    %v257 = vpack.c.b16 %v197, %v195
    %v258 = vpack.c.b16 %v200, %v198
    %v259 = vpack.c.b16 %v201, %v199
    %v260 = vpack.c.b16 %v204, %v202
    %v261 = vpack.c.b16 %v205, %v203
    %v262 = vpack.c.b16 %v208, %v206
    %v263 = vpack.c.b16 %v209, %v207
    %v264 = vpack.c.b16 %v212, %v210
    %v265 = vpack.c.b16 %v213, %v211
    %v266 = vpack.c.b16 %v216, %v214
    %v267 = vpack.c.b16 %v217, %v215
    %v268 = vpack.c.b16 %v220, %v218
    %v269 = vpack.c.b16 %v221, %v219
    %v270 = vpack.c.b16 %v224, %v222
    %v271 = vpack.c.b16 %v225, %v223
    %v272 = vpack.c.b16 %v228, %v226
    %v273 = vpack.c.b16 %v229, %v227
    %v274 = vpack.c.b16 %v232, %v230
    %v275 = vpack.c.b16 %v233, %v231
    %v276 = vpack.c.b16 %v236, %v234
    %v277 = vpack.c.b16 %v237, %v235
    %v278 = vpack.c.b16 %v240, %v238
    %v279 = vpack.c.b16 %v241, %v239
    %v280 = vpack.c.b16 %v244, %v242
    %v281 = vpack.c.b16 %v245, %v243
    %v282 = vpack.c.b16 %v248, %v246
    %v283 = vpack.c.b16 %v249, %v247
    %v284 = vpack.c.b16 %v252, %v250
    %v285 = vpack.c.b16 %v253, %v251
    %318 = vmatprep.subr.bf16.mxu0 %v255
    %319 = vmatpush1.bf16.msra.mxu0 %v254
    %320 = vmatprep.subr.bf16.mxu0 %v257
    %321 = vmatpush1.bf16.msra.mxu0 %v256
    %322 = vmatprep.subr.bf16.mxu0 %v259
    %323 = vmatpush1.bf16.msra.mxu0 %v258
    %324 = vmatprep.subr.bf16.mxu0 %v261
    %325 = vmatpush1.bf16.msra.mxu0 %v260
    %326 = vmatprep.subr.bf16.mxu0 %v263
    %327 = vmatpush1.bf16.msra.mxu0 %v262
    %328 = vmatprep.subr.bf16.mxu0 %v265
    %329 = vmatpush1.bf16.msra.mxu0 %v264
    %330 = vmatprep.subr.bf16.mxu0 %v267
    %331 = vmatpush1.bf16.msra.mxu0 %v266
    %332 = vmatprep.subr.bf16.mxu0 %v269
    %333 = vmatpush1.bf16.msra.mxu0 %v268
    %334 = vmatprep.subr.bf16.mxu0 %v271
    %335 = vmatpush1.bf16.msra.mxu0 %v270
    %336 = vmatprep.subr.bf16.mxu0 %v273
    %337 = vmatpush1.bf16.msra.mxu0 %v272
    %338 = vmatprep.subr.bf16.mxu0 %v275
    %339 = vmatpush1.bf16.msra.mxu0 %v274
    %340 = vmatprep.subr.bf16.mxu0 %v277
    %341 = vmatpush1.bf16.msra.mxu0 %v276
    %342 = vmatprep.subr.bf16.mxu0 %v279
    %343 = vmatpush1.bf16.msra.mxu0 %v278
    %344 = vmatprep.subr.bf16.mxu0 %v281
    %345 = vmatpush1.bf16.msra.mxu0 %v280
    %346 = vmatprep.subr.bf16.mxu0 %v283
    %347 = vmatpush1.bf16.msra.mxu0 %v282
    %348 = vmatprep.subr.bf16.mxu0 %v285
    %349 = vmatpush1.bf16.msra.mxu0 %v284
    %350 = vmatprep.mubr.bf16.mxu0 %v145
    %351 = vmatmul.mubr.bf16.gmra.mrb[0].mxu0 %v144
    %v352 = vpop.f32.mrb[0].mxu0
    %v353 = vadd.f32 %v151, %v352
    %v354 = vpop.f32.mrb[0].mxu0
    %v355 = vadd.f32 %v155, %v354
    %v356 = vpop.f32.mrb[0].mxu0
    %v357 = vpop.f32.mrb[0].mxu0
    %358 = vdwg.mxu0
    %v359 = vmax.f32 %v353, 0.0
    %v360 = vmax.f32 %v355, 0.0
    %v361 = vadd.f32 %v359, %v108
    %v362 = vadd.f32 %v360, %v109
    %v363 = vld [vmem:[#allocation7 + $0x8] sm:$0xff]
    %v364 = vld [vmem:[#allocation7 + $0x28] sm:$0xff]
    %v365 = vld [vmem:[#allocation7 + $0x48] sm:$0xff]
    %v366 = vld [vmem:[#allocation7 + $0x68] sm:$0xff]
    %v367 = vld [vmem:[#allocation7 + $0x88] sm:$0xff]
    %v368 = vld [vmem:[#allocation7 + $0xa8] sm:$0xff]
    %v369 = vld [vmem:[#allocation7 + $0xc8] sm:$0xff]
    %v370 = vld [vmem:[#allocation7 + $0xe8] sm:$0xff]
    %v371 = vld [vmem:[#allocation7 + $0x108] sm:$0xff]
    %v372 = vld [vmem:[#allocation7 + $0x128] sm:$0xff]
    %v373 = vld [vmem:[#allocation7 + $0x148] sm:$0xff]
    %v374 = vld [vmem:[#allocation7 + $0x168] sm:$0xff]
    %v375 = vld [vmem:[#allocation7 + $0x188] sm:$0xff]
    %v376 = vld [vmem:[#allocation7 + $0x1a8] sm:$0xff]
    %v377 = vld [vmem:[#allocation7 + $0x1c8] sm:$0xff]
    %v378 = vld [vmem:[#allocation7 + $0x1e8] sm:$0xff]
    %v379 = vld [vmem:[#allocation7 + $0x208] sm:$0xff]
    %v380 = vld [vmem:[#allocation7 + $0x228] sm:$0xff]
    %v381 = vld [vmem:[#allocation7 + $0x248] sm:$0xff]
    %v382 = vld [vmem:[#allocation7 + $0x268] sm:$0xff]
    %v383 = vld [vmem:[#allocation7 + $0x288] sm:$0xff]
    %v384 = vld [vmem:[#allocation7 + $0x2a8] sm:$0xff]
    %v385 = vld [vmem:[#allocation7 + $0x2c8] sm:$0xff]
    %v386 = vld [vmem:[#allocation7 + $0x2e8] sm:$0xff]
    %v387 = vld [vmem:[#allocation7 + $0x308] sm:$0xff]
    %v388 = vld [vmem:[#allocation7 + $0x328] sm:$0xff]
    %v389 = vld [vmem:[#allocation7 + $0x348] sm:$0xff]
    %v390 = vld [vmem:[#allocation7 + $0x368] sm:$0xff]
    %v391 = vld [vmem:[#allocation7 + $0x388] sm:$0xff]
    %v392 = vld [vmem:[#allocation7 + $0x3a8] sm:$0xff]
    %v393 = vld [vmem:[#allocation7 + $0x3c8] sm:$0xff]
    %v394 = vld [vmem:[#allocation7 + $0x3e8] sm:$0xff]
    %v395 = vpack.c.bf16 %v108, %v108
    %v396 = vpack.c.bf16 %v109, %v109
    %s397 = scalar_lea.vmem [#allocation11], 1
    %v398 = vld [vmem:[%s397] ss:$8 sm:$0x3]
    %v400 = vlaneseq
    %v401 = vshrl.u32 %v400, 7
    %v402 = vsub.s32 0, %v401
    %v403 = vrot.slane %v398, %v402
    %v404 = vlaneseq
    %v405 = vshrl.u32 %v404, 7
    %v406 = vsub.s32 1, %v405
    %v407 = vrot.slane %v398, %v406
    %v442 = vunpack.c.l.b16 %v363
    %v443 = vunpack.c.h.b16 %v363
    %v444 = vunpack.c.l.b16 %v364
    %v445 = vunpack.c.h.b16 %v364
    %v446 = vunpack.c.l.b16 %v365
    %v447 = vunpack.c.h.b16 %v365
    %v448 = vunpack.c.l.b16 %v366
    %v449 = vunpack.c.h.b16 %v366
    %v450 = vunpack.c.l.b16 %v367
    %v451 = vunpack.c.h.b16 %v367
    %v452 = vunpack.c.l.b16 %v368
    %v453 = vunpack.c.h.b16 %v368
    %v454 = vunpack.c.l.b16 %v369
    %v455 = vunpack.c.h.b16 %v369
    %v456 = vunpack.c.l.b16 %v370
    %v457 = vunpack.c.h.b16 %v370
    %v458 = vunpack.c.l.b16 %v371
    %v459 = vunpack.c.h.b16 %v371
    %v460 = vunpack.c.l.b16 %v372
    %v461 = vunpack.c.h.b16 %v372
    %v462 = vunpack.c.l.b16 %v373
    %v463 = vunpack.c.h.b16 %v373
    %v464 = vunpack.c.l.b16 %v374
    %v465 = vunpack.c.h.b16 %v374
    %v466 = vunpack.c.l.b16 %v375
    %v467 = vunpack.c.h.b16 %v375
    %v468 = vunpack.c.l.b16 %v376
    %v469 = vunpack.c.h.b16 %v376
    %v470 = vunpack.c.l.b16 %v377
    %v471 = vunpack.c.h.b16 %v377
    %v472 = vunpack.c.l.b16 %v378
    %v473 = vunpack.c.h.b16 %v378
    %v474 = vunpack.c.l.b16 %v379
    %v475 = vunpack.c.h.b16 %v379
    %v476 = vunpack.c.l.b16 %v380
    %v477 = vunpack.c.h.b16 %v380
    %v478 = vunpack.c.l.b16 %v381
    %v479 = vunpack.c.h.b16 %v381
    %v480 = vunpack.c.l.b16 %v382
    %v481 = vunpack.c.h.b16 %v382
    %v482 = vunpack.c.l.b16 %v383
    %v483 = vunpack.c.h.b16 %v383
    %v484 = vunpack.c.l.b16 %v384
    %v485 = vunpack.c.h.b16 %v384
    %v486 = vunpack.c.l.b16 %v385
    %v487 = vunpack.c.h.b16 %v385
    %v488 = vunpack.c.l.b16 %v386
    %v489 = vunpack.c.h.b16 %v386
    %v490 = vunpack.c.l.b16 %v387
    %v491 = vunpack.c.h.b16 %v387
    %v492 = vunpack.c.l.b16 %v388
    %v493 = vunpack.c.h.b16 %v388
    %v494 = vunpack.c.l.b16 %v389
    %v495 = vunpack.c.h.b16 %v389
    %v496 = vunpack.c.l.b16 %v390
    %v497 = vunpack.c.h.b16 %v390
    %v498 = vunpack.c.l.b16 %v391
    %v499 = vunpack.c.h.b16 %v391
    %v500 = vunpack.c.l.b16 %v392
    %v501 = vunpack.c.h.b16 %v392
    %v502 = vunpack.c.l.b16 %v393
    %v503 = vunpack.c.h.b16 %v393
    %v504 = vunpack.c.l.b16 %v394
    %v505 = vunpack.c.h.b16 %v394
    %v506 = vpack.c.b16 %v444, %v442
    %v507 = vpack.c.b16 %v445, %v443
    %v508 = vpack.c.b16 %v448, %v446
    %v509 = vpack.c.b16 %v449, %v447
    %v510 = vpack.c.b16 %v452, %v450
    %v511 = vpack.c.b16 %v453, %v451
    %v512 = vpack.c.b16 %v456, %v454
    %v513 = vpack.c.b16 %v457, %v455
    %v514 = vpack.c.b16 %v460, %v458
    %v515 = vpack.c.b16 %v461, %v459
    %v516 = vpack.c.b16 %v464, %v462
    %v517 = vpack.c.b16 %v465, %v463
    %v518 = vpack.c.b16 %v468, %v466
    %v519 = vpack.c.b16 %v469, %v467
    %v520 = vpack.c.b16 %v472, %v470
    %v521 = vpack.c.b16 %v473, %v471
    %v522 = vpack.c.b16 %v476, %v474
    %v523 = vpack.c.b16 %v477, %v475
    %v524 = vpack.c.b16 %v480, %v478
    %v525 = vpack.c.b16 %v481, %v479
    %v526 = vpack.c.b16 %v484, %v482
    %v527 = vpack.c.b16 %v485, %v483
    %v528 = vpack.c.b16 %v488, %v486
    %v529 = vpack.c.b16 %v489, %v487
    %v530 = vpack.c.b16 %v492, %v490
    %v531 = vpack.c.b16 %v493, %v491
    %v532 = vpack.c.b16 %v496, %v494
    %v533 = vpack.c.b16 %v497, %v495
    %v534 = vpack.c.b16 %v500, %v498
    %v535 = vpack.c.b16 %v501, %v499
    %v536 = vpack.c.b16 %v504, %v502
    %v537 = vpack.c.b16 %v505, %v503
    %570 = vmatprep.subr.bf16.mxu0 %v507
    %571 = vmatpush1.bf16.msra.mxu0 %v506
    %572 = vmatprep.subr.bf16.mxu0 %v509
    %573 = vmatpush1.bf16.msra.mxu0 %v508
    %574 = vmatprep.subr.bf16.mxu0 %v511
    %575 = vmatpush1.bf16.msra.mxu0 %v510
    %576 = vmatprep.subr.bf16.mxu0 %v513
    %577 = vmatpush1.bf16.msra.mxu0 %v512
    %578 = vmatprep.subr.bf16.mxu0 %v515
    %579 = vmatpush1.bf16.msra.mxu0 %v514
    %580 = vmatprep.subr.bf16.mxu0 %v517
    %581 = vmatpush1.bf16.msra.mxu0 %v516
    %582 = vmatprep.subr.bf16.mxu0 %v519
    %583 = vmatpush1.bf16.msra.mxu0 %v518
    %584 = vmatprep.subr.bf16.mxu0 %v521
    %585 = vmatpush1.bf16.msra.mxu0 %v520
    %586 = vmatprep.subr.bf16.mxu0 %v523
    %587 = vmatpush1.bf16.msra.mxu0 %v522
    %588 = vmatprep.subr.bf16.mxu0 %v525
    %589 = vmatpush1.bf16.msra.mxu0 %v524
    %590 = vmatprep.subr.bf16.mxu0 %v527
    %591 = vmatpush1.bf16.msra.mxu0 %v526
    %592 = vmatprep.subr.bf16.mxu0 %v529
    %593 = vmatpush1.bf16.msra.mxu0 %v528
    %594 = vmatprep.subr.bf16.mxu0 %v531
    %595 = vmatpush1.bf16.msra.mxu0 %v530
    %596 = vmatprep.subr.bf16.mxu0 %v533
    %597 = vmatpush1.bf16.msra.mxu0 %v532
    %598 = vmatprep.subr.bf16.mxu0 %v535
    %599 = vmatpush1.bf16.msra.mxu0 %v534
    %600 = vmatprep.subr.bf16.mxu0 %v537
    %601 = vmatpush1.bf16.msra.mxu0 %v536
    %602 = vmatprep.mubr.bf16.mxu0 %v396
    %603 = vmatmul.mubr.bf16.gmra.mrb[0].mxu0 %v395
    %v604 = vpop.f32.mrb[0].mxu0
    %v605 = vadd.f32 %v403, %v604
    %v606 = vpop.f32.mrb[0].mxu0
    %v607 = vadd.f32 %v407, %v606
    %v608 = vpop.f32.mrb[0].mxu0
    %v609 = vpop.f32.mrb[0].mxu0
    %610 = vdwg.mxu0
    %v611 = vmax.f32 %v605, 0.0
    %v612 = vmax.f32 %v607, 0.0
    %v613 = vadd.f32 %v611, %v110
    %v614 = vadd.f32 %v612, %v111
    %v615 = vadd.f32 %v361, %v108
    %v616 = vadd.f32 %v362, %v109
    %s617 = scalar_lea.vmem [#allocation11], 4
    %v618 = vld [vmem:[%s617] ss:$8 sm:$0x3]
    %s619 = scalar_lea.vmem [#allocation11], 5
    %v620 = vld [vmem:[%s619] ss:$8 sm:$0x3]
    %v621 = vadd.f32 %v615, %v616
    %622 = vadd.xlane.f32.xlu0 %v621
    %v623 = vpop.xlane.xlu0 %622
    %v624 = vrcp.pop 256.0
    %v625 = vmul.f32 %v623, %v624
    %v626 = vsub.f32 %v615, %v625
    %v627 = vsub.f32 %v616, %v625
    %v628 = vmul.f32 %v626, %v626
    %v629 = vmul.f32 %v627, %v627
    %v630 = vadd.f32 %v628, %v629
    %631 = vadd.xlane.f32.xlu0 %v630
    %v632 = vpop.xlane.xlu0 %631
    %v633 = vmul.f32 %v632, %v624
    %v634 = vadd.f32 %v633, 1e-05
    %v635 = vrsqrt.pop %v634
    %v636 = vmul.f32 %v626, %v635
    %v637 = vmul.f32 %v627, %v635
    %v639 = vlaneseq
    %v640 = vshrl.u32 %v639, 7
    %v641 = vsub.s32 0, %v640
    %v642 = vrot.slane %v618, %v641
    %v643 = vlaneseq
    %v644 = vshrl.u32 %v643, 7
    %v645 = vsub.s32 1, %v644
    %v646 = vrot.slane %v618, %v645
    %v649 = vmul.f32 %v636, %v642
    %v650 = vmul.f32 %v637, %v646
    %v652 = vlaneseq
    %v653 = vshrl.u32 %v652, 7
    %v654 = vsub.s32 0, %v653
    %v655 = vrot.slane %v620, %v654
    %v656 = vlaneseq
    %v657 = vshrl.u32 %v656, 7
    %v658 = vsub.s32 1, %v657
    %v659 = vrot.slane %v620, %v658
    %v662 = vadd.f32 %v649, %v655
    %v663 = vadd.f32 %v650, %v659
    %v664 = vadd.f32 %v613, %v110
    %v665 = vadd.f32 %v614, %v111
    %s666 = scalar_lea.vmem [#allocation11], 6
    %v667 = vld [vmem:[%s666] ss:$8 sm:$0x3]
    %s668 = scalar_lea.vmem [#allocation11], 7
    %v669 = vld [vmem:[%s668] ss:$8 sm:$0x3]
    %v670 = vadd.f32 %v664, %v665
    %671 = vadd.xlane.f32.xlu0 %v670
    %v672 = vpop.xlane.xlu0 %671
    %v673 = vmul.f32 %v672, %v624
    %v674 = vsub.f32 %v664, %v673
    %v675 = vsub.f32 %v665, %v673
    %v676 = vmul.f32 %v674, %v674
    %v677 = vmul.f32 %v675, %v675
    %v678 = vadd.f32 %v676, %v677
    %679 = vadd.xlane.f32.xlu0 %v678
    %v680 = vpop.xlane.xlu0 %679
    %v681 = vmul.f32 %v680, %v624
    %v682 = vadd.f32 %v681, 1e-05
    %v683 = vrsqrt.pop %v682
    %v684 = vmul.f32 %v674, %v683
    %v685 = vmul.f32 %v675, %v683
    %v687 = vlaneseq
    %v688 = vshrl.u32 %v687, 7
    %v689 = vsub.s32 0, %v688
    %v690 = vrot.slane %v667, %v689
    %v691 = vlaneseq
    %v692 = vshrl.u32 %v691, 7
    %v693 = vsub.s32 1, %v692
    %v694 = vrot.slane %v667, %v693
    %v697 = vmul.f32 %v684, %v690
    %v698 = vmul.f32 %v685, %v694
    %v700 = vlaneseq
    %v701 = vshrl.u32 %v700, 7
    %v702 = vsub.s32 0, %v701
    %v703 = vrot.slane %v669, %v702
    %v704 = vlaneseq
    %v705 = vshrl.u32 %v704, 7
    %v706 = vsub.s32 1, %v705
    %v707 = vrot.slane %v669, %v706
    %v710 = vadd.f32 %v697, %v703
    %v711 = vadd.f32 %v698, %v707
    %v712 = vld [vmem:[#allocation7 + $0x10] sm:$0xff]
    %v713 = vld [vmem:[#allocation7 + $0x30] sm:$0xff]
    %v714 = vld [vmem:[#allocation7 + $0x50] sm:$0xff]
    %v715 = vld [vmem:[#allocation7 + $0x70] sm:$0xff]
    %v716 = vld [vmem:[#allocation7 + $0x90] sm:$0xff]
    %v717 = vld [vmem:[#allocation7 + $0xb0] sm:$0xff]
    %v718 = vld [vmem:[#allocation7 + $0xd0] sm:$0xff]
    %v719 = vld [vmem:[#allocation7 + $0xf0] sm:$0xff]
    %v720 = vld [vmem:[#allocation7 + $0x110] sm:$0xff]
    %v721 = vld [vmem:[#allocation7 + $0x130] sm:$0xff]
    %v722 = vld [vmem:[#allocation7 + $0x150] sm:$0xff]
    %v723 = vld [vmem:[#allocation7 + $0x170] sm:$0xff]
    %v724 = vld [vmem:[#allocation7 + $0x190] sm:$0xff]
    %v725 = vld [vmem:[#allocation7 + $0x1b0] sm:$0xff]
    %v726 = vld [vmem:[#allocation7 + $0x1d0] sm:$0xff]
    %v727 = vld [vmem:[#allocation7 + $0x1f0] sm:$0xff]
    %v728 = vld [vmem:[#allocation7 + $0x210] sm:$0xff]
    %v729 = vld [vmem:[#allocation7 + $0x230] sm:$0xff]
    %v730 = vld [vmem:[#allocation7 + $0x250] sm:$0xff]
    %v731 = vld [vmem:[#allocation7 + $0x270] sm:$0xff]
    %v732 = vld [vmem:[#allocation7 + $0x290] sm:$0xff]
    %v733 = vld [vmem:[#allocation7 + $0x2b0] sm:$0xff]
    %v734 = vld [vmem:[#allocation7 + $0x2d0] sm:$0xff]
    %v735 = vld [vmem:[#allocation7 + $0x2f0] sm:$0xff]
    %v736 = vld [vmem:[#allocation7 + $0x310] sm:$0xff]
    %v737 = vld [vmem:[#allocation7 + $0x330] sm:$0xff]
    %v738 = vld [vmem:[#allocation7 + $0x350] sm:$0xff]
    %v739 = vld [vmem:[#allocation7 + $0x370] sm:$0xff]
    %v740 = vld [vmem:[#allocation7 + $0x390] sm:$0xff]
    %v741 = vld [vmem:[#allocation7 + $0x3b0] sm:$0xff]
    %v742 = vld [vmem:[#allocation7 + $0x3d0] sm:$0xff]
    %v743 = vld [vmem:[#allocation7 + $0x3f0] sm:$0xff]
    %v744 = vpack.c.bf16 %v662, %v662
    %v745 = vpack.c.bf16 %v663, %v663
    %s746 = scalar_lea.vmem [#allocation11], 2
    %v747 = vld [vmem:[%s746] ss:$8 sm:$0x3]
    %v749 = vlaneseq
    %v750 = vshrl.u32 %v749, 7
    %v751 = vsub.s32 0, %v750
    %v752 = vrot.slane %v747, %v751
    %v753 = vlaneseq
    %v754 = vshrl.u32 %v753, 7
    %v755 = vsub.s32 1, %v754
    %v756 = vrot.slane %v747, %v755
    %v791 = vunpack.c.l.b16 %v712
    %v792 = vunpack.c.h.b16 %v712
    %v793 = vunpack.c.l.b16 %v713
    %v794 = vunpack.c.h.b16 %v713
    %v795 = vunpack.c.l.b16 %v714
    %v796 = vunpack.c.h.b16 %v714
    %v797 = vunpack.c.l.b16 %v715
    %v798 = vunpack.c.h.b16 %v715
    %v799 = vunpack.c.l.b16 %v716
    %v800 = vunpack.c.h.b16 %v716
    %v801 = vunpack.c.l.b16 %v717
    %v802 = vunpack.c.h.b16 %v717
    %v803 = vunpack.c.l.b16 %v718
    %v804 = vunpack.c.h.b16 %v718
    %v805 = vunpack.c.l.b16 %v719
    %v806 = vunpack.c.h.b16 %v719
    %v807 = vunpack.c.l.b16 %v720
    %v808 = vunpack.c.h.b16 %v720
    %v809 = vunpack.c.l.b16 %v721
    %v810 = vunpack.c.h.b16 %v721
    %v811 = vunpack.c.l.b16 %v722
    %v812 = vunpack.c.h.b16 %v722
    %v813 = vunpack.c.l.b16 %v723
    %v814 = vunpack.c.h.b16 %v723
    %v815 = vunpack.c.l.b16 %v724
    %v816 = vunpack.c.h.b16 %v724
    %v817 = vunpack.c.l.b16 %v725
    %v818 = vunpack.c.h.b16 %v725
    %v819 = vunpack.c.l.b16 %v726
    %v820 = vunpack.c.h.b16 %v726
    %v821 = vunpack.c.l.b16 %v727
    %v822 = vunpack.c.h.b16 %v727
    %v823 = vunpack.c.l.b16 %v728
    %v824 = vunpack.c.h.b16 %v728
    %v825 = vunpack.c.l.b16 %v729
    %v826 = vunpack.c.h.b16 %v729
    %v827 = vunpack.c.l.b16 %v730
    %v828 = vunpack.c.h.b16 %v730
    %v829 = vunpack.c.l.b16 %v731
    %v830 = vunpack.c.h.b16 %v731
    %v831 = vunpack.c.l.b16 %v732
    %v832 = vunpack.c.h.b16 %v732
    %v833 = vunpack.c.l.b16 %v733
    %v834 = vunpack.c.h.b16 %v733
    %v835 = vunpack.c.l.b16 %v734
    %v836 = vunpack.c.h.b16 %v734
    %v837 = vunpack.c.l.b16 %v735
    %v838 = vunpack.c.h.b16 %v735
    %v839 = vunpack.c.l.b16 %v736
    %v840 = vunpack.c.h.b16 %v736
    %v841 = vunpack.c.l.b16 %v737
    %v842 = vunpack.c.h.b16 %v737
    %v843 = vunpack.c.l.b16 %v738
    %v844 = vunpack.c.h.b16 %v738
    %v845 = vunpack.c.l.b16 %v739
    %v846 = vunpack.c.h.b16 %v739
    %v847 = vunpack.c.l.b16 %v740
    %v848 = vunpack.c.h.b16 %v740
    %v849 = vunpack.c.l.b16 %v741
    %v850 = vunpack.c.h.b16 %v741
    %v851 = vunpack.c.l.b16 %v742
    %v852 = vunpack.c.h.b16 %v742
    %v853 = vunpack.c.l.b16 %v743
    %v854 = vunpack.c.h.b16 %v743
    %v855 = vpack.c.b16 %v793, %v791
    %v856 = vpack.c.b16 %v794, %v792
    %v857 = vpack.c.b16 %v797, %v795
    %v858 = vpack.c.b16 %v798, %v796
    %v859 = vpack.c.b16 %v801, %v799
    %v860 = vpack.c.b16 %v802, %v800
    %v861 = vpack.c.b16 %v805, %v803
    %v862 = vpack.c.b16 %v806, %v804
    %v863 = vpack.c.b16 %v809, %v807
    %v864 = vpack.c.b16 %v810, %v808
    %v865 = vpack.c.b16 %v813, %v811
    %v866 = vpack.c.b16 %v814, %v812
    %v867 = vpack.c.b16 %v817, %v815
    %v868 = vpack.c.b16 %v818, %v816
    %v869 = vpack.c.b16 %v821, %v819
    %v870 = vpack.c.b16 %v822, %v820
    %v871 = vpack.c.b16 %v825, %v823
    %v872 = vpack.c.b16 %v826, %v824
    %v873 = vpack.c.b16 %v829, %v827
    %v874 = vpack.c.b16 %v830, %v828
    %v875 = vpack.c.b16 %v833, %v831
    %v876 = vpack.c.b16 %v834, %v832
    %v877 = vpack.c.b16 %v837, %v835
    %v878 = vpack.c.b16 %v838, %v836
    %v879 = vpack.c.b16 %v841, %v839
    %v880 = vpack.c.b16 %v842, %v840
    %v881 = vpack.c.b16 %v845, %v843
    %v882 = vpack.c.b16 %v846, %v844
    %v883 = vpack.c.b16 %v849, %v847
    %v884 = vpack.c.b16 %v850, %v848
    %v885 = vpack.c.b16 %v853, %v851
    %v886 = vpack.c.b16 %v854, %v852
    %919 = vmatprep.subr.bf16.mxu0 %v856
    %920 = vmatpush1.bf16.msra.mxu0 %v855
    %921 = vmatprep.subr.bf16.mxu0 %v858
    %922 = vmatpush1.bf16.msra.mxu0 %v857
    %923 = vmatprep.subr.bf16.mxu0 %v860
    %924 = vmatpush1.bf16.msra.mxu0 %v859
    %925 = vmatprep.subr.bf16.mxu0 %v862
    %926 = vmatpush1.bf16.msra.mxu0 %v861
    %927 = vmatprep.subr.bf16.mxu0 %v864
    %928 = vmatpush1.bf16.msra.mxu0 %v863
    %929 = vmatprep.subr.bf16.mxu0 %v866
    %930 = vmatpush1.bf16.msra.mxu0 %v865
    %931 = vmatprep.subr.bf16.mxu0 %v868
    %932 = vmatpush1.bf16.msra.mxu0 %v867
    %933 = vmatprep.subr.bf16.mxu0 %v870
    %934 = vmatpush1.bf16.msra.mxu0 %v869
    %935 = vmatprep.subr.bf16.mxu0 %v872
    %936 = vmatpush1.bf16.msra.mxu0 %v871
    %937 = vmatprep.subr.bf16.mxu0 %v874
    %938 = vmatpush1.bf16.msra.mxu0 %v873
    %939 = vmatprep.subr.bf16.mxu0 %v876
    %940 = vmatpush1.bf16.msra.mxu0 %v875
    %941 = vmatprep.subr.bf16.mxu0 %v878
    %942 = vmatpush1.bf16.msra.mxu0 %v877
    %943 = vmatprep.subr.bf16.mxu0 %v880
    %944 = vmatpush1.bf16.msra.mxu0 %v879
    %945 = vmatprep.subr.bf16.mxu0 %v882
    %946 = vmatpush1.bf16.msra.mxu0 %v881
    %947 = vmatprep.subr.bf16.mxu0 %v884
    %948 = vmatpush1.bf16.msra.mxu0 %v883
    %949 = vmatprep.subr.bf16.mxu0 %v886
    %950 = vmatpush1.bf16.msra.mxu0 %v885
    %951 = vmatprep.mubr.bf16.mxu0 %v745
    %952 = vmatmul.mubr.bf16.gmra.mrb[0].mxu0 %v744
    %v953 = vpop.f32.mrb[0].mxu0
    %v954 = vadd.f32 %v752, %v953
    %v955 = vpop.f32.mrb[0].mxu0
    %v956 = vadd.f32 %v756, %v955
    %v957 = vpop.f32.mrb[0].mxu0
    %v958 = vpop.f32.mrb[0].mxu0
    %959 = vdwg.mxu0
    %v960 = vmax.f32 %v954, 0.0
    %v961 = vmax.f32 %v956, 0.0
    %v962 = vadd.f32 %v960, %v662
    %v963 = vadd.f32 %v961, %v663
    %v964 = vld [vmem:[#allocation7 + $0x18] sm:$0xff]
    %v965 = vld [vmem:[#allocation7 + $0x38] sm:$0xff]
    %v966 = vld [vmem:[#allocation7 + $0x58] sm:$0xff]
    %v967 = vld [vmem:[#allocation7 + $0x78] sm:$0xff]
    %v968 = vld [vmem:[#allocation7 + $0x98] sm:$0xff]
    %v969 = vld [vmem:[#allocation7 + $0xb8] sm:$0xff]
    %v970 = vld [vmem:[#allocation7 + $0xd8] sm:$0xff]
    %v971 = vld [vmem:[#allocation7 + $0xf8] sm:$0xff]
    %v972 = vld [vmem:[#allocation7 + $0x118] sm:$0xff]
    %v973 = vld [vmem:[#allocation7 + $0x138] sm:$0xff]
    %v974 = vld [vmem:[#allocation7 + $0x158] sm:$0xff]
    %v975 = vld [vmem:[#allocation7 + $0x178] sm:$0xff]
    %v976 = vld [vmem:[#allocation7 + $0x198] sm:$0xff]
    %v977 = vld [vmem:[#allocation7 + $0x1b8] sm:$0xff]
    %v978 = vld [vmem:[#allocation7 + $0x1d8] sm:$0xff]
    %v979 = vld [vmem:[#allocation7 + $0x1f8] sm:$0xff]
    %v980 = vld [vmem:[#allocation7 + $0x218] sm:$0xff]
    %v981 = vld [vmem:[#allocation7 + $0x238] sm:$0xff]
    %v982 = vld [vmem:[#allocation7 + $0x258] sm:$0xff]
    %v983 = vld [vmem:[#allocation7 + $0x278] sm:$0xff]
    %v984 = vld [vmem:[#allocation7 + $0x298] sm:$0xff]
    %v985 = vld [vmem:[#allocation7 + $0x2b8] sm:$0xff]
    %v986 = vld [vmem:[#allocation7 + $0x2d8] sm:$0xff]
    %v987 = vld [vmem:[#allocation7 + $0x2f8] sm:$0xff]
    %v988 = vld [vmem:[#allocation7 + $0x318] sm:$0xff]
    %v989 = vld [vmem:[#allocation7 + $0x338] sm:$0xff]
    %v990 = vld [vmem:[#allocation7 + $0x358] sm:$0xff]
    %v991 = vld [vmem:[#allocation7 + $0x378] sm:$0xff]
    %v992 = vld [vmem:[#allocation7 + $0x398] sm:$0xff]
    %v993 = vld [vmem:[#allocation7 + $0x3b8] sm:$0xff]
    %v994 = vld [vmem:[#allocation7 + $0x3d8] sm:$0xff]
    %v995 = vld [vmem:[#allocation7 + $0x3f8] sm:$0xff]
    %v996 = vpack.c.bf16 %v710, %v710
    %v997 = vpack.c.bf16 %v711, %v711
    %s998 = scalar_lea.vmem [#allocation11], 3
    %v999 = vld [vmem:[%s998] ss:$8 sm:$0x3]
    %v1001 = vlaneseq
    %v1002 = vshrl.u32 %v1001, 7
    %v1003 = vsub.s32 0, %v1002
    %v1004 = vrot.slane %v999, %v1003
    %v1005 = vlaneseq
    %v1006 = vshrl.u32 %v1005, 7
    %v1007 = vsub.s32 1, %v1006
    %v1008 = vrot.slane %v999, %v1007
    %v1043 = vunpack.c.l.b16 %v964
    %v1044 = vunpack.c.h.b16 %v964
    %v1045 = vunpack.c.l.b16 %v965
    %v1046 = vunpack.c.h.b16 %v965
    %v1047 = vunpack.c.l.b16 %v966
    %v1048 = vunpack.c.h.b16 %v966
    %v1049 = vunpack.c.l.b16 %v967
    %v1050 = vunpack.c.h.b16 %v967
    %v1051 = vunpack.c.l.b16 %v968
    %v1052 = vunpack.c.h.b16 %v968
    %v1053 = vunpack.c.l.b16 %v969
    %v1054 = vunpack.c.h.b16 %v969
    %v1055 = vunpack.c.l.b16 %v970
    %v1056 = vunpack.c.h.b16 %v970
    %v1057 = vunpack.c.l.b16 %v971
    %v1058 = vunpack.c.h.b16 %v971
    %v1059 = vunpack.c.l.b16 %v972
    %v1060 = vunpack.c.h.b16 %v972
    %v1061 = vunpack.c.l.b16 %v973
    %v1062 = vunpack.c.h.b16 %v973
    %v1063 = vunpack.c.l.b16 %v974
    %v1064 = vunpack.c.h.b16 %v974
    %v1065 = vunpack.c.l.b16 %v975
    %v1066 = vunpack.c.h.b16 %v975
    %v1067 = vunpack.c.l.b16 %v976
    %v1068 = vunpack.c.h.b16 %v976
    %v1069 = vunpack.c.l.b16 %v977
    %v1070 = vunpack.c.h.b16 %v977
    %v1071 = vunpack.c.l.b16 %v978
    %v1072 = vunpack.c.h.b16 %v978
    %v1073 = vunpack.c.l.b16 %v979
    %v1074 = vunpack.c.h.b16 %v979
    %v1075 = vunpack.c.l.b16 %v980
    %v1076 = vunpack.c.h.b16 %v980
    %v1077 = vunpack.c.l.b16 %v981
    %v1078 = vunpack.c.h.b16 %v981
    %v1079 = vunpack.c.l.b16 %v982
    %v1080 = vunpack.c.h.b16 %v982
    %v1081 = vunpack.c.l.b16 %v983
    %v1082 = vunpack.c.h.b16 %v983
    %v1083 = vunpack.c.l.b16 %v984
    %v1084 = vunpack.c.h.b16 %v984
    %v1085 = vunpack.c.l.b16 %v985
    %v1086 = vunpack.c.h.b16 %v985
    %v1087 = vunpack.c.l.b16 %v986
    %v1088 = vunpack.c.h.b16 %v986
    %v1089 = vunpack.c.l.b16 %v987
    %v1090 = vunpack.c.h.b16 %v987
    %v1091 = vunpack.c.l.b16 %v988
    %v1092 = vunpack.c.h.b16 %v988
    %v1093 = vunpack.c.l.b16 %v989
    %v1094 = vunpack.c.h.b16 %v989
    %v1095 = vunpack.c.l.b16 %v990
    %v1096 = vunpack.c.h.b16 %v990
    %v1097 = vunpack.c.l.b16 %v991
    %v1098 = vunpack.c.h.b16 %v991
    %v1099 = vunpack.c.l.b16 %v992
    %v1100 = vunpack.c.h.b16 %v992
    %v1101 = vunpack.c.l.b16 %v993
    %v1102 = vunpack.c.h.b16 %v993
    %v1103 = vunpack.c.l.b16 %v994
    %v1104 = vunpack.c.h.b16 %v994
    %v1105 = vunpack.c.l.b16 %v995
    %v1106 = vunpack.c.h.b16 %v995
    %v1107 = vpack.c.b16 %v1045, %v1043
    %v1108 = vpack.c.b16 %v1046, %v1044
    %v1109 = vpack.c.b16 %v1049, %v1047
    %v1110 = vpack.c.b16 %v1050, %v1048
    %v1111 = vpack.c.b16 %v1053, %v1051
    %v1112 = vpack.c.b16 %v1054, %v1052
    %v1113 = vpack.c.b16 %v1057, %v1055
    %v1114 = vpack.c.b16 %v1058, %v1056
    %v1115 = vpack.c.b16 %v1061, %v1059
    %v1116 = vpack.c.b16 %v1062, %v1060
    %v1117 = vpack.c.b16 %v1065, %v1063
    %v1118 = vpack.c.b16 %v1066, %v1064
    %v1119 = vpack.c.b16 %v1069, %v1067
    %v1120 = vpack.c.b16 %v1070, %v1068
    %v1121 = vpack.c.b16 %v1073, %v1071
    %v1122 = vpack.c.b16 %v1074, %v1072
    %v1123 = vpack.c.b16 %v1077, %v1075
    %v1124 = vpack.c.b16 %v1078, %v1076
    %v1125 = vpack.c.b16 %v1081, %v1079
    %v1126 = vpack.c.b16 %v1082, %v1080
    %v1127 = vpack.c.b16 %v1085, %v1083
    %v1128 = vpack.c.b16 %v1086, %v1084
    %v1129 = vpack.c.b16 %v1089, %v1087
    %v1130 = vpack.c.b16 %v1090, %v1088
    %v1131 = vpack.c.b16 %v1093, %v1091
    %v1132 = vpack.c.b16 %v1094, %v1092
    %v1133 = vpack.c.b16 %v1097, %v1095
    %v1134 = vpack.c.b16 %v1098, %v1096
    %v1135 = vpack.c.b16 %v1101, %v1099
    %v1136 = vpack.c.b16 %v1102, %v1100
    %v1137 = vpack.c.b16 %v1105, %v1103
    %v1138 = vpack.c.b16 %v1106, %v1104
    %1171 = vmatprep.subr.bf16.mxu0 %v1108
    %1172 = vmatpush1.bf16.msra.mxu0 %v1107
    %1173 = vmatprep.subr.bf16.mxu0 %v1110
    %1174 = vmatpush1.bf16.msra.mxu0 %v1109
    %1175 = vmatprep.subr.bf16.mxu0 %v1112
    %1176 = vmatpush1.bf16.msra.mxu0 %v1111
    %1177 = vmatprep.subr.bf16.mxu0 %v1114
    %1178 = vmatpush1.bf16.msra.mxu0 %v1113
    %1179 = vmatprep.subr.bf16.mxu0 %v1116
    %1180 = vmatpush1.bf16.msra.mxu0 %v1115
    %1181 = vmatprep.subr.bf16.mxu0 %v1118
    %1182 = vmatpush1.bf16.msra.mxu0 %v1117
    %1183 = vmatprep.subr.bf16.mxu0 %v1120
    %1184 = vmatpush1.bf16.msra.mxu0 %v1119
    %1185 = vmatprep.subr.bf16.mxu0 %v1122
    %1186 = vmatpush1.bf16.msra.mxu0 %v1121
    %1187 = vmatprep.subr.bf16.mxu0 %v1124
    %1188 = vmatpush1.bf16.msra.mxu0 %v1123
    %1189 = vmatprep.subr.bf16.mxu0 %v1126
    %1190 = vmatpush1.bf16.msra.mxu0 %v1125
    %1191 = vmatprep.subr.bf16.mxu0 %v1128
    %1192 = vmatpush1.bf16.msra.mxu0 %v1127
    %1193 = vmatprep.subr.bf16.mxu0 %v1130
    %1194 = vmatpush1.bf16.msra.mxu0 %v1129
    %1195 = vmatprep.subr.bf16.mxu0 %v1132
    %1196 = vmatpush1.bf16.msra.mxu0 %v1131
    %1197 = vmatprep.subr.bf16.mxu0 %v1134
    %1198 = vmatpush1.bf16.msra.mxu0 %v1133
    %1199 = vmatprep.subr.bf16.mxu0 %v1136
    %1200 = vmatpush1.bf16.msra.mxu0 %v1135
    %1201 = vmatprep.subr.bf16.mxu0 %v1138
    %1202 = vmatpush1.bf16.msra.mxu0 %v1137
    %1203 = vmatprep.mubr.bf16.mxu0 %v997
    %1204 = vmatmul.mubr.bf16.gmra.mrb[0].mxu0 %v996
    %v1205 = vpop.f32.mrb[0].mxu0
    %v1206 = vadd.f32 %v1004, %v1205
    %v1207 = vpop.f32.mrb[0].mxu0
    %v1208 = vadd.f32 %v1008, %v1207
    %v1209 = vpop.f32.mrb[0].mxu0
    %v1210 = vpop.f32.mrb[0].mxu0
    %1211 = vdwg.mxu0
    %v1212 = vmax.f32 %v1206, 0.0
    %v1213 = vmax.f32 %v1208, 0.0
    %v1214 = vadd.f32 %v1212, %v710
    %v1215 = vadd.f32 %v1213, %v711
    %v1216 = vld [vmem:[#allocation8] sm:$0xff]
    %v1217 = vld [vmem:[#allocation8 + $0x8] sm:$0xff]
    %v1218 = vld [vmem:[#allocation8 + $0x10] sm:$0xff]
    %v1219 = vld [vmem:[#allocation8 + $0x18] sm:$0xff]
    %v1220 = vld [vmem:[#allocation8 + $0x40] sm:$0xff]
    %v1221 = vld [vmem:[#allocation8 + $0x48] sm:$0xff]
    %v1222 = vld [vmem:[#allocation8 + $0x50] sm:$0xff]
    %v1223 = vld [vmem:[#allocation8 + $0x58] sm:$0xff]
    %v1224 = vld [vmem:[#allocation8 + $0x80] sm:$0xff]
    %v1225 = vld [vmem:[#allocation8 + $0x88] sm:$0xff]
    %v1226 = vld [vmem:[#allocation8 + $0x90] sm:$0xff]
    %v1227 = vld [vmem:[#allocation8 + $0x98] sm:$0xff]
    %v1228 = vld [vmem:[#allocation8 + $0xc0] sm:$0xff]
    %v1229 = vld [vmem:[#allocation8 + $0xc8] sm:$0xff]
    %v1230 = vld [vmem:[#allocation8 + $0xd0] sm:$0xff]
    %v1231 = vld [vmem:[#allocation8 + $0xd8] sm:$0xff]
    %v1232 = vld [vmem:[#allocation8 + $0x100] sm:$0xff]
    %v1233 = vld [vmem:[#allocation8 + $0x108] sm:$0xff]
    %v1234 = vld [vmem:[#allocation8 + $0x110] sm:$0xff]
    %v1235 = vld [vmem:[#allocation8 + $0x118] sm:$0xff]
    %v1236 = vld [vmem:[#allocation8 + $0x140] sm:$0xff]
    %v1237 = vld [vmem:[#allocation8 + $0x148] sm:$0xff]
    %v1238 = vld [vmem:[#allocation8 + $0x150] sm:$0xff]
    %v1239 = vld [vmem:[#allocation8 + $0x158] sm:$0xff]
    %v1240 = vld [vmem:[#allocation8 + $0x180] sm:$0xff]
    %v1241 = vld [vmem:[#allocation8 + $0x188] sm:$0xff]
    %v1242 = vld [vmem:[#allocation8 + $0x190] sm:$0xff]
    %v1243 = vld [vmem:[#allocation8 + $0x198] sm:$0xff]
    %v1244 = vld [vmem:[#allocation8 + $0x1c0] sm:$0xff]
    %v1245 = vld [vmem:[#allocation8 + $0x1c8] sm:$0xff]
    %v1246 = vld [vmem:[#allocation8 + $0x1d0] sm:$0xff]
    %v1247 = vld [vmem:[#allocation8 + $0x1d8] sm:$0xff]
    %v1248 = vld [vmem:[#allocation8 + $0x200] sm:$0xff]
    %v1249 = vld [vmem:[#allocation8 + $0x208] sm:$0xff]
    %v1250 = vld [vmem:[#allocation8 + $0x210] sm:$0xff]
    %v1251 = vld [vmem:[#allocation8 + $0x218] sm:$0xff]
    %v1252 = vld [vmem:[#allocation8 + $0x240] sm:$0xff]
    %v1253 = vld [vmem:[#allocation8 + $0x248] sm:$0xff]
    %v1254 = vld [vmem:[#allocation8 + $0x250] sm:$0xff]
    %v1255 = vld [vmem:[#allocation8 + $0x258] sm:$0xff]
    %v1256 = vld [vmem:[#allocation8 + $0x280] sm:$0xff]
    %v1257 = vld [vmem:[#allocation8 + $0x288] sm:$0xff]
    %v1258 = vld [vmem:[#allocation8 + $0x290] sm:$0xff]
    %v1259 = vld [vmem:[#allocation8 + $0x298] sm:$0xff]
    %v1260 = vld [vmem:[#allocation8 + $0x2c0] sm:$0xff]
    %v1261 = vld [vmem:[#allocation8 + $0x2c8] sm:$0xff]
    %v1262 = vld [vmem:[#allocation8 + $0x2d0] sm:$0xff]
    %v1263 = vld [vmem:[#allocation8 + $0x2d8] sm:$0xff]
    %v1264 = vld [vmem:[#allocation8 + $0x300] sm:$0xff]
    %v1265 = vld [vmem:[#allocation8 + $0x308] sm:$0xff]
    %v1266 = vld [vmem:[#allocation8 + $0x310] sm:$0xff]
    %v1267 = vld [vmem:[#allocation8 + $0x318] sm:$0xff]
    %v1268 = vld [vmem:[#allocation8 + $0x340] sm:$0xff]
    %v1269 = vld [vmem:[#allocation8 + $0x348] sm:$0xff]
    %v1270 = vld [vmem:[#allocation8 + $0x350] sm:$0xff]
    %v1271 = vld [vmem:[#allocation8 + $0x358] sm:$0xff]
    %v1272 = vld [vmem:[#allocation8 + $0x380] sm:$0xff]
    %v1273 = vld [vmem:[#allocation8 + $0x388] sm:$0xff]
    %v1274 = vld [vmem:[#allocation8 + $0x390] sm:$0xff]
    %v1275 = vld [vmem:[#allocation8 + $0x398] sm:$0xff]
    %v1276 = vld [vmem:[#allocation8 + $0x3c0] sm:$0xff]
    %v1277 = vld [vmem:[#allocation8 + $0x3c8] sm:$0xff]
    %v1278 = vld [vmem:[#allocation8 + $0x3d0] sm:$0xff]
    %v1279 = vld [vmem:[#allocation8 + $0x3d8] sm:$0xff]
    %v1280 = vld [vmem:[#allocation8 + $0x400] sm:$0xff]
    %v1281 = vld [vmem:[#allocation8 + $0x408] sm:$0xff]
    %v1282 = vld [vmem:[#allocation8 + $0x410] sm:$0xff]
    %v1283 = vld [vmem:[#allocation8 + $0x418] sm:$0xff]
    %v1284 = vld [vmem:[#allocation8 + $0x440] sm:$0xff]
    %v1285 = vld [vmem:[#allocation8 + $0x448] sm:$0xff]
    %v1286 = vld [vmem:[#allocation8 + $0x450] sm:$0xff]
    %v1287 = vld [vmem:[#allocation8 + $0x458] sm:$0xff]
    %v1288 = vld [vmem:[#allocation8 + $0x480] sm:$0xff]
    %v1289 = vld [vmem:[#allocation8 + $0x488] sm:$0xff]
    %v1290 = vld [vmem:[#allocation8 + $0x490] sm:$0xff]
    %v1291 = vld [vmem:[#allocation8 + $0x498] sm:$0xff]
    %v1292 = vld [vmem:[#allocation8 + $0x4c0] sm:$0xff]
    %v1293 = vld [vmem:[#allocation8 + $0x4c8] sm:$0xff]
    %v1294 = vld [vmem:[#allocation8 + $0x4d0] sm:$0xff]
    %v1295 = vld [vmem:[#allocation8 + $0x4d8] sm:$0xff]
    %v1296 = vld [vmem:[#allocation8 + $0x500] sm:$0xff]
    %v1297 = vld [vmem:[#allocation8 + $0x508] sm:$0xff]
    %v1298 = vld [vmem:[#allocation8 + $0x510] sm:$0xff]
    %v1299 = vld [vmem:[#allocation8 + $0x518] sm:$0xff]
    %v1300 = vld [vmem:[#allocation8 + $0x540] sm:$0xff]
    %v1301 = vld [vmem:[#allocation8 + $0x548] sm:$0xff]
    %v1302 = vld [vmem:[#allocation8 + $0x550] sm:$0xff]
    %v1303 = vld [vmem:[#allocation8 + $0x558] sm:$0xff]
    %v1304 = vld [vmem:[#allocation8 + $0x580] sm:$0xff]
    %v1305 = vld [vmem:[#allocation8 + $0x588] sm:$0xff]
    %v1306 = vld [vmem:[#allocation8 + $0x590] sm:$0xff]
    %v1307 = vld [vmem:[#allocation8 + $0x598] sm:$0xff]
    %v1308 = vld [vmem:[#allocation8 + $0x5c0] sm:$0xff]
    %v1309 = vld [vmem:[#allocation8 + $0x5c8] sm:$0xff]
    %v1310 = vld [vmem:[#allocation8 + $0x5d0] sm:$0xff]
    %v1311 = vld [vmem:[#allocation8 + $0x5d8] sm:$0xff]
    %v1312 = vld [vmem:[#allocation8 + $0x600] sm:$0xff]
    %v1313 = vld [vmem:[#allocation8 + $0x608] sm:$0xff]
    %v1314 = vld [vmem:[#allocation8 + $0x610] sm:$0xff]
    %v1315 = vld [vmem:[#allocation8 + $0x618] sm:$0xff]
    %v1316 = vld [vmem:[#allocation8 + $0x640] sm:$0xff]
    %v1317 = vld [vmem:[#allocation8 + $0x648] sm:$0xff]
    %v1318 = vld [vmem:[#allocation8 + $0x650] sm:$0xff]
    %v1319 = vld [vmem:[#allocation8 + $0x658] sm:$0xff]
    %v1320 = vld [vmem:[#allocation8 + $0x680] sm:$0xff]
    %v1321 = vld [vmem:[#allocation8 + $0x688] sm:$0xff]
    %v1322 = vld [vmem:[#allocation8 + $0x690] sm:$0xff]
    %v1323 = vld [vmem:[#allocation8 + $0x698] sm:$0xff]
    %v1324 = vld [vmem:[#allocation8 + $0x6c0] sm:$0xff]
    %v1325 = vld [vmem:[#allocation8 + $0x6c8] sm:$0xff]
    %v1326 = vld [vmem:[#allocation8 + $0x6d0] sm:$0xff]
    %v1327 = vld [vmem:[#allocation8 + $0x6d8] sm:$0xff]
    %v1328 = vld [vmem:[#allocation8 + $0x700] sm:$0xff]
    %v1329 = vld [vmem:[#allocation8 + $0x708] sm:$0xff]
    %v1330 = vld [vmem:[#allocation8 + $0x710] sm:$0xff]
    %v1331 = vld [vmem:[#allocation8 + $0x718] sm:$0xff]
    %v1332 = vld [vmem:[#allocation8 + $0x740] sm:$0xff]
    %v1333 = vld [vmem:[#allocation8 + $0x748] sm:$0xff]
    %v1334 = vld [vmem:[#allocation8 + $0x750] sm:$0xff]
    %v1335 = vld [vmem:[#allocation8 + $0x758] sm:$0xff]
    %v1336 = vld [vmem:[#allocation8 + $0x780] sm:$0xff]
    %v1337 = vld [vmem:[#allocation8 + $0x788] sm:$0xff]
    %v1338 = vld [vmem:[#allocation8 + $0x790] sm:$0xff]
    %v1339 = vld [vmem:[#allocation8 + $0x798] sm:$0xff]
    %v1340 = vld [vmem:[#allocation8 + $0x7c0] sm:$0xff]
    %v1341 = vld [vmem:[#allocation8 + $0x7c8] sm:$0xff]
    %v1342 = vld [vmem:[#allocation8 + $0x7d0] sm:$0xff]
    %v1343 = vld [vmem:[#allocation8 + $0x7d8] sm:$0xff]
    %v1344 = vld [vmem:[#allocation10] sm:$0xff]
    %v1345 = vld [vmem:[#allocation10 + $0x10] sm:$0xff]
    %v1346 = vld [vmem:[#allocation10 + $0x20] sm:$0xff]
    %v1347 = vld [vmem:[#allocation10 + $0x30] sm:$0xff]
    %v1348 = vld [vmem:[#allocation10 + $0x40] sm:$0xff]
    %v1349 = vld [vmem:[#allocation10 + $0x50] sm:$0xff]
    %v1350 = vld [vmem:[#allocation10 + $0x60] sm:$0xff]
    %v1351 = vld [vmem:[#allocation10 + $0x70] sm:$0xff]
    %v1352 = vld [vmem:[#allocation10 + $0x80] sm:$0xff]
    %v1353 = vld [vmem:[#allocation10 + $0x90] sm:$0xff]
    %v1354 = vld [vmem:[#allocation10 + $0xa0] sm:$0xff]
    %v1355 = vld [vmem:[#allocation10 + $0xb0] sm:$0xff]
    %v1356 = vld [vmem:[#allocation10 + $0xc0] sm:$0xff]
    %v1357 = vld [vmem:[#allocation10 + $0xd0] sm:$0xff]
    %v1358 = vld [vmem:[#allocation10 + $0xe0] sm:$0xff]
    %v1359 = vld [vmem:[#allocation10 + $0xf0] sm:$0xff]
    %v1360 = vld [vmem:[#allocation10 + $0x100] sm:$0xff]
    %v1361 = vld [vmem:[#allocation10 + $0x110] sm:$0xff]
    %v1362 = vld [vmem:[#allocation10 + $0x120] sm:$0xff]
    %v1363 = vld [vmem:[#allocation10 + $0x130] sm:$0xff]
    %v1364 = vld [vmem:[#allocation10 + $0x140] sm:$0xff]
    %v1365 = vld [vmem:[#allocation10 + $0x150] sm:$0xff]
    %v1366 = vld [vmem:[#allocation10 + $0x160] sm:$0xff]
    %v1367 = vld [vmem:[#allocation10 + $0x170] sm:$0xff]
    %v1368 = vld [vmem:[#allocation10 + $0x180] sm:$0xff]
    %v1369 = vld [vmem:[#allocation10 + $0x190] sm:$0xff]
    %v1370 = vld [vmem:[#allocation10 + $0x1a0] sm:$0xff]
    %v1371 = vld [vmem:[#allocation10 + $0x1b0] sm:$0xff]
    %v1372 = vld [vmem:[#allocation10 + $0x1c0] sm:$0xff]
    %v1373 = vld [vmem:[#allocation10 + $0x1d0] sm:$0xff]
    %v1374 = vld [vmem:[#allocation10 + $0x1e0] sm:$0xff]
    %v1375 = vld [vmem:[#allocation10 + $0x1f0] sm:$0xff]
    %v1376 = vld [vmem:[#allocation10 + $0x200] sm:$0xff]
    %v1377 = vld [vmem:[#allocation10 + $0x210] sm:$0xff]
    %v1378 = vld [vmem:[#allocation10 + $0x220] sm:$0xff]
    %v1379 = vld [vmem:[#allocation10 + $0x230] sm:$0xff]
    %v1380 = vld [vmem:[#allocation10 + $0x240] sm:$0xff]
    %v1381 = vld [vmem:[#allocation10 + $0x250] sm:$0xff]
    %v1382 = vld [vmem:[#allocation10 + $0x260] sm:$0xff]
    %v1383 = vld [vmem:[#allocation10 + $0x270] sm:$0xff]
    %v1384 = vld [vmem:[#allocation10 + $0x280] sm:$0xff]
    %v1385 = vld [vmem:[#allocation10 + $0x290] sm:$0xff]
    %v1386 = vld [vmem:[#allocation10 + $0x2a0] sm:$0xff]
    %v1387 = vld [vmem:[#allocation10 + $0x2b0] sm:$0xff]
    %v1388 = vld [vmem:[#allocation10 + $0x2c0] sm:$0xff]
    %v1389 = vld [vmem:[#allocation10 + $0x2d0] sm:$0xff]
    %v1390 = vld [vmem:[#allocation10 + $0x2e0] sm:$0xff]
    %v1391 = vld [vmem:[#allocation10 + $0x2f0] sm:$0xff]
    %v1392 = vld [vmem:[#allocation10 + $0x300] sm:$0xff]
    %v1393 = vld [vmem:[#allocation10 + $0x310] sm:$0xff]
    %v1394 = vld [vmem:[#allocation10 + $0x320] sm:$0xff]
    %v1395 = vld [vmem:[#allocation10 + $0x330] sm:$0xff]
    %v1396 = vld [vmem:[#allocation10 + $0x340] sm:$0xff]
    %v1397 = vld [vmem:[#allocation10 + $0x350] sm:$0xff]
    %v1398 = vld [vmem:[#allocation10 + $0x360] sm:$0xff]
    %v1399 = vld [vmem:[#allocation10 + $0x370] sm:$0xff]
    %v1400 = vld [vmem:[#allocation10 + $0x380] sm:$0xff]
    %v1401 = vld [vmem:[#allocation10 + $0x390] sm:$0xff]
    %v1402 = vld [vmem:[#allocation10 + $0x3a0] sm:$0xff]
    %v1403 = vld [vmem:[#allocation10 + $0x3b0] sm:$0xff]
    %v1404 = vld [vmem:[#allocation10 + $0x3c0] sm:$0xff]
    %v1405 = vld [vmem:[#allocation10 + $0x3d0] sm:$0xff]
    %v1406 = vld [vmem:[#allocation10 + $0x3e0] sm:$0xff]
    %v1407 = vld [vmem:[#allocation10 + $0x3f0] sm:$0xff]
    %v1408 = vld [vmem:[#allocation10 + $0x400] sm:$0xff]
    %v1409 = vld [vmem:[#allocation10 + $0x410] sm:$0xff]
    %v1410 = vld [vmem:[#allocation10 + $0x420] sm:$0xff]
    %v1411 = vld [vmem:[#allocation10 + $0x430] sm:$0xff]
    %v1412 = vld [vmem:[#allocation10 + $0x440] sm:$0xff]
    %v1413 = vld [vmem:[#allocation10 + $0x450] sm:$0xff]
    %v1414 = vld [vmem:[#allocation10 + $0x460] sm:$0xff]
    %v1415 = vld [vmem:[#allocation10 + $0x470] sm:$0xff]
    %v1416 = vld [vmem:[#allocation10 + $0x480] sm:$0xff]
    %v1417 = vld [vmem:[#allocation10 + $0x490] sm:$0xff]
    %v1418 = vld [vmem:[#allocation10 + $0x4a0] sm:$0xff]
    %v1419 = vld [vmem:[#allocation10 + $0x4b0] sm:$0xff]
    %v1420 = vld [vmem:[#allocation10 + $0x4c0] sm:$0xff]
    %v1421 = vld [vmem:[#allocation10 + $0x4d0] sm:$0xff]
    %v1422 = vld [vmem:[#allocation10 + $0x4e0] sm:$0xff]
    %v1423 = vld [vmem:[#allocation10 + $0x4f0] sm:$0xff]
    %v1424 = vld [vmem:[#allocation10 + $0x500] sm:$0xff]
    %v1425 = vld [vmem:[#allocation10 + $0x510] sm:$0xff]
    %v1426 = vld [vmem:[#allocation10 + $0x520] sm:$0xff]
    %v1427 = vld [vmem:[#allocation10 + $0x530] sm:$0xff]
    %v1428 = vld [vmem:[#allocation10 + $0x540] sm:$0xff]
    %v1429 = vld [vmem:[#allocation10 + $0x550] sm:$0xff]
    %v1430 = vld [vmem:[#allocation10 + $0x560] sm:$0xff]
    %v1431 = vld [vmem:[#allocation10 + $0x570] sm:$0xff]
    %v1432 = vld [vmem:[#allocation10 + $0x580] sm:$0xff]
    %v1433 = vld [vmem:[#allocation10 + $0x590] sm:$0xff]
    %v1434 = vld [vmem:[#allocation10 + $0x5a0] sm:$0xff]
    %v1435 = vld [vmem:[#allocation10 + $0x5b0] sm:$0xff]
    %v1436 = vld [vmem:[#allocation10 + $0x5c0] sm:$0xff]
    %v1437 = vld [vmem:[#allocation10 + $0x5d0] sm:$0xff]
    %v1438 = vld [vmem:[#allocation10 + $0x5e0] sm:$0xff]
    %v1439 = vld [vmem:[#allocation10 + $0x5f0] sm:$0xff]
    %v1440 = vld [vmem:[#allocation10 + $0x600] sm:$0xff]
    %v1441 = vld [vmem:[#allocation10 + $0x610] sm:$0xff]
    %v1442 = vld [vmem:[#allocation10 + $0x620] sm:$0xff]
    %v1443 = vld [vmem:[#allocation10 + $0x630] sm:$0xff]
    %v1444 = vld [vmem:[#allocation10 + $0x640] sm:$0xff]
    %v1445 = vld [vmem:[#allocation10 + $0x650] sm:$0xff]
    %v1446 = vld [vmem:[#allocation10 + $0x660] sm:$0xff]
    %v1447 = vld [vmem:[#allocation10 + $0x670] sm:$0xff]
    %v1448 = vld [vmem:[#allocation10 + $0x680] sm:$0xff]
    %v1449 = vld [vmem:[#allocation10 + $0x690] sm:$0xff]
    %v1450 = vld [vmem:[#allocation10 + $0x6a0] sm:$0xff]
    %v1451 = vld [vmem:[#allocation10 + $0x6b0] sm:$0xff]
    %v1452 = vld [vmem:[#allocation10 + $0x6c0] sm:$0xff]
    %v1453 = vld [vmem:[#allocation10 + $0x6d0] sm:$0xff]
    %v1454 = vld [vmem:[#allocation10 + $0x6e0] sm:$0xff]
    %v1455 = vld [vmem:[#allocation10 + $0x6f0] sm:$0xff]
    %v1456 = vld [vmem:[#allocation10 + $0x700] sm:$0xff]
    %v1457 = vld [vmem:[#allocation10 + $0x710] sm:$0xff]
    %v1458 = vld [vmem:[#allocation10 + $0x720] sm:$0xff]
    %v1459 = vld [vmem:[#allocation10 + $0x730] sm:$0xff]
    %v1460 = vld [vmem:[#allocation10 + $0x740] sm:$0xff]
    %v1461 = vld [vmem:[#allocation10 + $0x750] sm:$0xff]
    %v1462 = vld [vmem:[#allocation10 + $0x760] sm:$0xff]
    %v1463 = vld [vmem:[#allocation10 + $0x770] sm:$0xff]
    %v1464 = vld [vmem:[#allocation10 + $0x780] sm:$0xff]
    %v1465 = vld [vmem:[#allocation10 + $0x790] sm:$0xff]
    %v1466 = vld [vmem:[#allocation10 + $0x7a0] sm:$0xff]
    %v1467 = vld [vmem:[#allocation10 + $0x7b0] sm:$0xff]
    %v1468 = vld [vmem:[#allocation10 + $0x7c0] sm:$0xff]
    %v1469 = vld [vmem:[#allocation10 + $0x7d0] sm:$0xff]
    %v1470 = vld [vmem:[#allocation10 + $0x7e0] sm:$0xff]
    %v1471 = vld [vmem:[#allocation10 + $0x7f0] sm:$0xff]
    %v1472 = vld [vmem:[%s6] ss:$2 sm:$0xff]
    %s1473 = scalar_lea.vmem [#allocation11], 20
    %v1474 = vld [vmem:[%s1473] ss:$8 sm:$0x3]
    %v1475 = vpack.c.bf16 %v962, %v962
    %v1476 = vpack.c.bf16 %v963, %v963
    %v1478 = vlaneseq
    %v1479 = vshrl.u32 %v1478, 7
    %v1480 = vsub.s32 0, %v1479
    %v1481 = vrot.slane %v1472, %v1480
    %v1482 = vlaneseq
    %v1483 = vshrl.u32 %v1482, 7
    %v1484 = vsub.s32 1, %v1483
    %v1485 = vrot.slane %v1472, %v1484
    %v1486 = vlaneseq
    %v1487 = vshrl.u32 %v1486, 7
    %v1488 = vsub.s32 2, %v1487
    %v1489 = vrot.slane %v1472, %v1488
    %v1490 = vlaneseq
    %v1491 = vshrl.u32 %v1490, 7
    %v1492 = vsub.s32 3, %v1491
    %v1493 = vrot.slane %v1472, %v1492
    %v1494 = vlaneseq
    %v1495 = vshrl.u32 %v1494, 7
    %v1496 = vsub.s32 4, %v1495
    %v1497 = vrot.slane %v1472, %v1496
    %v1498 = vlaneseq
    %v1499 = vshrl.u32 %v1498, 7
    %v1500 = vsub.s32 5, %v1499
    %v1501 = vrot.slane %v1472, %v1500
    %v1502 = vlaneseq
    %v1503 = vshrl.u32 %v1502, 7
    %v1504 = vsub.s32 6, %v1503
    %v1505 = vrot.slane %v1472, %v1504
    %v1506 = vlaneseq
    %v1507 = vshrl.u32 %v1506, 7
    %v1508 = vsub.s32 7, %v1507
    %v1509 = vrot.slane %v1472, %v1508
    %v1646 = vunpack.c.l.b16 %v1216
    %v1647 = vunpack.c.h.b16 %v1216
    %v1648 = vunpack.c.l.b16 %v1217
    %v1649 = vunpack.c.h.b16 %v1217
    %v1650 = vunpack.c.l.b16 %v1218
    %v1651 = vunpack.c.h.b16 %v1218
    %v1652 = vunpack.c.l.b16 %v1219
    %v1653 = vunpack.c.h.b16 %v1219
    %v1654 = vunpack.c.l.b16 %v1220
    %v1655 = vunpack.c.h.b16 %v1220
    %v1656 = vunpack.c.l.b16 %v1221
    %v1657 = vunpack.c.h.b16 %v1221
    %v1658 = vunpack.c.l.b16 %v1222
    %v1659 = vunpack.c.h.b16 %v1222
    %v1660 = vunpack.c.l.b16 %v1223
    %v1661 = vunpack.c.h.b16 %v1223
    %v1662 = vunpack.c.l.b16 %v1224
    %v1663 = vunpack.c.h.b16 %v1224
    %v1664 = vunpack.c.l.b16 %v1225
    %v1665 = vunpack.c.h.b16 %v1225
    %v1666 = vunpack.c.l.b16 %v1226
    %v1667 = vunpack.c.h.b16 %v1226
    %v1668 = vunpack.c.l.b16 %v1227
    %v1669 = vunpack.c.h.b16 %v1227
    %v1670 = vunpack.c.l.b16 %v1228
    %v1671 = vunpack.c.h.b16 %v1228
    %v1672 = vunpack.c.l.b16 %v1229
    %v1673 = vunpack.c.h.b16 %v1229
    %v1674 = vunpack.c.l.b16 %v1230
    %v1675 = vunpack.c.h.b16 %v1230
    %v1676 = vunpack.c.l.b16 %v1231
    %v1677 = vunpack.c.h.b16 %v1231
    %v1678 = vunpack.c.l.b16 %v1232
    %v1679 = vunpack.c.h.b16 %v1232
    %v1680 = vunpack.c.l.b16 %v1233
    %v1681 = vunpack.c.h.b16 %v1233
    %v1682 = vunpack.c.l.b16 %v1234
    %v1683 = vunpack.c.h.b16 %v1234
    %v1684 = vunpack.c.l.b16 %v1235
    %v1685 = vunpack.c.h.b16 %v1235
    %v1686 = vunpack.c.l.b16 %v1236
    %v1687 = vunpack.c.h.b16 %v1236
    %v1688 = vunpack.c.l.b16 %v1237
    %v1689 = vunpack.c.h.b16 %v1237
    %v1690 = vunpack.c.l.b16 %v1238
    %v1691 = vunpack.c.h.b16 %v1238
    %v1692 = vunpack.c.l.b16 %v1239
    %v1693 = vunpack.c.h.b16 %v1239
    %v1694 = vunpack.c.l.b16 %v1240
    %v1695 = vunpack.c.h.b16 %v1240
    %v1696 = vunpack.c.l.b16 %v1241
    %v1697 = vunpack.c.h.b16 %v1241
    %v1698 = vunpack.c.l.b16 %v1242
    %v1699 = vunpack.c.h.b16 %v1242
    %v1700 = vunpack.c.l.b16 %v1243
    %v1701 = vunpack.c.h.b16 %v1243
    %v1702 = vunpack.c.l.b16 %v1244
    %v1703 = vunpack.c.h.b16 %v1244
    %v1704 = vunpack.c.l.b16 %v1245
    %v1705 = vunpack.c.h.b16 %v1245
    %v1706 = vunpack.c.l.b16 %v1246
    %v1707 = vunpack.c.h.b16 %v1246
    %v1708 = vunpack.c.l.b16 %v1247
    %v1709 = vunpack.c.h.b16 %v1247
    %v1710 = vunpack.c.l.b16 %v1248
    %v1711 = vunpack.c.h.b16 %v1248
    %v1712 = vunpack.c.l.b16 %v1249
    %v1713 = vunpack.c.h.b16 %v1249
    %v1714 = vunpack.c.l.b16 %v1250
    %v1715 = vunpack.c.h.b16 %v1250
    %v1716 = vunpack.c.l.b16 %v1251
    %v1717 = vunpack.c.h.b16 %v1251
    %v1718 = vunpack.c.l.b16 %v1252
    %v1719 = vunpack.c.h.b16 %v1252
    %v1720 = vunpack.c.l.b16 %v1253
    %v1721 = vunpack.c.h.b16 %v1253
    %v1722 = vunpack.c.l.b16 %v1254
    %v1723 = vunpack.c.h.b16 %v1254
    %v1724 = vunpack.c.l.b16 %v1255
    %v1725 = vunpack.c.h.b16 %v1255
    %v1726 = vunpack.c.l.b16 %v1256
    %v1727 = vunpack.c.h.b16 %v1256
    %v1728 = vunpack.c.l.b16 %v1257
    %v1729 = vunpack.c.h.b16 %v1257
    %v1730 = vunpack.c.l.b16 %v1258
    %v1731 = vunpack.c.h.b16 %v1258
    %v1732 = vunpack.c.l.b16 %v1259
    %v1733 = vunpack.c.h.b16 %v1259
    %v1734 = vunpack.c.l.b16 %v1260
    %v1735 = vunpack.c.h.b16 %v1260
    %v1736 = vunpack.c.l.b16 %v1261
    %v1737 = vunpack.c.h.b16 %v1261
    %v1738 = vunpack.c.l.b16 %v1262
    %v1739 = vunpack.c.h.b16 %v1262
    %v1740 = vunpack.c.l.b16 %v1263
    %v1741 = vunpack.c.h.b16 %v1263
    %v1742 = vunpack.c.l.b16 %v1264
    %v1743 = vunpack.c.h.b16 %v1264
    %v1744 = vunpack.c.l.b16 %v1265
    %v1745 = vunpack.c.h.b16 %v1265
    %v1746 = vunpack.c.l.b16 %v1266
    %v1747 = vunpack.c.h.b16 %v1266
    %v1748 = vunpack.c.l.b16 %v1267
    %v1749 = vunpack.c.h.b16 %v1267
    %v1750 = vunpack.c.l.b16 %v1268
    %v1751 = vunpack.c.h.b16 %v1268
    %v1752 = vunpack.c.l.b16 %v1269
    %v1753 = vunpack.c.h.b16 %v1269
    %v1754 = vunpack.c.l.b16 %v1270
    %v1755 = vunpack.c.h.b16 %v1270
    %v1756 = vunpack.c.l.b16 %v1271
    %v1757 = vunpack.c.h.b16 %v1271
    %v1758 = vunpack.c.l.b16 %v1272
    %v1759 = vunpack.c.h.b16 %v1272
    %v1760 = vunpack.c.l.b16 %v1273
    %v1761 = vunpack.c.h.b16 %v1273
    %v1762 = vunpack.c.l.b16 %v1274
    %v1763 = vunpack.c.h.b16 %v1274
    %v1764 = vunpack.c.l.b16 %v1275
    %v1765 = vunpack.c.h.b16 %v1275
    %v1766 = vunpack.c.l.b16 %v1276
    %v1767 = vunpack.c.h.b16 %v1276
    %v1768 = vunpack.c.l.b16 %v1277
    %v1769 = vunpack.c.h.b16 %v1277
    %v1770 = vunpack.c.l.b16 %v1278
    %v1771 = vunpack.c.h.b16 %v1278
    %v1772 = vunpack.c.l.b16 %v1279
    %v1773 = vunpack.c.h.b16 %v1279
    %v1774 = vunpack.c.l.b16 %v1280
    %v1775 = vunpack.c.h.b16 %v1280
    %v1776 = vunpack.c.l.b16 %v1281
    %v1777 = vunpack.c.h.b16 %v1281
    %v1778 = vunpack.c.l.b16 %v1282
    %v1779 = vunpack.c.h.b16 %v1282
    %v1780 = vunpack.c.l.b16 %v1283
    %v1781 = vunpack.c.h.b16 %v1283
    %v1782 = vunpack.c.l.b16 %v1284
    %v1783 = vunpack.c.h.b16 %v1284
    %v1784 = vunpack.c.l.b16 %v1285
    %v1785 = vunpack.c.h.b16 %v1285
    %v1786 = vunpack.c.l.b16 %v1286
    %v1787 = vunpack.c.h.b16 %v1286
    %v1788 = vunpack.c.l.b16 %v1287
    %v1789 = vunpack.c.h.b16 %v1287
    %v1790 = vunpack.c.l.b16 %v1288
    %v1791 = vunpack.c.h.b16 %v1288
    %v1792 = vunpack.c.l.b16 %v1289
    %v1793 = vunpack.c.h.b16 %v1289
    %v1794 = vunpack.c.l.b16 %v1290
    %v1795 = vunpack.c.h.b16 %v1290
    %v1796 = vunpack.c.l.b16 %v1291
    %v1797 = vunpack.c.h.b16 %v1291
    %v1798 = vunpack.c.l.b16 %v1292
    %v1799 = vunpack.c.h.b16 %v1292
    %v1800 = vunpack.c.l.b16 %v1293
    %v1801 = vunpack.c.h.b16 %v1293
    %v1802 = vunpack.c.l.b16 %v1294
    %v1803 = vunpack.c.h.b16 %v1294
    %v1804 = vunpack.c.l.b16 %v1295
    %v1805 = vunpack.c.h.b16 %v1295
    %v1806 = vunpack.c.l.b16 %v1296
    %v1807 = vunpack.c.h.b16 %v1296
    %v1808 = vunpack.c.l.b16 %v1297
    %v1809 = vunpack.c.h.b16 %v1297
    %v1810 = vunpack.c.l.b16 %v1298
    %v1811 = vunpack.c.h.b16 %v1298
    %v1812 = vunpack.c.l.b16 %v1299
    %v1813 = vunpack.c.h.b16 %v1299
    %v1814 = vunpack.c.l.b16 %v1300
    %v1815 = vunpack.c.h.b16 %v1300
    %v1816 = vunpack.c.l.b16 %v1301
    %v1817 = vunpack.c.h.b16 %v1301
    %v1818 = vunpack.c.l.b16 %v1302
    %v1819 = vunpack.c.h.b16 %v1302
    %v1820 = vunpack.c.l.b16 %v1303
    %v1821 = vunpack.c.h.b16 %v1303
    %v1822 = vunpack.c.l.b16 %v1304
    %v1823 = vunpack.c.h.b16 %v1304
    %v1824 = vunpack.c.l.b16 %v1305
    %v1825 = vunpack.c.h.b16 %v1305
    %v1826 = vunpack.c.l.b16 %v1306
    %v1827 = vunpack.c.h.b16 %v1306
    %v1828 = vunpack.c.l.b16 %v1307
    %v1829 = vunpack.c.h.b16 %v1307
    %v1830 = vunpack.c.l.b16 %v1308
    %v1831 = vunpack.c.h.b16 %v1308
    %v1832 = vunpack.c.l.b16 %v1309
    %v1833 = vunpack.c.h.b16 %v1309
    %v1834 = vunpack.c.l.b16 %v1310
    %v1835 = vunpack.c.h.b16 %v1310
    %v1836 = vunpack.c.l.b16 %v1311
    %v1837 = vunpack.c.h.b16 %v1311
    %v1838 = vunpack.c.l.b16 %v1312
    %v1839 = vunpack.c.h.b16 %v1312
    %v1840 = vunpack.c.l.b16 %v1313
    %v1841 = vunpack.c.h.b16 %v1313
    %v1842 = vunpack.c.l.b16 %v1314
    %v1843 = vunpack.c.h.b16 %v1314
    %v1844 = vunpack.c.l.b16 %v1315
    %v1845 = vunpack.c.h.b16 %v1315
    %v1846 = vunpack.c.l.b16 %v1316
    %v1847 = vunpack.c.h.b16 %v1316
    %v1848 = vunpack.c.l.b16 %v1317
    %v1849 = vunpack.c.h.b16 %v1317
    %v1850 = vunpack.c.l.b16 %v1318
    %v1851 = vunpack.c.h.b16 %v1318
    %v1852 = vunpack.c.l.b16 %v1319
    %v1853 = vunpack.c.h.b16 %v1319
    %v1854 = vunpack.c.l.b16 %v1320
    %v1855 = vunpack.c.h.b16 %v1320
    %v1856 = vunpack.c.l.b16 %v1321
    %v1857 = vunpack.c.h.b16 %v1321
    %v1858 = vunpack.c.l.b16 %v1322
    %v1859 = vunpack.c.h.b16 %v1322
    %v1860 = vunpack.c.l.b16 %v1323
    %v1861 = vunpack.c.h.b16 %v1323
    %v1862 = vunpack.c.l.b16 %v1324
    %v1863 = vunpack.c.h.b16 %v1324
    %v1864 = vunpack.c.l.b16 %v1325
    %v1865 = vunpack.c.h.b16 %v1325
    %v1866 = vunpack.c.l.b16 %v1326
    %v1867 = vunpack.c.h.b16 %v1326
    %v1868 = vunpack.c.l.b16 %v1327
    %v1869 = vunpack.c.h.b16 %v1327
    %v1870 = vunpack.c.l.b16 %v1328
    %v1871 = vunpack.c.h.b16 %v1328
    %v1872 = vunpack.c.l.b16 %v1329
    %v1873 = vunpack.c.h.b16 %v1329
    %v1874 = vunpack.c.l.b16 %v1330
    %v1875 = vunpack.c.h.b16 %v1330
    %v1876 = vunpack.c.l.b16 %v1331
    %v1877 = vunpack.c.h.b16 %v1331
    %v1878 = vunpack.c.l.b16 %v1332
    %v1879 = vunpack.c.h.b16 %v1332
    %v1880 = vunpack.c.l.b16 %v1333
    %v1881 = vunpack.c.h.b16 %v1333
    %v1882 = vunpack.c.l.b16 %v1334
    %v1883 = vunpack.c.h.b16 %v1334
    %v1884 = vunpack.c.l.b16 %v1335
    %v1885 = vunpack.c.h.b16 %v1335
    %v1886 = vunpack.c.l.b16 %v1336
    %v1887 = vunpack.c.h.b16 %v1336
    %v1888 = vunpack.c.l.b16 %v1337
    %v1889 = vunpack.c.h.b16 %v1337
    %v1890 = vunpack.c.l.b16 %v1338
    %v1891 = vunpack.c.h.b16 %v1338
    %v1892 = vunpack.c.l.b16 %v1339
    %v1893 = vunpack.c.h.b16 %v1339
    %v1894 = vunpack.c.l.b16 %v1340
    %v1895 = vunpack.c.h.b16 %v1340
    %v1896 = vunpack.c.l.b16 %v1341
    %v1897 = vunpack.c.h.b16 %v1341
    %v1898 = vunpack.c.l.b16 %v1342
    %v1899 = vunpack.c.h.b16 %v1342
    %v1900 = vunpack.c.l.b16 %v1343
    %v1901 = vunpack.c.h.b16 %v1343
    %v1902 = vpack.c.b16 %v1654, %v1646
    %v1903 = vpack.c.b16 %v1655, %v1647
    %v1904 = vpack.c.b16 %v1656, %v1648
    %v1905 = vpack.c.b16 %v1657, %v1649
    %v1906 = vpack.c.b16 %v1658, %v1650
    %v1907 = vpack.c.b16 %v1659, %v1651
    %v1908 = vpack.c.b16 %v1660, %v1652
    %v1909 = vpack.c.b16 %v1661, %v1653
    %v1910 = vpack.c.b16 %v1670, %v1662
    %v1911 = vpack.c.b16 %v1671, %v1663
    %v1912 = vpack.c.b16 %v1672, %v1664
    %v1913 = vpack.c.b16 %v1673, %v1665
    %v1914 = vpack.c.b16 %v1674, %v1666
    %v1915 = vpack.c.b16 %v1675, %v1667
    %v1916 = vpack.c.b16 %v1676, %v1668
    %v1917 = vpack.c.b16 %v1677, %v1669
    %v1918 = vpack.c.b16 %v1686, %v1678
    %v1919 = vpack.c.b16 %v1687, %v1679
    %v1920 = vpack.c.b16 %v1688, %v1680
    %v1921 = vpack.c.b16 %v1689, %v1681
    %v1922 = vpack.c.b16 %v1690, %v1682
    %v1923 = vpack.c.b16 %v1691, %v1683
    %v1924 = vpack.c.b16 %v1692, %v1684
    %v1925 = vpack.c.b16 %v1693, %v1685
    %v1926 = vpack.c.b16 %v1702, %v1694
    %v1927 = vpack.c.b16 %v1703, %v1695
    %v1928 = vpack.c.b16 %v1704, %v1696
    %v1929 = vpack.c.b16 %v1705, %v1697
    %v1930 = vpack.c.b16 %v1706, %v1698
    %v1931 = vpack.c.b16 %v1707, %v1699
    %v1932 = vpack.c.b16 %v1708, %v1700
    %v1933 = vpack.c.b16 %v1709, %v1701
    %v1934 = vpack.c.b16 %v1718, %v1710
    %v1935 = vpack.c.b16 %v1719, %v1711
    %v1936 = vpack.c.b16 %v1720, %v1712
    %v1937 = vpack.c.b16 %v1721, %v1713
    %v1938 = vpack.c.b16 %v1722, %v1714
    %v1939 = vpack.c.b16 %v1723, %v1715
    %v1940 = vpack.c.b16 %v1724, %v1716
    %v1941 = vpack.c.b16 %v1725, %v1717
    %v1942 = vpack.c.b16 %v1734, %v1726
    %v1943 = vpack.c.b16 %v1735, %v1727
    %v1944 = vpack.c.b16 %v1736, %v1728
    %v1945 = vpack.c.b16 %v1737, %v1729
    %v1946 = vpack.c.b16 %v1738, %v1730
    %v1947 = vpack.c.b16 %v1739, %v1731
    %v1948 = vpack.c.b16 %v1740, %v1732
    %v1949 = vpack.c.b16 %v1741, %v1733
    %v1950 = vpack.c.b16 %v1750, %v1742
    %v1951 = vpack.c.b16 %v1751, %v1743
    %v1952 = vpack.c.b16 %v1752, %v1744
    %v1953 = vpack.c.b16 %v1753, %v1745
    %v1954 = vpack.c.b16 %v1754, %v1746
    %v1955 = vpack.c.b16 %v1755, %v1747
    %v1956 = vpack.c.b16 %v1756, %v1748
    %v1957 = vpack.c.b16 %v1757, %v1749
    %v1958 = vpack.c.b16 %v1766, %v1758
    %v1959 = vpack.c.b16 %v1767, %v1759
    %v1960 = vpack.c.b16 %v1768, %v1760
    %v1961 = vpack.c.b16 %v1769, %v1761
    %v1962 = vpack.c.b16 %v1770, %v1762
    %v1963 = vpack.c.b16 %v1771, %v1763
    %v1964 = vpack.c.b16 %v1772, %v1764
    %v1965 = vpack.c.b16 %v1773, %v1765
    %v1966 = vpack.c.b16 %v1782, %v1774
    %v1967 = vpack.c.b16 %v1783, %v1775
    %v1968 = vpack.c.b16 %v1784, %v1776
    %v1969 = vpack.c.b16 %v1785, %v1777
    %v1970 = vpack.c.b16 %v1786, %v1778
    %v1971 = vpack.c.b16 %v1787, %v1779
    %v1972 = vpack.c.b16 %v1788, %v1780
    %v1973 = vpack.c.b16 %v1789, %v1781
    %v1974 = vpack.c.b16 %v1798, %v1790
    %v1975 = vpack.c.b16 %v1799, %v1791
    %v1976 = vpack.c.b16 %v1800, %v1792
    %v1977 = vpack.c.b16 %v1801, %v1793
    %v1978 = vpack.c.b16 %v1802, %v1794
    %v1979 = vpack.c.b16 %v1803, %v1795
    %v1980 = vpack.c.b16 %v1804, %v1796
    %v1981 = vpack.c.b16 %v1805, %v1797
    %v1982 = vpack.c.b16 %v1814, %v1806
    %v1983 = vpack.c.b16 %v1815, %v1807
    %v1984 = vpack.c.b16 %v1816, %v1808
    %v1985 = vpack.c.b16 %v1817, %v1809
    %v1986 = vpack.c.b16 %v1818, %v1810
    %v1987 = vpack.c.b16 %v1819, %v1811
    %v1988 = vpack.c.b16 %v1820, %v1812
    %v1989 = vpack.c.b16 %v1821, %v1813
    %v1990 = vpack.c.b16 %v1830, %v1822
    %v1991 = vpack.c.b16 %v1831, %v1823
    %v1992 = vpack.c.b16 %v1832, %v1824
    %v1993 = vpack.c.b16 %v1833, %v1825
    %v1994 = vpack.c.b16 %v1834, %v1826
    %v1995 = vpack.c.b16 %v1835, %v1827
    %v1996 = vpack.c.b16 %v1836, %v1828
    %v1997 = vpack.c.b16 %v1837, %v1829
    %v1998 = vpack.c.b16 %v1846, %v1838
    %v1999 = vpack.c.b16 %v1847, %v1839
    %v2000 = vpack.c.b16 %v1848, %v1840
    %v2001 = vpack.c.b16 %v1849, %v1841
    %v2002 = vpack.c.b16 %v1850, %v1842
    %v2003 = vpack.c.b16 %v1851, %v1843
    %v2004 = vpack.c.b16 %v1852, %v1844
    %v2005 = vpack.c.b16 %v1853, %v1845
    %v2006 = vpack.c.b16 %v1862, %v1854
    %v2007 = vpack.c.b16 %v1863, %v1855
    %v2008 = vpack.c.b16 %v1864, %v1856
    %v2009 = vpack.c.b16 %v1865, %v1857
    %v2010 = vpack.c.b16 %v1866, %v1858
    %v2011 = vpack.c.b16 %v1867, %v1859
    %v2012 = vpack.c.b16 %v1868, %v1860
    %v2013 = vpack.c.b16 %v1869, %v1861
    %v2014 = vpack.c.b16 %v1878, %v1870
    %v2015 = vpack.c.b16 %v1879, %v1871
    %v2016 = vpack.c.b16 %v1880, %v1872
    %v2017 = vpack.c.b16 %v1881, %v1873
    %v2018 = vpack.c.b16 %v1882, %v1874
    %v2019 = vpack.c.b16 %v1883, %v1875
    %v2020 = vpack.c.b16 %v1884, %v1876
    %v2021 = vpack.c.b16 %v1885, %v1877
    %v2022 = vpack.c.b16 %v1894, %v1886
    %v2023 = vpack.c.b16 %v1895, %v1887
    %v2024 = vpack.c.b16 %v1896, %v1888
    %v2025 = vpack.c.b16 %v1897, %v1889
    %v2026 = vpack.c.b16 %v1898, %v1890
    %v2027 = vpack.c.b16 %v1899, %v1891
    %v2028 = vpack.c.b16 %v1900, %v1892
    %v2029 = vpack.c.b16 %v1901, %v1893
    %2158 = vmatprep.subr.bf16.mxu0 %v1903
    %2159 = vmatpush1.bf16.msra.mxu0 %v1902
    %2160 = vmatprep.subr.bf16.mxu0 %v1911
    %2161 = vmatpush1.bf16.msra.mxu0 %v1910
    %2162 = vmatprep.subr.bf16.mxu0 %v1919
    %2163 = vmatpush1.bf16.msra.mxu0 %v1918
    %2164 = vmatprep.subr.bf16.mxu0 %v1927
    %2165 = vmatpush1.bf16.msra.mxu0 %v1926
    %2166 = vmatprep.subr.bf16.mxu0 %v1935
    %2167 = vmatpush1.bf16.msra.mxu0 %v1934
    %2168 = vmatprep.subr.bf16.mxu0 %v1943
    %2169 = vmatpush1.bf16.msra.mxu0 %v1942
    %2170 = vmatprep.subr.bf16.mxu0 %v1951
    %2171 = vmatpush1.bf16.msra.mxu0 %v1950
    %2172 = vmatprep.subr.bf16.mxu0 %v1959
    %2173 = vmatpush1.bf16.msra.mxu0 %v1958
    %2174 = vmatprep.subr.bf16.mxu0 %v1967
    %2175 = vmatpush1.bf16.msra.mxu0 %v1966
    %2176 = vmatprep.subr.bf16.mxu0 %v1975
    %2177 = vmatpush1.bf16.msra.mxu0 %v1974
    %2178 = vmatprep.subr.bf16.mxu0 %v1983
    %2179 = vmatpush1.bf16.msra.mxu0 %v1982
    %2180 = vmatprep.subr.bf16.mxu0 %v1991
    %2181 = vmatpush1.bf16.msra.mxu0 %v1990
    %2182 = vmatprep.subr.bf16.mxu0 %v1999
    %2183 = vmatpush1.bf16.msra.mxu0 %v1998
    %2184 = vmatprep.subr.bf16.mxu0 %v2007
    %2185 = vmatpush1.bf16.msra.mxu0 %v2006
    %2186 = vmatprep.subr.bf16.mxu0 %v2015
    %2187 = vmatpush1.bf16.msra.mxu0 %v2014
    %2188 = vmatprep.subr.bf16.mxu0 %v2023
    %2189 = vmatpush1.bf16.msra.mxu0 %v2022
    %2190 = vmatprep.mubr.bf16.mxu0 %v1476
    %2191 = vmatmul.mubr.bf16.gmra.mrb[0].mxu0 %v1475
    %v2192 = vpop.f32.mrb[0].mxu0
    %v2193 = vadd.f32 %v1481, %v2192
    %v2194 = vpop.f32.mrb[0].mxu0
    %v2195 = vadd.f32 %v1485, %v2194
    %v2196 = vpop.f32.mrb[0].mxu0
    %v2197 = vpop.f32.mrb[0].mxu0
    %2198 = vdwg.mxu0
    %2199 = vmatprep.subr.bf16.mxu0 %v1905
    %2200 = vmatpush1.bf16.msra.mxu0 %v1904
    %2201 = vmatprep.subr.bf16.mxu0 %v1913
    %2202 = vmatpush1.bf16.msra.mxu0 %v1912
    %2203 = vmatprep.subr.bf16.mxu0 %v1921
    %2204 = vmatpush1.bf16.msra.mxu0 %v1920
    %2205 = vmatprep.subr.bf16.mxu0 %v1929
    %2206 = vmatpush1.bf16.msra.mxu0 %v1928
    %2207 = vmatprep.subr.bf16.mxu0 %v1937
    %2208 = vmatpush1.bf16.msra.mxu0 %v1936
    %2209 = vmatprep.subr.bf16.mxu0 %v1945
    %2210 = vmatpush1.bf16.msra.mxu0 %v1944
    %2211 = vmatprep.subr.bf16.mxu0 %v1953
    %2212 = vmatpush1.bf16.msra.mxu0 %v1952
    %2213 = vmatprep.subr.bf16.mxu0 %v1961
    %2214 = vmatpush1.bf16.msra.mxu0 %v1960
    %2215 = vmatprep.subr.bf16.mxu0 %v1969
    %2216 = vmatpush1.bf16.msra.mxu0 %v1968
    %2217 = vmatprep.subr.bf16.mxu0 %v1977
    %2218 = vmatpush1.bf16.msra.mxu0 %v1976
    %2219 = vmatprep.subr.bf16.mxu0 %v1985
    %2220 = vmatpush1.bf16.msra.mxu0 %v1984
    %2221 = vmatprep.subr.bf16.mxu0 %v1993
    %2222 = vmatpush1.bf16.msra.mxu0 %v1992
    %2223 = vmatprep.subr.bf16.mxu0 %v2001
    %2224 = vmatpush1.bf16.msra.mxu0 %v2000
    %2225 = vmatprep.subr.bf16.mxu0 %v2009
    %2226 = vmatpush1.bf16.msra.mxu0 %v2008
    %2227 = vmatprep.subr.bf16.mxu0 %v2017
    %2228 = vmatpush1.bf16.msra.mxu0 %v2016
    %2229 = vmatprep.subr.bf16.mxu0 %v2025
    %2230 = vmatpush1.bf16.msra.mxu0 %v2024
    %2231 = vmatprep.mubr.bf16.mxu0 %v1476
    %2232 = vmatmul.mubr.bf16.gmra.mrb[0].mxu0 %v1475
    %v2233 = vpop.f32.mrb[0].mxu0
    %v2234 = vadd.f32 %v1489, %v2233
    %v2235 = vpop.f32.mrb[0].mxu0
    %v2236 = vadd.f32 %v1493, %v2235
    %v2237 = vpop.f32.mrb[0].mxu0
    %v2238 = vpop.f32.mrb[0].mxu0
    %2239 = vdwg.mxu0
    %2240 = vmatprep.subr.bf16.mxu0 %v1907
    %2241 = vmatpush1.bf16.msra.mxu0 %v1906
    %2242 = vmatprep.subr.bf16.mxu0 %v1915
    %2243 = vmatpush1.bf16.msra.mxu0 %v1914
    %2244 = vmatprep.subr.bf16.mxu0 %v1923
    %2245 = vmatpush1.bf16.msra.mxu0 %v1922
    %2246 = vmatprep.subr.bf16.mxu0 %v1931
    %2247 = vmatpush1.bf16.msra.mxu0 %v1930
    %2248 = vmatprep.subr.bf16.mxu0 %v1939
    %2249 = vmatpush1.bf16.msra.mxu0 %v1938
    %2250 = vmatprep.subr.bf16.mxu0 %v1947
    %2251 = vmatpush1.bf16.msra.mxu0 %v1946
    %2252 = vmatprep.subr.bf16.mxu0 %v1955
    %2253 = vmatpush1.bf16.msra.mxu0 %v1954
    %2254 = vmatprep.subr.bf16.mxu0 %v1963
    %2255 = vmatpush1.bf16.msra.mxu0 %v1962
    %2256 = vmatprep.subr.bf16.mxu0 %v1971
    %2257 = vmatpush1.bf16.msra.mxu0 %v1970
    %2258 = vmatprep.subr.bf16.mxu0 %v1979
    %2259 = vmatpush1.bf16.msra.mxu0 %v1978
    %2260 = vmatprep.subr.bf16.mxu0 %v1987
    %2261 = vmatpush1.bf16.msra.mxu0 %v1986
    %2262 = vmatprep.subr.bf16.mxu0 %v1995
    %2263 = vmatpush1.bf16.msra.mxu0 %v1994
    %2264 = vmatprep.subr.bf16.mxu0 %v2003
    %2265 = vmatpush1.bf16.msra.mxu0 %v2002
    %2266 = vmatprep.subr.bf16.mxu0 %v2011
    %2267 = vmatpush1.bf16.msra.mxu0 %v2010
    %2268 = vmatprep.subr.bf16.mxu0 %v2019
    %2269 = vmatpush1.bf16.msra.mxu0 %v2018
    %2270 = vmatprep.subr.bf16.mxu0 %v2027
    %2271 = vmatpush1.bf16.msra.mxu0 %v2026
    %2272 = vmatprep.mubr.bf16.mxu0 %v1476
    %2273 = vmatmul.mubr.bf16.gmra.mrb[0].mxu0 %v1475
    %v2274 = vpop.f32.mrb[0].mxu0
    %v2275 = vadd.f32 %v1497, %v2274
    %v2276 = vpop.f32.mrb[0].mxu0
    %v2277 = vadd.f32 %v1501, %v2276
    %v2278 = vpop.f32.mrb[0].mxu0
    %v2279 = vpop.f32.mrb[0].mxu0
    %2280 = vdwg.mxu0
    %2281 = vmatprep.subr.bf16.mxu0 %v1909
    %2282 = vmatpush1.bf16.msra.mxu0 %v1908
    %2283 = vmatprep.subr.bf16.mxu0 %v1917
    %2284 = vmatpush1.bf16.msra.mxu0 %v1916
    %2285 = vmatprep.subr.bf16.mxu0 %v1925
    %2286 = vmatpush1.bf16.msra.mxu0 %v1924
    %2287 = vmatprep.subr.bf16.mxu0 %v1933
    %2288 = vmatpush1.bf16.msra.mxu0 %v1932
    %2289 = vmatprep.subr.bf16.mxu0 %v1941
    %2290 = vmatpush1.bf16.msra.mxu0 %v1940
    %2291 = vmatprep.subr.bf16.mxu0 %v1949
    %2292 = vmatpush1.bf16.msra.mxu0 %v1948
    %2293 = vmatprep.subr.bf16.mxu0 %v1957
    %2294 = vmatpush1.bf16.msra.mxu0 %v1956
    %2295 = vmatprep.subr.bf16.mxu0 %v1965
    %2296 = vmatpush1.bf16.msra.mxu0 %v1964
    %2297 = vmatprep.subr.bf16.mxu0 %v1973
    %2298 = vmatpush1.bf16.msra.mxu0 %v1972
    %2299 = vmatprep.subr.bf16.mxu0 %v1981
    %2300 = vmatpush1.bf16.msra.mxu0 %v1980
    %2301 = vmatprep.subr.bf16.mxu0 %v1989
    %2302 = vmatpush1.bf16.msra.mxu0 %v1988
    %2303 = vmatprep.subr.bf16.mxu0 %v1997
    %2304 = vmatpush1.bf16.msra.mxu0 %v1996
    %2305 = vmatprep.subr.bf16.mxu0 %v2005
    %2306 = vmatpush1.bf16.msra.mxu0 %v2004
    %2307 = vmatprep.subr.bf16.mxu0 %v2013
    %2308 = vmatpush1.bf16.msra.mxu0 %v2012
    %2309 = vmatprep.subr.bf16.mxu0 %v2021
    %2310 = vmatpush1.bf16.msra.mxu0 %v2020
    %2311 = vmatprep.subr.bf16.mxu0 %v2029
    %2312 = vmatpush1.bf16.msra.mxu0 %v2028
    %2313 = vmatprep.mubr.bf16.mxu0 %v1476
    %2314 = vmatmul.mubr.bf16.gmra.mrb[0].mxu0 %v1475
    %v2315 = vpop.f32.mrb[0].mxu0
    %v2316 = vadd.f32 %v1505, %v2315
    %v2317 = vpop.f32.mrb[0].mxu0
    %v2318 = vadd.f32 %v1509, %v2317
    %v2319 = vpop.f32.mrb[0].mxu0
    %v2320 = vpop.f32.mrb[0].mxu0
    %2321 = vdwg.mxu0
    %v2322 = vmax.f32 %v2193, 0.0
    %v2323 = vmax.f32 %v2195, 0.0
    %v2324 = vmax.f32 %v2234, 0.0
    %v2325 = vmax.f32 %v2236, 0.0
    %v2326 = vmax.f32 %v2275, 0.0
    %v2327 = vmax.f32 %v2277, 0.0
    %v2328 = vmax.f32 %v2316, 0.0
    %v2329 = vmax.f32 %v2318, 0.0
    %v2330 = vpack.c.bf16 %v2322, %v2322
    %v2331 = vpack.c.bf16 %v2323, %v2323
    %v2332 = vpack.c.bf16 %v2324, %v2324
    %v2333 = vpack.c.bf16 %v2325, %v2325
    %v2334 = vpack.c.bf16 %v2326, %v2326
    %v2335 = vpack.c.bf16 %v2327, %v2327
    %v2336 = vpack.c.bf16 %v2328, %v2328
    %v2337 = vpack.c.bf16 %v2329, %v2329
    %v2339 = vlaneseq
    %v2340 = vshrl.u32 %v2339, 7
    %v2341 = vsub.s32 0, %v2340
    %v2342 = vrot.slane %v1474, %v2341
    %v2343 = vlaneseq
    %v2344 = vshrl.u32 %v2343, 7
    %v2345 = vsub.s32 1, %v2344
    %v2346 = vrot.slane %v1474, %v2345
    %v2477 = vunpack.c.l.b16 %v1344
    %v2478 = vunpack.c.h.b16 %v1344
    %v2479 = vunpack.c.l.b16 %v1345
    %v2480 = vunpack.c.h.b16 %v1345
    %v2481 = vunpack.c.l.b16 %v1346
    %v2482 = vunpack.c.h.b16 %v1346
    %v2483 = vunpack.c.l.b16 %v1347
    %v2484 = vunpack.c.h.b16 %v1347
    %v2485 = vunpack.c.l.b16 %v1348
    %v2486 = vunpack.c.h.b16 %v1348
    %v2487 = vunpack.c.l.b16 %v1349
    %v2488 = vunpack.c.h.b16 %v1349
    %v2489 = vunpack.c.l.b16 %v1350
    %v2490 = vunpack.c.h.b16 %v1350
    %v2491 = vunpack.c.l.b16 %v1351
    %v2492 = vunpack.c.h.b16 %v1351
    %v2493 = vunpack.c.l.b16 %v1352
    %v2494 = vunpack.c.h.b16 %v1352
    %v2495 = vunpack.c.l.b16 %v1353
    %v2496 = vunpack.c.h.b16 %v1353
    %v2497 = vunpack.c.l.b16 %v1354
    %v2498 = vunpack.c.h.b16 %v1354
    %v2499 = vunpack.c.l.b16 %v1355
    %v2500 = vunpack.c.h.b16 %v1355
    %v2501 = vunpack.c.l.b16 %v1356
    %v2502 = vunpack.c.h.b16 %v1356
    %v2503 = vunpack.c.l.b16 %v1357
    %v2504 = vunpack.c.h.b16 %v1357
    %v2505 = vunpack.c.l.b16 %v1358
    %v2506 = vunpack.c.h.b16 %v1358
    %v2507 = vunpack.c.l.b16 %v1359
    %v2508 = vunpack.c.h.b16 %v1359
    %v2509 = vunpack.c.l.b16 %v1360
    %v2510 = vunpack.c.h.b16 %v1360
    %v2511 = vunpack.c.l.b16 %v1361
    %v2512 = vunpack.c.h.b16 %v1361
    %v2513 = vunpack.c.l.b16 %v1362
    %v2514 = vunpack.c.h.b16 %v1362
    %v2515 = vunpack.c.l.b16 %v1363
    %v2516 = vunpack.c.h.b16 %v1363
    %v2517 = vunpack.c.l.b16 %v1364
    %v2518 = vunpack.c.h.b16 %v1364
    %v2519 = vunpack.c.l.b16 %v1365
    %v2520 = vunpack.c.h.b16 %v1365
    %v2521 = vunpack.c.l.b16 %v1366
    %v2522 = vunpack.c.h.b16 %v1366
    %v2523 = vunpack.c.l.b16 %v1367
    %v2524 = vunpack.c.h.b16 %v1367
    %v2525 = vunpack.c.l.b16 %v1368
    %v2526 = vunpack.c.h.b16 %v1368
    %v2527 = vunpack.c.l.b16 %v1369
    %v2528 = vunpack.c.h.b16 %v1369
    %v2529 = vunpack.c.l.b16 %v1370
    %v2530 = vunpack.c.h.b16 %v1370
    %v2531 = vunpack.c.l.b16 %v1371
    %v2532 = vunpack.c.h.b16 %v1371
    %v2533 = vunpack.c.l.b16 %v1372
    %v2534 = vunpack.c.h.b16 %v1372
    %v2535 = vunpack.c.l.b16 %v1373
    %v2536 = vunpack.c.h.b16 %v1373
    %v2537 = vunpack.c.l.b16 %v1374
    %v2538 = vunpack.c.h.b16 %v1374
    %v2539 = vunpack.c.l.b16 %v1375
    %v2540 = vunpack.c.h.b16 %v1375
    %v2541 = vunpack.c.l.b16 %v1376
    %v2542 = vunpack.c.h.b16 %v1376
    %v2543 = vunpack.c.l.b16 %v1377
    %v2544 = vunpack.c.h.b16 %v1377
    %v2545 = vunpack.c.l.b16 %v1378
    %v2546 = vunpack.c.h.b16 %v1378
    %v2547 = vunpack.c.l.b16 %v1379
    %v2548 = vunpack.c.h.b16 %v1379
    %v2549 = vunpack.c.l.b16 %v1380
    %v2550 = vunpack.c.h.b16 %v1380
    %v2551 = vunpack.c.l.b16 %v1381
    %v2552 = vunpack.c.h.b16 %v1381
    %v2553 = vunpack.c.l.b16 %v1382
    %v2554 = vunpack.c.h.b16 %v1382
    %v2555 = vunpack.c.l.b16 %v1383
    %v2556 = vunpack.c.h.b16 %v1383
    %v2557 = vunpack.c.l.b16 %v1384
    %v2558 = vunpack.c.h.b16 %v1384
    %v2559 = vunpack.c.l.b16 %v1385
    %v2560 = vunpack.c.h.b16 %v1385
    %v2561 = vunpack.c.l.b16 %v1386
    %v2562 = vunpack.c.h.b16 %v1386
    %v2563 = vunpack.c.l.b16 %v1387
    %v2564 = vunpack.c.h.b16 %v1387
    %v2565 = vunpack.c.l.b16 %v1388
    %v2566 = vunpack.c.h.b16 %v1388
    %v2567 = vunpack.c.l.b16 %v1389
    %v2568 = vunpack.c.h.b16 %v1389
    %v2569 = vunpack.c.l.b16 %v1390
    %v2570 = vunpack.c.h.b16 %v1390
    %v2571 = vunpack.c.l.b16 %v1391
    %v2572 = vunpack.c.h.b16 %v1391
    %v2573 = vunpack.c.l.b16 %v1392
    %v2574 = vunpack.c.h.b16 %v1392
    %v2575 = vunpack.c.l.b16 %v1393
    %v2576 = vunpack.c.h.b16 %v1393
    %v2577 = vunpack.c.l.b16 %v1394
    %v2578 = vunpack.c.h.b16 %v1394
    %v2579 = vunpack.c.l.b16 %v1395
    %v2580 = vunpack.c.h.b16 %v1395
    %v2581 = vunpack.c.l.b16 %v1396
    %v2582 = vunpack.c.h.b16 %v1396
    %v2583 = vunpack.c.l.b16 %v1397
    %v2584 = vunpack.c.h.b16 %v1397
    %v2585 = vunpack.c.l.b16 %v1398
    %v2586 = vunpack.c.h.b16 %v1398
    %v2587 = vunpack.c.l.b16 %v1399
    %v2588 = vunpack.c.h.b16 %v1399
    %v2589 = vunpack.c.l.b16 %v1400
    %v2590 = vunpack.c.h.b16 %v1400
    %v2591 = vunpack.c.l.b16 %v1401
    %v2592 = vunpack.c.h.b16 %v1401
    %v2593 = vunpack.c.l.b16 %v1402
    %v2594 = vunpack.c.h.b16 %v1402
    %v2595 = vunpack.c.l.b16 %v1403
    %v2596 = vunpack.c.h.b16 %v1403
    %v2597 = vunpack.c.l.b16 %v1404
    %v2598 = vunpack.c.h.b16 %v1404
    %v2599 = vunpack.c.l.b16 %v1405
    %v2600 = vunpack.c.h.b16 %v1405
    %v2601 = vunpack.c.l.b16 %v1406
    %v2602 = vunpack.c.h.b16 %v1406
    %v2603 = vunpack.c.l.b16 %v1407
    %v2604 = vunpack.c.h.b16 %v1407
    %v2605 = vunpack.c.l.b16 %v1408
    %v2606 = vunpack.c.h.b16 %v1408
    %v2607 = vunpack.c.l.b16 %v1409
    %v2608 = vunpack.c.h.b16 %v1409
    %v2609 = vunpack.c.l.b16 %v1410
    %v2610 = vunpack.c.h.b16 %v1410
    %v2611 = vunpack.c.l.b16 %v1411
    %v2612 = vunpack.c.h.b16 %v1411
    %v2613 = vunpack.c.l.b16 %v1412
    %v2614 = vunpack.c.h.b16 %v1412
    %v2615 = vunpack.c.l.b16 %v1413
    %v2616 = vunpack.c.h.b16 %v1413
    %v2617 = vunpack.c.l.b16 %v1414
    %v2618 = vunpack.c.h.b16 %v1414
    %v2619 = vunpack.c.l.b16 %v1415
    %v2620 = vunpack.c.h.b16 %v1415
    %v2621 = vunpack.c.l.b16 %v1416
    %v2622 = vunpack.c.h.b16 %v1416
    %v2623 = vunpack.c.l.b16 %v1417
    %v2624 = vunpack.c.h.b16 %v1417
    %v2625 = vunpack.c.l.b16 %v1418
    %v2626 = vunpack.c.h.b16 %v1418
    %v2627 = vunpack.c.l.b16 %v1419
    %v2628 = vunpack.c.h.b16 %v1419
    %v2629 = vunpack.c.l.b16 %v1420
    %v2630 = vunpack.c.h.b16 %v1420
    %v2631 = vunpack.c.l.b16 %v1421
    %v2632 = vunpack.c.h.b16 %v1421
    %v2633 = vunpack.c.l.b16 %v1422
    %v2634 = vunpack.c.h.b16 %v1422
    %v2635 = vunpack.c.l.b16 %v1423
    %v2636 = vunpack.c.h.b16 %v1423
    %v2637 = vunpack.c.l.b16 %v1424
    %v2638 = vunpack.c.h.b16 %v1424
    %v2639 = vunpack.c.l.b16 %v1425
    %v2640 = vunpack.c.h.b16 %v1425
    %v2641 = vunpack.c.l.b16 %v1426
    %v2642 = vunpack.c.h.b16 %v1426
    %v2643 = vunpack.c.l.b16 %v1427
    %v2644 = vunpack.c.h.b16 %v1427
    %v2645 = vunpack.c.l.b16 %v1428
    %v2646 = vunpack.c.h.b16 %v1428
    %v2647 = vunpack.c.l.b16 %v1429
    %v2648 = vunpack.c.h.b16 %v1429
    %v2649 = vunpack.c.l.b16 %v1430
    %v2650 = vunpack.c.h.b16 %v1430
    %v2651 = vunpack.c.l.b16 %v1431
    %v2652 = vunpack.c.h.b16 %v1431
    %v2653 = vunpack.c.l.b16 %v1432
    %v2654 = vunpack.c.h.b16 %v1432
    %v2655 = vunpack.c.l.b16 %v1433
    %v2656 = vunpack.c.h.b16 %v1433
    %v2657 = vunpack.c.l.b16 %v1434
    %v2658 = vunpack.c.h.b16 %v1434
    %v2659 = vunpack.c.l.b16 %v1435
    %v2660 = vunpack.c.h.b16 %v1435
    %v2661 = vunpack.c.l.b16 %v1436
    %v2662 = vunpack.c.h.b16 %v1436
    %v2663 = vunpack.c.l.b16 %v1437
    %v2664 = vunpack.c.h.b16 %v1437
    %v2665 = vunpack.c.l.b16 %v1438
    %v2666 = vunpack.c.h.b16 %v1438
    %v2667 = vunpack.c.l.b16 %v1439
    %v2668 = vunpack.c.h.b16 %v1439
    %v2669 = vunpack.c.l.b16 %v1440
    %v2670 = vunpack.c.h.b16 %v1440
    %v2671 = vunpack.c.l.b16 %v1441
    %v2672 = vunpack.c.h.b16 %v1441
    %v2673 = vunpack.c.l.b16 %v1442
    %v2674 = vunpack.c.h.b16 %v1442
    %v2675 = vunpack.c.l.b16 %v1443
    %v2676 = vunpack.c.h.b16 %v1443
    %v2677 = vunpack.c.l.b16 %v1444
    %v2678 = vunpack.c.h.b16 %v1444
    %v2679 = vunpack.c.l.b16 %v1445
    %v2680 = vunpack.c.h.b16 %v1445
    %v2681 = vunpack.c.l.b16 %v1446
    %v2682 = vunpack.c.h.b16 %v1446
    %v2683 = vunpack.c.l.b16 %v1447
    %v2684 = vunpack.c.h.b16 %v1447
    %v2685 = vunpack.c.l.b16 %v1448
    %v2686 = vunpack.c.h.b16 %v1448
    %v2687 = vunpack.c.l.b16 %v1449
    %v2688 = vunpack.c.h.b16 %v1449
    %v2689 = vunpack.c.l.b16 %v1450
    %v2690 = vunpack.c.h.b16 %v1450
    %v2691 = vunpack.c.l.b16 %v1451
    %v2692 = vunpack.c.h.b16 %v1451
    %v2693 = vunpack.c.l.b16 %v1452
    %v2694 = vunpack.c.h.b16 %v1452
    %v2695 = vunpack.c.l.b16 %v1453
    %v2696 = vunpack.c.h.b16 %v1453
    %v2697 = vunpack.c.l.b16 %v1454
    %v2698 = vunpack.c.h.b16 %v1454
    %v2699 = vunpack.c.l.b16 %v1455
    %v2700 = vunpack.c.h.b16 %v1455
    %v2701 = vunpack.c.l.b16 %v1456
    %v2702 = vunpack.c.h.b16 %v1456
    %v2703 = vunpack.c.l.b16 %v1457
    %v2704 = vunpack.c.h.b16 %v1457
    %v2705 = vunpack.c.l.b16 %v1458
    %v2706 = vunpack.c.h.b16 %v1458
    %v2707 = vunpack.c.l.b16 %v1459
    %v2708 = vunpack.c.h.b16 %v1459
    %v2709 = vunpack.c.l.b16 %v1460
    %v2710 = vunpack.c.h.b16 %v1460
    %v2711 = vunpack.c.l.b16 %v1461
    %v2712 = vunpack.c.h.b16 %v1461
    %v2713 = vunpack.c.l.b16 %v1462
    %v2714 = vunpack.c.h.b16 %v1462
    %v2715 = vunpack.c.l.b16 %v1463
    %v2716 = vunpack.c.h.b16 %v1463
    %v2717 = vunpack.c.l.b16 %v1464
    %v2718 = vunpack.c.h.b16 %v1464
    %v2719 = vunpack.c.l.b16 %v1465
    %v2720 = vunpack.c.h.b16 %v1465
    %v2721 = vunpack.c.l.b16 %v1466
    %v2722 = vunpack.c.h.b16 %v1466
    %v2723 = vunpack.c.l.b16 %v1467
    %v2724 = vunpack.c.h.b16 %v1467
    %v2725 = vunpack.c.l.b16 %v1468
    %v2726 = vunpack.c.h.b16 %v1468
    %v2727 = vunpack.c.l.b16 %v1469
    %v2728 = vunpack.c.h.b16 %v1469
    %v2729 = vunpack.c.l.b16 %v1470
    %v2730 = vunpack.c.h.b16 %v1470
    %v2731 = vunpack.c.l.b16 %v1471
    %v2732 = vunpack.c.h.b16 %v1471
    %v2733 = vpack.c.b16 %v2479, %v2477
    %v2734 = vpack.c.b16 %v2480, %v2478
    %v2735 = vpack.c.b16 %v2483, %v2481
    %v2736 = vpack.c.b16 %v2484, %v2482
    %v2737 = vpack.c.b16 %v2487, %v2485
    %v2738 = vpack.c.b16 %v2488, %v2486
    %v2739 = vpack.c.b16 %v2491, %v2489
    %v2740 = vpack.c.b16 %v2492, %v2490
    %v2741 = vpack.c.b16 %v2495, %v2493
    %v2742 = vpack.c.b16 %v2496, %v2494
    %v2743 = vpack.c.b16 %v2499, %v2497
    %v2744 = vpack.c.b16 %v2500, %v2498
    %v2745 = vpack.c.b16 %v2503, %v2501
    %v2746 = vpack.c.b16 %v2504, %v2502
    %v2747 = vpack.c.b16 %v2507, %v2505
    %v2748 = vpack.c.b16 %v2508, %v2506
    %v2749 = vpack.c.b16 %v2511, %v2509
    %v2750 = vpack.c.b16 %v2512, %v2510
    %v2751 = vpack.c.b16 %v2515, %v2513
    %v2752 = vpack.c.b16 %v2516, %v2514
    %v2753 = vpack.c.b16 %v2519, %v2517
    %v2754 = vpack.c.b16 %v2520, %v2518
    %v2755 = vpack.c.b16 %v2523, %v2521
    %v2756 = vpack.c.b16 %v2524, %v2522
    %v2757 = vpack.c.b16 %v2527, %v2525
    %v2758 = vpack.c.b16 %v2528, %v2526
    %v2759 = vpack.c.b16 %v2531, %v2529
    %v2760 = vpack.c.b16 %v2532, %v2530
    %v2761 = vpack.c.b16 %v2535, %v2533
    %v2762 = vpack.c.b16 %v2536, %v2534
    %v2763 = vpack.c.b16 %v2539, %v2537
    %v2764 = vpack.c.b16 %v2540, %v2538
    %v2765 = vpack.c.b16 %v2543, %v2541
    %v2766 = vpack.c.b16 %v2544, %v2542
    %v2767 = vpack.c.b16 %v2547, %v2545
    %v2768 = vpack.c.b16 %v2548, %v2546
    %v2769 = vpack.c.b16 %v2551, %v2549
    %v2770 = vpack.c.b16 %v2552, %v2550
    %v2771 = vpack.c.b16 %v2555, %v2553
    %v2772 = vpack.c.b16 %v2556, %v2554
    %v2773 = vpack.c.b16 %v2559, %v2557
    %v2774 = vpack.c.b16 %v2560, %v2558
    %v2775 = vpack.c.b16 %v2563, %v2561
    %v2776 = vpack.c.b16 %v2564, %v2562
    %v2777 = vpack.c.b16 %v2567, %v2565
    %v2778 = vpack.c.b16 %v2568, %v2566
    %v2779 = vpack.c.b16 %v2571, %v2569
    %v2780 = vpack.c.b16 %v2572, %v2570
    %v2781 = vpack.c.b16 %v2575, %v2573
    %v2782 = vpack.c.b16 %v2576, %v2574
    %v2783 = vpack.c.b16 %v2579, %v2577
    %v2784 = vpack.c.b16 %v2580, %v2578
    %v2785 = vpack.c.b16 %v2583, %v2581
    %v2786 = vpack.c.b16 %v2584, %v2582
    %v2787 = vpack.c.b16 %v2587, %v2585
    %v2788 = vpack.c.b16 %v2588, %v2586
    %v2789 = vpack.c.b16 %v2591, %v2589
    %v2790 = vpack.c.b16 %v2592, %v2590
    %v2791 = vpack.c.b16 %v2595, %v2593
    %v2792 = vpack.c.b16 %v2596, %v2594
    %v2793 = vpack.c.b16 %v2599, %v2597
    %v2794 = vpack.c.b16 %v2600, %v2598
    %v2795 = vpack.c.b16 %v2603, %v2601
    %v2796 = vpack.c.b16 %v2604, %v2602
    %v2797 = vpack.c.b16 %v2607, %v2605
    %v2798 = vpack.c.b16 %v2608, %v2606
    %v2799 = vpack.c.b16 %v2611, %v2609
    %v2800 = vpack.c.b16 %v2612, %v2610
    %v2801 = vpack.c.b16 %v2615, %v2613
    %v2802 = vpack.c.b16 %v2616, %v2614
    %v2803 = vpack.c.b16 %v2619, %v2617
    %v2804 = vpack.c.b16 %v2620, %v2618
    %v2805 = vpack.c.b16 %v2623, %v2621
    %v2806 = vpack.c.b16 %v2624, %v2622
    %v2807 = vpack.c.b16 %v2627, %v2625
    %v2808 = vpack.c.b16 %v2628, %v2626
    %v2809 = vpack.c.b16 %v2631, %v2629
    %v2810 = vpack.c.b16 %v2632, %v2630
    %v2811 = vpack.c.b16 %v2635, %v2633
    %v2812 = vpack.c.b16 %v2636, %v2634
    %v2813 = vpack.c.b16 %v2639, %v2637
    %v2814 = vpack.c.b16 %v2640, %v2638
    %v2815 = vpack.c.b16 %v2643, %v2641
    %v2816 = vpack.c.b16 %v2644, %v2642
    %v2817 = vpack.c.b16 %v2647, %v2645
    %v2818 = vpack.c.b16 %v2648, %v2646
    %v2819 = vpack.c.b16 %v2651, %v2649
    %v2820 = vpack.c.b16 %v2652, %v2650
    %v2821 = vpack.c.b16 %v2655, %v2653
    %v2822 = vpack.c.b16 %v2656, %v2654
    %v2823 = vpack.c.b16 %v2659, %v2657
    %v2824 = vpack.c.b16 %v2660, %v2658
    %v2825 = vpack.c.b16 %v2663, %v2661
    %v2826 = vpack.c.b16 %v2664, %v2662
    %v2827 = vpack.c.b16 %v2667, %v2665
    %v2828 = vpack.c.b16 %v2668, %v2666
    %v2829 = vpack.c.b16 %v2671, %v2669
    %v2830 = vpack.c.b16 %v2672, %v2670
    %v2831 = vpack.c.b16 %v2675, %v2673
    %v2832 = vpack.c.b16 %v2676, %v2674
    %v2833 = vpack.c.b16 %v2679, %v2677
    %v2834 = vpack.c.b16 %v2680, %v2678
    %v2835 = vpack.c.b16 %v2683, %v2681
    %v2836 = vpack.c.b16 %v2684, %v2682
    %v2837 = vpack.c.b16 %v2687, %v2685
    %v2838 = vpack.c.b16 %v2688, %v2686
    %v2839 = vpack.c.b16 %v2691, %v2689
    %v2840 = vpack.c.b16 %v2692, %v2690
    %v2841 = vpack.c.b16 %v2695, %v2693
    %v2842 = vpack.c.b16 %v2696, %v2694
    %v2843 = vpack.c.b16 %v2699, %v2697
    %v2844 = vpack.c.b16 %v2700, %v2698
    %v2845 = vpack.c.b16 %v2703, %v2701
    %v2846 = vpack.c.b16 %v2704, %v2702
    %v2847 = vpack.c.b16 %v2707, %v2705
    %v2848 = vpack.c.b16 %v2708, %v2706
    %v2849 = vpack.c.b16 %v2711, %v2709
    %v2850 = vpack.c.b16 %v2712, %v2710
    %v2851 = vpack.c.b16 %v2715, %v2713
    %v2852 = vpack.c.b16 %v2716, %v2714
    %v2853 = vpack.c.b16 %v2719, %v2717
    %v2854 = vpack.c.b16 %v2720, %v2718
    %v2855 = vpack.c.b16 %v2723, %v2721
    %v2856 = vpack.c.b16 %v2724, %v2722
    %v2857 = vpack.c.b16 %v2727, %v2725
    %v2858 = vpack.c.b16 %v2728, %v2726
    %v2859 = vpack.c.b16 %v2731, %v2729
    %v2860 = vpack.c.b16 %v2732, %v2730
    %2989 = vmatprep.subr.bf16.mxu0 %v2734
    %2990 = vmatpush1.bf16.msra.mxu0 %v2733
    %2991 = vmatprep.subr.bf16.mxu0 %v2736
    %2992 = vmatpush1.bf16.msra.mxu0 %v2735
    %2993 = vmatprep.subr.bf16.mxu0 %v2738
    %2994 = vmatpush1.bf16.msra.mxu0 %v2737
    %2995 = vmatprep.subr.bf16.mxu0 %v2740
    %2996 = vmatpush1.bf16.msra.mxu0 %v2739
    %2997 = vmatprep.subr.bf16.mxu0 %v2742
    %2998 = vmatpush1.bf16.msra.mxu0 %v2741
    %2999 = vmatprep.subr.bf16.mxu0 %v2744
    %3000 = vmatpush1.bf16.msra.mxu0 %v2743
    %3001 = vmatprep.subr.bf16.mxu0 %v2746
    %3002 = vmatpush1.bf16.msra.mxu0 %v2745
    %3003 = vmatprep.subr.bf16.mxu0 %v2748
    %3004 = vmatpush1.bf16.msra.mxu0 %v2747
    %3005 = vmatprep.subr.bf16.mxu0 %v2750
    %3006 = vmatpush1.bf16.msra.mxu0 %v2749
    %3007 = vmatprep.subr.bf16.mxu0 %v2752
    %3008 = vmatpush1.bf16.msra.mxu0 %v2751
    %3009 = vmatprep.subr.bf16.mxu0 %v2754
    %3010 = vmatpush1.bf16.msra.mxu0 %v2753
    %3011 = vmatprep.subr.bf16.mxu0 %v2756
    %3012 = vmatpush1.bf16.msra.mxu0 %v2755
    %3013 = vmatprep.subr.bf16.mxu0 %v2758
    %3014 = vmatpush1.bf16.msra.mxu0 %v2757
    %3015 = vmatprep.subr.bf16.mxu0 %v2760
    %3016 = vmatpush1.bf16.msra.mxu0 %v2759
    %3017 = vmatprep.subr.bf16.mxu0 %v2762
    %3018 = vmatpush1.bf16.msra.mxu0 %v2761
    %3019 = vmatprep.subr.bf16.mxu0 %v2764
    %3020 = vmatpush1.bf16.msra.mxu0 %v2763
    %3021 = vmatprep.mubr.bf16.mxu0 %v2331
    %3022 = vmatmul.mubr.bf16.gmra.mrb[0].mxu0 %v2330
    %v3023 = vpop.f32.mrb[0].mxu0
    %v3024 = vadd.f32 %v2342, %v3023
    %v3025 = vpop.f32.mrb[0].mxu0
    %v3026 = vadd.f32 %v2346, %v3025
    %v3027 = vpop.f32.mrb[0].mxu0
    %v3028 = vpop.f32.mrb[0].mxu0
    %3029 = vdwg.mxu0
    %3030 = vmatprep.subr.bf16.mxu0 %v2766
    %3031 = vmatpush1.bf16.msra.mxu0 %v2765
    %3032 = vmatprep.subr.bf16.mxu0 %v2768
    %3033 = vmatpush1.bf16.msra.mxu0 %v2767
    %3034 = vmatprep.subr.bf16.mxu0 %v2770
    %3035 = vmatpush1.bf16.msra.mxu0 %v2769
    %3036 = vmatprep.subr.bf16.mxu0 %v2772
    %3037 = vmatpush1.bf16.msra.mxu0 %v2771
    %3038 = vmatprep.subr.bf16.mxu0 %v2774
    %3039 = vmatpush1.bf16.msra.mxu0 %v2773
    %3040 = vmatprep.subr.bf16.mxu0 %v2776
    %3041 = vmatpush1.bf16.msra.mxu0 %v2775
    %3042 = vmatprep.subr.bf16.mxu0 %v2778
    %3043 = vmatpush1.bf16.msra.mxu0 %v2777
    %3044 = vmatprep.subr.bf16.mxu0 %v2780
    %3045 = vmatpush1.bf16.msra.mxu0 %v2779
    %3046 = vmatprep.subr.bf16.mxu0 %v2782
    %3047 = vmatpush1.bf16.msra.mxu0 %v2781
    %3048 = vmatprep.subr.bf16.mxu0 %v2784
    %3049 = vmatpush1.bf16.msra.mxu0 %v2783
    %3050 = vmatprep.subr.bf16.mxu0 %v2786
    %3051 = vmatpush1.bf16.msra.mxu0 %v2785
    %3052 = vmatprep.subr.bf16.mxu0 %v2788
    %3053 = vmatpush1.bf16.msra.mxu0 %v2787
    %3054 = vmatprep.subr.bf16.mxu0 %v2790
    %3055 = vmatpush1.bf16.msra.mxu0 %v2789
    %3056 = vmatprep.subr.bf16.mxu0 %v2792
    %3057 = vmatpush1.bf16.msra.mxu0 %v2791
    %3058 = vmatprep.subr.bf16.mxu0 %v2794
    %3059 = vmatpush1.bf16.msra.mxu0 %v2793
    %3060 = vmatprep.subr.bf16.mxu0 %v2796
    %3061 = vmatpush1.bf16.msra.mxu0 %v2795
    %3062 = vmatprep.mubr.bf16.mxu0 %v2333
    %3063 = vmatmul.mubr.bf16.gmra.mrb[0].mxu0 %v2332
    %v3064 = vpop.f32.mrb[0].mxu0
    %v3065 = vadd.f32 %v3024, %v3064
    %v3066 = vpop.f32.mrb[0].mxu0
    %v3067 = vadd.f32 %v3026, %v3066
    %v3068 = vpop.f32.mrb[0].mxu0
    %v3069 = vpop.f32.mrb[0].mxu0
    %3070 = vdwg.mxu0
    %3071 = vmatprep.subr.bf16.mxu0 %v2798
    %3072 = vmatpush1.bf16.msra.mxu0 %v2797
    %3073 = vmatprep.subr.bf16.mxu0 %v2800
    %3074 = vmatpush1.bf16.msra.mxu0 %v2799
    %3075 = vmatprep.subr.bf16.mxu0 %v2802
    %3076 = vmatpush1.bf16.msra.mxu0 %v2801
    %3077 = vmatprep.subr.bf16.mxu0 %v2804
    %3078 = vmatpush1.bf16.msra.mxu0 %v2803
    %3079 = vmatprep.subr.bf16.mxu0 %v2806
    %3080 = vmatpush1.bf16.msra.mxu0 %v2805
    %3081 = vmatprep.subr.bf16.mxu0 %v2808
    %3082 = vmatpush1.bf16.msra.mxu0 %v2807
    %3083 = vmatprep.subr.bf16.mxu0 %v2810
    %3084 = vmatpush1.bf16.msra.mxu0 %v2809
    %3085 = vmatprep.subr.bf16.mxu0 %v2812
    %3086 = vmatpush1.bf16.msra.mxu0 %v2811
    %3087 = vmatprep.subr.bf16.mxu0 %v2814
    %3088 = vmatpush1.bf16.msra.mxu0 %v2813
    %3089 = vmatprep.subr.bf16.mxu0 %v2816
    %3090 = vmatpush1.bf16.msra.mxu0 %v2815
    %3091 = vmatprep.subr.bf16.mxu0 %v2818
    %3092 = vmatpush1.bf16.msra.mxu0 %v2817
    %3093 = vmatprep.subr.bf16.mxu0 %v2820
    %3094 = vmatpush1.bf16.msra.mxu0 %v2819
    %3095 = vmatprep.subr.bf16.mxu0 %v2822
    %3096 = vmatpush1.bf16.msra.mxu0 %v2821
    %3097 = vmatprep.subr.bf16.mxu0 %v2824
    %3098 = vmatpush1.bf16.msra.mxu0 %v2823
    %3099 = vmatprep.subr.bf16.mxu0 %v2826
    %3100 = vmatpush1.bf16.msra.mxu0 %v2825
    %3101 = vmatprep.subr.bf16.mxu0 %v2828
    %3102 = vmatpush1.bf16.msra.mxu0 %v2827
    %3103 = vmatprep.mubr.bf16.mxu0 %v2335
    %3104 = vmatmul.mubr.bf16.gmra.mrb[0].mxu0 %v2334
    %v3105 = vpop.f32.mrb[0].mxu0
    %v3106 = vadd.f32 %v3065, %v3105
    %v3107 = vpop.f32.mrb[0].mxu0
    %v3108 = vadd.f32 %v3067, %v3107
    %v3109 = vpop.f32.mrb[0].mxu0
    %v3110 = vpop.f32.mrb[0].mxu0
    %3111 = vdwg.mxu0
    %3112 = vmatprep.subr.bf16.mxu0 %v2830
    %3113 = vmatpush1.bf16.msra.mxu0 %v2829
    %3114 = vmatprep.subr.bf16.mxu0 %v2832
    %3115 = vmatpush1.bf16.msra.mxu0 %v2831
    %3116 = vmatprep.subr.bf16.mxu0 %v2834
    %3117 = vmatpush1.bf16.msra.mxu0 %v2833
    %3118 = vmatprep.subr.bf16.mxu0 %v2836
    %3119 = vmatpush1.bf16.msra.mxu0 %v2835
    %3120 = vmatprep.subr.bf16.mxu0 %v2838
    %3121 = vmatpush1.bf16.msra.mxu0 %v2837
    %3122 = vmatprep.subr.bf16.mxu0 %v2840
    %3123 = vmatpush1.bf16.msra.mxu0 %v2839
    %3124 = vmatprep.subr.bf16.mxu0 %v2842
    %3125 = vmatpush1.bf16.msra.mxu0 %v2841
    %3126 = vmatprep.subr.bf16.mxu0 %v2844
    %3127 = vmatpush1.bf16.msra.mxu0 %v2843
    %3128 = vmatprep.subr.bf16.mxu0 %v2846
    %3129 = vmatpush1.bf16.msra.mxu0 %v2845
    %3130 = vmatprep.subr.bf16.mxu0 %v2848
    %3131 = vmatpush1.bf16.msra.mxu0 %v2847
    %3132 = vmatprep.subr.bf16.mxu0 %v2850
    %3133 = vmatpush1.bf16.msra.mxu0 %v2849
    %3134 = vmatprep.subr.bf16.mxu0 %v2852
    %3135 = vmatpush1.bf16.msra.mxu0 %v2851
    %3136 = vmatprep.subr.bf16.mxu0 %v2854
    %3137 = vmatpush1.bf16.msra.mxu0 %v2853
    %3138 = vmatprep.subr.bf16.mxu0 %v2856
    %3139 = vmatpush1.bf16.msra.mxu0 %v2855
    %3140 = vmatprep.subr.bf16.mxu0 %v2858
    %3141 = vmatpush1.bf16.msra.mxu0 %v2857
    %3142 = vmatprep.subr.bf16.mxu0 %v2860
    %3143 = vmatpush1.bf16.msra.mxu0 %v2859
    %3144 = vmatprep.mubr.bf16.mxu0 %v2337
    %3145 = vmatmul.mubr.bf16.gmra.mrb[0].mxu0 %v2336
    %v3146 = vpop.f32.mrb[0].mxu0
    %v3147 = vadd.f32 %v3106, %v3146
    %v3148 = vpop.f32.mrb[0].mxu0
    %v3149 = vadd.f32 %v3108, %v3148
    %v3150 = vpop.f32.mrb[0].mxu0
    %v3151 = vpop.f32.mrb[0].mxu0
    %3152 = vdwg.mxu0
    %v3153 = vld [vmem:[#allocation8 + $0x20] sm:$0xff]
    %v3154 = vld [vmem:[#allocation8 + $0x28] sm:$0xff]
    %v3155 = vld [vmem:[#allocation8 + $0x30] sm:$0xff]
    %v3156 = vld [vmem:[#allocation8 + $0x38] sm:$0xff]
    %v3157 = vld [vmem:[#allocation8 + $0x60] sm:$0xff]
    %v3158 = vld [vmem:[#allocation8 + $0x68] sm:$0xff]
    %v3159 = vld [vmem:[#allocation8 + $0x70] sm:$0xff]
    %v3160 = vld [vmem:[#allocation8 + $0x78] sm:$0xff]
    %v3161 = vld [vmem:[#allocation8 + $0xa0] sm:$0xff]
    %v3162 = vld [vmem:[#allocation8 + $0xa8] sm:$0xff]
    %v3163 = vld [vmem:[#allocation8 + $0xb0] sm:$0xff]
    %v3164 = vld [vmem:[#allocation8 + $0xb8] sm:$0xff]
    %v3165 = vld [vmem:[#allocation8 + $0xe0] sm:$0xff]
    %v3166 = vld [vmem:[#allocation8 + $0xe8] sm:$0xff]
    %v3167 = vld [vmem:[#allocation8 + $0xf0] sm:$0xff]
    %v3168 = vld [vmem:[#allocation8 + $0xf8] sm:$0xff]
    %v3169 = vld [vmem:[#allocation8 + $0x120] sm:$0xff]
    %v3170 = vld [vmem:[#allocation8 + $0x128] sm:$0xff]
    %v3171 = vld [vmem:[#allocation8 + $0x130] sm:$0xff]
    %v3172 = vld [vmem:[#allocation8 + $0x138] sm:$0xff]
    %v3173 = vld [vmem:[#allocation8 + $0x160] sm:$0xff]
    %v3174 = vld [vmem:[#allocation8 + $0x168] sm:$0xff]
    %v3175 = vld [vmem:[#allocation8 + $0x170] sm:$0xff]
    %v3176 = vld [vmem:[#allocation8 + $0x178] sm:$0xff]
    %v3177 = vld [vmem:[#allocation8 + $0x1a0] sm:$0xff]
    %v3178 = vld [vmem:[#allocation8 + $0x1a8] sm:$0xff]
    %v3179 = vld [vmem:[#allocation8 + $0x1b0] sm:$0xff]
    %v3180 = vld [vmem:[#allocation8 + $0x1b8] sm:$0xff]
    %v3181 = vld [vmem:[#allocation8 + $0x1e0] sm:$0xff]
    %v3182 = vld [vmem:[#allocation8 + $0x1e8] sm:$0xff]
    %v3183 = vld [vmem:[#allocation8 + $0x1f0] sm:$0xff]
    %v3184 = vld [vmem:[#allocation8 + $0x1f8] sm:$0xff]
    %v3185 = vld [vmem:[#allocation8 + $0x220] sm:$0xff]
    %v3186 = vld [vmem:[#allocation8 + $0x228] sm:$0xff]
    %v3187 = vld [vmem:[#allocation8 + $0x230] sm:$0xff]
    %v3188 = vld [vmem:[#allocation8 + $0x238] sm:$0xff]
    %v3189 = vld [vmem:[#allocation8 + $0x260] sm:$0xff]
    %v3190 = vld [vmem:[#allocation8 + $0x268] sm:$0xff]
    %v3191 = vld [vmem:[#allocation8 + $0x270] sm:$0xff]
    %v3192 = vld [vmem:[#allocation8 + $0x278] sm:$0xff]
    %v3193 = vld [vmem:[#allocation8 + $0x2a0] sm:$0xff]
    %v3194 = vld [vmem:[#allocation8 + $0x2a8] sm:$0xff]
    %v3195 = vld [vmem:[#allocation8 + $0x2b0] sm:$0xff]
    %v3196 = vld [vmem:[#allocation8 + $0x2b8] sm:$0xff]
    %v3197 = vld [vmem:[#allocation8 + $0x2e0] sm:$0xff]
    %v3198 = vld [vmem:[#allocation8 + $0x2e8] sm:$0xff]
    %v3199 = vld [vmem:[#allocation8 + $0x2f0] sm:$0xff]
    %v3200 = vld [vmem:[#allocation8 + $0x2f8] sm:$0xff]
    %v3201 = vld [vmem:[#allocation8 + $0x320] sm:$0xff]
    %v3202 = vld [vmem:[#allocation8 + $0x328] sm:$0xff]
    %v3203 = vld [vmem:[#allocation8 + $0x330] sm:$0xff]
    %v3204 = vld [vmem:[#allocation8 + $0x338] sm:$0xff]
    %v3205 = vld [vmem:[#allocation8 + $0x360] sm:$0xff]
    %v3206 = vld [vmem:[#allocation8 + $0x368] sm:$0xff]
    %v3207 = vld [vmem:[#allocation8 + $0x370] sm:$0xff]
    %v3208 = vld [vmem:[#allocation8 + $0x378] sm:$0xff]
    %v3209 = vld [vmem:[#allocation8 + $0x3a0] sm:$0xff]
    %v3210 = vld [vmem:[#allocation8 + $0x3a8] sm:$0xff]
    %v3211 = vld [vmem:[#allocation8 + $0x3b0] sm:$0xff]
    %v3212 = vld [vmem:[#allocation8 + $0x3b8] sm:$0xff]
    %v3213 = vld [vmem:[#allocation8 + $0x3e0] sm:$0xff]
    %v3214 = vld [vmem:[#allocation8 + $0x3e8] sm:$0xff]
    %v3215 = vld [vmem:[#allocation8 + $0x3f0] sm:$0xff]
    %v3216 = vld [vmem:[#allocation8 + $0x3f8] sm:$0xff]
    %v3217 = vld [vmem:[#allocation8 + $0x420] sm:$0xff]
    %v3218 = vld [vmem:[#allocation8 + $0x428] sm:$0xff]
    %v3219 = vld [vmem:[#allocation8 + $0x430] sm:$0xff]
    %v3220 = vld [vmem:[#allocation8 + $0x438] sm:$0xff]
    %v3221 = vld [vmem:[#allocation8 + $0x460] sm:$0xff]
    %v3222 = vld [vmem:[#allocation8 + $0x468] sm:$0xff]
    %v3223 = vld [vmem:[#allocation8 + $0x470] sm:$0xff]
    %v3224 = vld [vmem:[#allocation8 + $0x478] sm:$0xff]
    %v3225 = vld [vmem:[#allocation8 + $0x4a0] sm:$0xff]
    %v3226 = vld [vmem:[#allocation8 + $0x4a8] sm:$0xff]
    %v3227 = vld [vmem:[#allocation8 + $0x4b0] sm:$0xff]
    %v3228 = vld [vmem:[#allocation8 + $0x4b8] sm:$0xff]
    %v3229 = vld [vmem:[#allocation8 + $0x4e0] sm:$0xff]
    %v3230 = vld [vmem:[#allocation8 + $0x4e8] sm:$0xff]
    %v3231 = vld [vmem:[#allocation8 + $0x4f0] sm:$0xff]
    %v3232 = vld [vmem:[#allocation8 + $0x4f8] sm:$0xff]
    %v3233 = vld [vmem:[#allocation8 + $0x520] sm:$0xff]
    %v3234 = vld [vmem:[#allocation8 + $0x528] sm:$0xff]
    %v3235 = vld [vmem:[#allocation8 + $0x530] sm:$0xff]
    %v3236 = vld [vmem:[#allocation8 + $0x538] sm:$0xff]
    %v3237 = vld [vmem:[#allocation8 + $0x560] sm:$0xff]
    %v3238 = vld [vmem:[#allocation8 + $0x568] sm:$0xff]
    %v3239 = vld [vmem:[#allocation8 + $0x570] sm:$0xff]
    %v3240 = vld [vmem:[#allocation8 + $0x578] sm:$0xff]
    %v3241 = vld [vmem:[#allocation8 + $0x5a0] sm:$0xff]
    %v3242 = vld [vmem:[#allocation8 + $0x5a8] sm:$0xff]
    %v3243 = vld [vmem:[#allocation8 + $0x5b0] sm:$0xff]
    %v3244 = vld [vmem:[#allocation8 + $0x5b8] sm:$0xff]
    %v3245 = vld [vmem:[#allocation8 + $0x5e0] sm:$0xff]
    %v3246 = vld [vmem:[#allocation8 + $0x5e8] sm:$0xff]
    %v3247 = vld [vmem:[#allocation8 + $0x5f0] sm:$0xff]
    %v3248 = vld [vmem:[#allocation8 + $0x5f8] sm:$0xff]
    %v3249 = vld [vmem:[#allocation8 + $0x620] sm:$0xff]
    %v3250 = vld [vmem:[#allocation8 + $0x628] sm:$0xff]
    %v3251 = vld [vmem:[#allocation8 + $0x630] sm:$0xff]
    %v3252 = vld [vmem:[#allocation8 + $0x638] sm:$0xff]
    %v3253 = vld [vmem:[#allocation8 + $0x660] sm:$0xff]
    %v3254 = vld [vmem:[#allocation8 + $0x668] sm:$0xff]
    %v3255 = vld [vmem:[#allocation8 + $0x670] sm:$0xff]
    %v3256 = vld [vmem:[#allocation8 + $0x678] sm:$0xff]
    %v3257 = vld [vmem:[#allocation8 + $0x6a0] sm:$0xff]
    %v3258 = vld [vmem:[#allocation8 + $0x6a8] sm:$0xff]
    %v3259 = vld [vmem:[#allocation8 + $0x6b0] sm:$0xff]
    %v3260 = vld [vmem:[#allocation8 + $0x6b8] sm:$0xff]
    %v3261 = vld [vmem:[#allocation8 + $0x6e0] sm:$0xff]
    %v3262 = vld [vmem:[#allocation8 + $0x6e8] sm:$0xff]
    %v3263 = vld [vmem:[#allocation8 + $0x6f0] sm:$0xff]
    %v3264 = vld [vmem:[#allocation8 + $0x6f8] sm:$0xff]
    %v3265 = vld [vmem:[#allocation8 + $0x720] sm:$0xff]
    %v3266 = vld [vmem:[#allocation8 + $0x728] sm:$0xff]
    %v3267 = vld [vmem:[#allocation8 + $0x730] sm:$0xff]
    %v3268 = vld [vmem:[#allocation8 + $0x738] sm:$0xff]
    %v3269 = vld [vmem:[#allocation8 + $0x760] sm:$0xff]
    %v3270 = vld [vmem:[#allocation8 + $0x768] sm:$0xff]
    %v3271 = vld [vmem:[#allocation8 + $0x770] sm:$0xff]
    %v3272 = vld [vmem:[#allocation8 + $0x778] sm:$0xff]
    %v3273 = vld [vmem:[#allocation8 + $0x7a0] sm:$0xff]
    %v3274 = vld [vmem:[#allocation8 + $0x7a8] sm:$0xff]
    %v3275 = vld [vmem:[#allocation8 + $0x7b0] sm:$0xff]
    %v3276 = vld [vmem:[#allocation8 + $0x7b8] sm:$0xff]
    %v3277 = vld [vmem:[#allocation8 + $0x7e0] sm:$0xff]
    %v3278 = vld [vmem:[#allocation8 + $0x7e8] sm:$0xff]
    %v3279 = vld [vmem:[#allocation8 + $0x7f0] sm:$0xff]
    %v3280 = vld [vmem:[#allocation8 + $0x7f8] sm:$0xff]
    %v3281 = vld [vmem:[#allocation10 + $0x8] sm:$0xff]
    %v3282 = vld [vmem:[#allocation10 + $0x18] sm:$0xff]
    %v3283 = vld [vmem:[#allocation10 + $0x28] sm:$0xff]
    %v3284 = vld [vmem:[#allocation10 + $0x38] sm:$0xff]
    %v3285 = vld [vmem:[#allocation10 + $0x48] sm:$0xff]
    %v3286 = vld [vmem:[#allocation10 + $0x58] sm:$0xff]
    %v3287 = vld [vmem:[#allocation10 + $0x68] sm:$0xff]
    %v3288 = vld [vmem:[#allocation10 + $0x78] sm:$0xff]
    %v3289 = vld [vmem:[#allocation10 + $0x88] sm:$0xff]
    %v3290 = vld [vmem:[#allocation10 + $0x98] sm:$0xff]
    %v3291 = vld [vmem:[#allocation10 + $0xa8] sm:$0xff]
    %v3292 = vld [vmem:[#allocation10 + $0xb8] sm:$0xff]
    %v3293 = vld [vmem:[#allocation10 + $0xc8] sm:$0xff]
    %v3294 = vld [vmem:[#allocation10 + $0xd8] sm:$0xff]
    %v3295 = vld [vmem:[#allocation10 + $0xe8] sm:$0xff]
    %v3296 = vld [vmem:[#allocation10 + $0xf8] sm:$0xff]
    %v3297 = vld [vmem:[#allocation10 + $0x108] sm:$0xff]
    %v3298 = vld [vmem:[#allocation10 + $0x118] sm:$0xff]
    %v3299 = vld [vmem:[#allocation10 + $0x128] sm:$0xff]
    %v3300 = vld [vmem:[#allocation10 + $0x138] sm:$0xff]
    %v3301 = vld [vmem:[#allocation10 + $0x148] sm:$0xff]
    %v3302 = vld [vmem:[#allocation10 + $0x158] sm:$0xff]
    %v3303 = vld [vmem:[#allocation10 + $0x168] sm:$0xff]
    %v3304 = vld [vmem:[#allocation10 + $0x178] sm:$0xff]
    %v3305 = vld [vmem:[#allocation10 + $0x188] sm:$0xff]
    %v3306 = vld [vmem:[#allocation10 + $0x198] sm:$0xff]
    %v3307 = vld [vmem:[#allocation10 + $0x1a8] sm:$0xff]
    %v3308 = vld [vmem:[#allocation10 + $0x1b8] sm:$0xff]
    %v3309 = vld [vmem:[#allocation10 + $0x1c8] sm:$0xff]
    %v3310 = vld [vmem:[#allocation10 + $0x1d8] sm:$0xff]
    %v3311 = vld [vmem:[#allocation10 + $0x1e8] sm:$0xff]
    %v3312 = vld [vmem:[#allocation10 + $0x1f8] sm:$0xff]
    %v3313 = vld [vmem:[#allocation10 + $0x208] sm:$0xff]
    %v3314 = vld [vmem:[#allocation10 + $0x218] sm:$0xff]
    %v3315 = vld [vmem:[#allocation10 + $0x228] sm:$0xff]
    %v3316 = vld [vmem:[#allocation10 + $0x238] sm:$0xff]
    %v3317 = vld [vmem:[#allocation10 + $0x248] sm:$0xff]
    %v3318 = vld [vmem:[#allocation10 + $0x258] sm:$0xff]
    %v3319 = vld [vmem:[#allocation10 + $0x268] sm:$0xff]
    %v3320 = vld [vmem:[#allocation10 + $0x278] sm:$0xff]
    %v3321 = vld [vmem:[#allocation10 + $0x288] sm:$0xff]
    %v3322 = vld [vmem:[#allocation10 + $0x298] sm:$0xff]
    %v3323 = vld [vmem:[#allocation10 + $0x2a8] sm:$0xff]
    %v3324 = vld [vmem:[#allocation10 + $0x2b8] sm:$0xff]
    %v3325 = vld [vmem:[#allocation10 + $0x2c8] sm:$0xff]
    %v3326 = vld [vmem:[#allocation10 + $0x2d8] sm:$0xff]
    %v3327 = vld [vmem:[#allocation10 + $0x2e8] sm:$0xff]
    %v3328 = vld [vmem:[#allocation10 + $0x2f8] sm:$0xff]
    %v3329 = vld [vmem:[#allocation10 + $0x308] sm:$0xff]
    %v3330 = vld [vmem:[#allocation10 + $0x318] sm:$0xff]
    %v3331 = vld [vmem:[#allocation10 + $0x328] sm:$0xff]
    %v3332 = vld [vmem:[#allocation10 + $0x338] sm:$0xff]
    %v3333 = vld [vmem:[#allocation10 + $0x348] sm:$0xff]
    %v3334 = vld [vmem:[#allocation10 + $0x358] sm:$0xff]
    %v3335 = vld [vmem:[#allocation10 + $0x368] sm:$0xff]
    %v3336 = vld [vmem:[#allocation10 + $0x378] sm:$0xff]
    %v3337 = vld [vmem:[#allocation10 + $0x388] sm:$0xff]
    %v3338 = vld [vmem:[#allocation10 + $0x398] sm:$0xff]
    %v3339 = vld [vmem:[#allocation10 + $0x3a8] sm:$0xff]
    %v3340 = vld [vmem:[#allocation10 + $0x3b8] sm:$0xff]
    %v3341 = vld [vmem:[#allocation10 + $0x3c8] sm:$0xff]
    %v3342 = vld [vmem:[#allocation10 + $0x3d8] sm:$0xff]
    %v3343 = vld [vmem:[#allocation10 + $0x3e8] sm:$0xff]
    %v3344 = vld [vmem:[#allocation10 + $0x3f8] sm:$0xff]
    %v3345 = vld [vmem:[#allocation10 + $0x408] sm:$0xff]
    %v3346 = vld [vmem:[#allocation10 + $0x418] sm:$0xff]
    %v3347 = vld [vmem:[#allocation10 + $0x428] sm:$0xff]
    %v3348 = vld [vmem:[#allocation10 + $0x438] sm:$0xff]
    %v3349 = vld [vmem:[#allocation10 + $0x448] sm:$0xff]
    %v3350 = vld [vmem:[#allocation10 + $0x458] sm:$0xff]
    %v3351 = vld [vmem:[#allocation10 + $0x468] sm:$0xff]
    %v3352 = vld [vmem:[#allocation10 + $0x478] sm:$0xff]
    %v3353 = vld [vmem:[#allocation10 + $0x488] sm:$0xff]
    %v3354 = vld [vmem:[#allocation10 + $0x498] sm:$0xff]
    %v3355 = vld [vmem:[#allocation10 + $0x4a8] sm:$0xff]
    %v3356 = vld [vmem:[#allocation10 + $0x4b8] sm:$0xff]
    %v3357 = vld [vmem:[#allocation10 + $0x4c8] sm:$0xff]
    %v3358 = vld [vmem:[#allocation10 + $0x4d8] sm:$0xff]
    %v3359 = vld [vmem:[#allocation10 + $0x4e8] sm:$0xff]
    %v3360 = vld [vmem:[#allocation10 + $0x4f8] sm:$0xff]
    %v3361 = vld [vmem:[#allocation10 + $0x508] sm:$0xff]
    %v3362 = vld [vmem:[#allocation10 + $0x518] sm:$0xff]
    %v3363 = vld [vmem:[#allocation10 + $0x528] sm:$0xff]
    %v3364 = vld [vmem:[#allocation10 + $0x538] sm:$0xff]
    %v3365 = vld [vmem:[#allocation10 + $0x548] sm:$0xff]
    %v3366 = vld [vmem:[#allocation10 + $0x558] sm:$0xff]
    %v3367 = vld [vmem:[#allocation10 + $0x568] sm:$0xff]
    %v3368 = vld [vmem:[#allocation10 + $0x578] sm:$0xff]
    %v3369 = vld [vmem:[#allocation10 + $0x588] sm:$0xff]
    %v3370 = vld [vmem:[#allocation10 + $0x598] sm:$0xff]
    %v3371 = vld [vmem:[#allocation10 + $0x5a8] sm:$0xff]
    %v3372 = vld [vmem:[#allocation10 + $0x5b8] sm:$0xff]
    %v3373 = vld [vmem:[#allocation10 + $0x5c8] sm:$0xff]
    %v3374 = vld [vmem:[#allocation10 + $0x5d8] sm:$0xff]
    %v3375 = vld [vmem:[#allocation10 + $0x5e8] sm:$0xff]
    %v3376 = vld [vmem:[#allocation10 + $0x5f8] sm:$0xff]
    %v3377 = vld [vmem:[#allocation10 + $0x608] sm:$0xff]
    %v3378 = vld [vmem:[#allocation10 + $0x618] sm:$0xff]
    %v3379 = vld [vmem:[#allocation10 + $0x628] sm:$0xff]
    %v3380 = vld [vmem:[#allocation10 + $0x638] sm:$0xff]
    %v3381 = vld [vmem:[#allocation10 + $0x648] sm:$0xff]
    %v3382 = vld [vmem:[#allocation10 + $0x658] sm:$0xff]
    %v3383 = vld [vmem:[#allocation10 + $0x668] sm:$0xff]
    %v3384 = vld [vmem:[#allocation10 + $0x678] sm:$0xff]
    %v3385 = vld [vmem:[#allocation10 + $0x688] sm:$0xff]
    %v3386 = vld [vmem:[#allocation10 + $0x698] sm:$0xff]
    %v3387 = vld [vmem:[#allocation10 + $0x6a8] sm:$0xff]
    %v3388 = vld [vmem:[#allocation10 + $0x6b8] sm:$0xff]
    %v3389 = vld [vmem:[#allocation10 + $0x6c8] sm:$0xff]
    %v3390 = vld [vmem:[#allocation10 + $0x6d8] sm:$0xff]
    %v3391 = vld [vmem:[#allocation10 + $0x6e8] sm:$0xff]
    %v3392 = vld [vmem:[#allocation10 + $0x6f8] sm:$0xff]
    %v3393 = vld [vmem:[#allocation10 + $0x708] sm:$0xff]
    %v3394 = vld [vmem:[#allocation10 + $0x718] sm:$0xff]
    %v3395 = vld [vmem:[#allocation10 + $0x728] sm:$0xff]
    %v3396 = vld [vmem:[#allocation10 + $0x738] sm:$0xff]
    %v3397 = vld [vmem:[#allocation10 + $0x748] sm:$0xff]
    %v3398 = vld [vmem:[#allocation10 + $0x758] sm:$0xff]
    %v3399 = vld [vmem:[#allocation10 + $0x768] sm:$0xff]
    %v3400 = vld [vmem:[#allocation10 + $0x778] sm:$0xff]
    %v3401 = vld [vmem:[#allocation10 + $0x788] sm:$0xff]
    %v3402 = vld [vmem:[#allocation10 + $0x798] sm:$0xff]
    %v3403 = vld [vmem:[#allocation10 + $0x7a8] sm:$0xff]
    %v3404 = vld [vmem:[#allocation10 + $0x7b8] sm:$0xff]
    %v3405 = vld [vmem:[#allocation10 + $0x7c8] sm:$0xff]
    %v3406 = vld [vmem:[#allocation10 + $0x7d8] sm:$0xff]
    %v3407 = vld [vmem:[#allocation10 + $0x7e8] sm:$0xff]
    %v3408 = vld [vmem:[#allocation10 + $0x7f8] sm:$0xff]
    %s3409 = scalar_lea.vmem %s6, 1
    %v3410 = vld [vmem:[%s3409] ss:$2 sm:$0xff]
    %s3411 = scalar_lea.vmem [#allocation11], 21
    %v3412 = vld [vmem:[%s3411] ss:$8 sm:$0x3]
    %v3413 = vpack.c.bf16 %v1214, %v1214
    %v3414 = vpack.c.bf16 %v1215, %v1215
    %v3416 = vlaneseq
    %v3417 = vshrl.u32 %v3416, 7
    %v3418 = vsub.s32 0, %v3417
    %v3419 = vrot.slane %v3410, %v3418
    %v3420 = vlaneseq
    %v3421 = vshrl.u32 %v3420, 7
    %v3422 = vsub.s32 1, %v3421
    %v3423 = vrot.slane %v3410, %v3422
    %v3424 = vlaneseq
    %v3425 = vshrl.u32 %v3424, 7
    %v3426 = vsub.s32 2, %v3425
    %v3427 = vrot.slane %v3410, %v3426
    %v3428 = vlaneseq
    %v3429 = vshrl.u32 %v3428, 7
    %v3430 = vsub.s32 3, %v3429
    %v3431 = vrot.slane %v3410, %v3430
    %v3432 = vlaneseq
    %v3433 = vshrl.u32 %v3432, 7
    %v3434 = vsub.s32 4, %v3433
    %v3435 = vrot.slane %v3410, %v3434
    %v3436 = vlaneseq
    %v3437 = vshrl.u32 %v3436, 7
    %v3438 = vsub.s32 5, %v3437
    %v3439 = vrot.slane %v3410, %v3438
    %v3440 = vlaneseq
    %v3441 = vshrl.u32 %v3440, 7
    %v3442 = vsub.s32 6, %v3441
    %v3443 = vrot.slane %v3410, %v3442
    %v3444 = vlaneseq
    %v3445 = vshrl.u32 %v3444, 7
    %v3446 = vsub.s32 7, %v3445
    %v3447 = vrot.slane %v3410, %v3446
    %v3584 = vunpack.c.l.b16 %v3153
    %v3585 = vunpack.c.h.b16 %v3153
    %v3586 = vunpack.c.l.b16 %v3154
    %v3587 = vunpack.c.h.b16 %v3154
    %v3588 = vunpack.c.l.b16 %v3155
    %v3589 = vunpack.c.h.b16 %v3155
    %v3590 = vunpack.c.l.b16 %v3156
    %v3591 = vunpack.c.h.b16 %v3156
    %v3592 = vunpack.c.l.b16 %v3157
    %v3593 = vunpack.c.h.b16 %v3157
    %v3594 = vunpack.c.l.b16 %v3158
    %v3595 = vunpack.c.h.b16 %v3158
    %v3596 = vunpack.c.l.b16 %v3159
    %v3597 = vunpack.c.h.b16 %v3159
    %v3598 = vunpack.c.l.b16 %v3160
    %v3599 = vunpack.c.h.b16 %v3160
    %v3600 = vunpack.c.l.b16 %v3161
    %v3601 = vunpack.c.h.b16 %v3161
    %v3602 = vunpack.c.l.b16 %v3162
    %v3603 = vunpack.c.h.b16 %v3162
    %v3604 = vunpack.c.l.b16 %v3163
    %v3605 = vunpack.c.h.b16 %v3163
    %v3606 = vunpack.c.l.b16 %v3164
    %v3607 = vunpack.c.h.b16 %v3164
    %v3608 = vunpack.c.l.b16 %v3165
    %v3609 = vunpack.c.h.b16 %v3165
    %v3610 = vunpack.c.l.b16 %v3166
    %v3611 = vunpack.c.h.b16 %v3166
    %v3612 = vunpack.c.l.b16 %v3167
    %v3613 = vunpack.c.h.b16 %v3167
    %v3614 = vunpack.c.l.b16 %v3168
    %v3615 = vunpack.c.h.b16 %v3168
    %v3616 = vunpack.c.l.b16 %v3169
    %v3617 = vunpack.c.h.b16 %v3169
    %v3618 = vunpack.c.l.b16 %v3170
    %v3619 = vunpack.c.h.b16 %v3170
    %v3620 = vunpack.c.l.b16 %v3171
    %v3621 = vunpack.c.h.b16 %v3171
    %v3622 = vunpack.c.l.b16 %v3172
    %v3623 = vunpack.c.h.b16 %v3172
    %v3624 = vunpack.c.l.b16 %v3173
    %v3625 = vunpack.c.h.b16 %v3173
    %v3626 = vunpack.c.l.b16 %v3174
    %v3627 = vunpack.c.h.b16 %v3174
    %v3628 = vunpack.c.l.b16 %v3175
    %v3629 = vunpack.c.h.b16 %v3175
    %v3630 = vunpack.c.l.b16 %v3176
    %v3631 = vunpack.c.h.b16 %v3176
    %v3632 = vunpack.c.l.b16 %v3177
    %v3633 = vunpack.c.h.b16 %v3177
    %v3634 = vunpack.c.l.b16 %v3178
    %v3635 = vunpack.c.h.b16 %v3178
    %v3636 = vunpack.c.l.b16 %v3179
    %v3637 = vunpack.c.h.b16 %v3179
    %v3638 = vunpack.c.l.b16 %v3180
    %v3639 = vunpack.c.h.b16 %v3180
    %v3640 = vunpack.c.l.b16 %v3181
    %v3641 = vunpack.c.h.b16 %v3181
    %v3642 = vunpack.c.l.b16 %v3182
    %v3643 = vunpack.c.h.b16 %v3182
    %v3644 = vunpack.c.l.b16 %v3183
    %v3645 = vunpack.c.h.b16 %v3183
    %v3646 = vunpack.c.l.b16 %v3184
    %v3647 = vunpack.c.h.b16 %v3184
    %v3648 = vunpack.c.l.b16 %v3185
    %v3649 = vunpack.c.h.b16 %v3185
    %v3650 = vunpack.c.l.b16 %v3186
    %v3651 = vunpack.c.h.b16 %v3186
    %v3652 = vunpack.c.l.b16 %v3187
    %v3653 = vunpack.c.h.b16 %v3187
    %v3654 = vunpack.c.l.b16 %v3188
    %v3655 = vunpack.c.h.b16 %v3188
    %v3656 = vunpack.c.l.b16 %v3189
    %v3657 = vunpack.c.h.b16 %v3189
    %v3658 = vunpack.c.l.b16 %v3190
    %v3659 = vunpack.c.h.b16 %v3190
    %v3660 = vunpack.c.l.b16 %v3191
    %v3661 = vunpack.c.h.b16 %v3191
    %v3662 = vunpack.c.l.b16 %v3192
    %v3663 = vunpack.c.h.b16 %v3192
    %v3664 = vunpack.c.l.b16 %v3193
    %v3665 = vunpack.c.h.b16 %v3193
    %v3666 = vunpack.c.l.b16 %v3194
    %v3667 = vunpack.c.h.b16 %v3194
    %v3668 = vunpack.c.l.b16 %v3195
    %v3669 = vunpack.c.h.b16 %v3195
    %v3670 = vunpack.c.l.b16 %v3196
    %v3671 = vunpack.c.h.b16 %v3196
    %v3672 = vunpack.c.l.b16 %v3197
    %v3673 = vunpack.c.h.b16 %v3197
    %v3674 = vunpack.c.l.b16 %v3198
    %v3675 = vunpack.c.h.b16 %v3198
    %v3676 = vunpack.c.l.b16 %v3199
    %v3677 = vunpack.c.h.b16 %v3199
    %v3678 = vunpack.c.l.b16 %v3200
    %v3679 = vunpack.c.h.b16 %v3200
    %v3680 = vunpack.c.l.b16 %v3201
    %v3681 = vunpack.c.h.b16 %v3201
    %v3682 = vunpack.c.l.b16 %v3202
    %v3683 = vunpack.c.h.b16 %v3202
    %v3684 = vunpack.c.l.b16 %v3203
    %v3685 = vunpack.c.h.b16 %v3203
    %v3686 = vunpack.c.l.b16 %v3204
    %v3687 = vunpack.c.h.b16 %v3204
    %v3688 = vunpack.c.l.b16 %v3205
    %v3689 = vunpack.c.h.b16 %v3205
    %v3690 = vunpack.c.l.b16 %v3206
    %v3691 = vunpack.c.h.b16 %v3206
    %v3692 = vunpack.c.l.b16 %v3207
    %v3693 = vunpack.c.h.b16 %v3207
    %v3694 = vunpack.c.l.b16 %v3208
    %v3695 = vunpack.c.h.b16 %v3208
    %v3696 = vunpack.c.l.b16 %v3209
    %v3697 = vunpack.c.h.b16 %v3209
    %v3698 = vunpack.c.l.b16 %v3210
    %v3699 = vunpack.c.h.b16 %v3210
    %v3700 = vunpack.c.l.b16 %v3211
    %v3701 = vunpack.c.h.b16 %v3211
    %v3702 = vunpack.c.l.b16 %v3212
    %v3703 = vunpack.c.h.b16 %v3212
    %v3704 = vunpack.c.l.b16 %v3213
    %v3705 = vunpack.c.h.b16 %v3213
    %v3706 = vunpack.c.l.b16 %v3214
    %v3707 = vunpack.c.h.b16 %v3214
    %v3708 = vunpack.c.l.b16 %v3215
    %v3709 = vunpack.c.h.b16 %v3215
    %v3710 = vunpack.c.l.b16 %v3216
    %v3711 = vunpack.c.h.b16 %v3216
    %v3712 = vunpack.c.l.b16 %v3217
    %v3713 = vunpack.c.h.b16 %v3217
    %v3714 = vunpack.c.l.b16 %v3218
    %v3715 = vunpack.c.h.b16 %v3218
    %v3716 = vunpack.c.l.b16 %v3219
    %v3717 = vunpack.c.h.b16 %v3219
    %v3718 = vunpack.c.l.b16 %v3220
    %v3719 = vunpack.c.h.b16 %v3220
    %v3720 = vunpack.c.l.b16 %v3221
    %v3721 = vunpack.c.h.b16 %v3221
    %v3722 = vunpack.c.l.b16 %v3222
    %v3723 = vunpack.c.h.b16 %v3222
    %v3724 = vunpack.c.l.b16 %v3223
    %v3725 = vunpack.c.h.b16 %v3223
    %v3726 = vunpack.c.l.b16 %v3224
    %v3727 = vunpack.c.h.b16 %v3224
    %v3728 = vunpack.c.l.b16 %v3225
    %v3729 = vunpack.c.h.b16 %v3225
    %v3730 = vunpack.c.l.b16 %v3226
    %v3731 = vunpack.c.h.b16 %v3226
    %v3732 = vunpack.c.l.b16 %v3227
    %v3733 = vunpack.c.h.b16 %v3227
    %v3734 = vunpack.c.l.b16 %v3228
    %v3735 = vunpack.c.h.b16 %v3228
    %v3736 = vunpack.c.l.b16 %v3229
    %v3737 = vunpack.c.h.b16 %v3229
    %v3738 = vunpack.c.l.b16 %v3230
    %v3739 = vunpack.c.h.b16 %v3230
    %v3740 = vunpack.c.l.b16 %v3231
    %v3741 = vunpack.c.h.b16 %v3231
    %v3742 = vunpack.c.l.b16 %v3232
    %v3743 = vunpack.c.h.b16 %v3232
    %v3744 = vunpack.c.l.b16 %v3233
    %v3745 = vunpack.c.h.b16 %v3233
    %v3746 = vunpack.c.l.b16 %v3234
    %v3747 = vunpack.c.h.b16 %v3234
    %v3748 = vunpack.c.l.b16 %v3235
    %v3749 = vunpack.c.h.b16 %v3235
    %v3750 = vunpack.c.l.b16 %v3236
    %v3751 = vunpack.c.h.b16 %v3236
    %v3752 = vunpack.c.l.b16 %v3237
    %v3753 = vunpack.c.h.b16 %v3237
    %v3754 = vunpack.c.l.b16 %v3238
    %v3755 = vunpack.c.h.b16 %v3238
    %v3756 = vunpack.c.l.b16 %v3239
    %v3757 = vunpack.c.h.b16 %v3239
    %v3758 = vunpack.c.l.b16 %v3240
    %v3759 = vunpack.c.h.b16 %v3240
    %v3760 = vunpack.c.l.b16 %v3241
    %v3761 = vunpack.c.h.b16 %v3241
    %v3762 = vunpack.c.l.b16 %v3242
    %v3763 = vunpack.c.h.b16 %v3242
    %v3764 = vunpack.c.l.b16 %v3243
    %v3765 = vunpack.c.h.b16 %v3243
    %v3766 = vunpack.c.l.b16 %v3244
    %v3767 = vunpack.c.h.b16 %v3244
    %v3768 = vunpack.c.l.b16 %v3245
    %v3769 = vunpack.c.h.b16 %v3245
    %v3770 = vunpack.c.l.b16 %v3246
    %v3771 = vunpack.c.h.b16 %v3246
    %v3772 = vunpack.c.l.b16 %v3247
    %v3773 = vunpack.c.h.b16 %v3247
    %v3774 = vunpack.c.l.b16 %v3248
    %v3775 = vunpack.c.h.b16 %v3248
    %v3776 = vunpack.c.l.b16 %v3249
    %v3777 = vunpack.c.h.b16 %v3249
    %v3778 = vunpack.c.l.b16 %v3250
    %v3779 = vunpack.c.h.b16 %v3250
    %v3780 = vunpack.c.l.b16 %v3251
    %v3781 = vunpack.c.h.b16 %v3251
    %v3782 = vunpack.c.l.b16 %v3252
    %v3783 = vunpack.c.h.b16 %v3252
    %v3784 = vunpack.c.l.b16 %v3253
    %v3785 = vunpack.c.h.b16 %v3253
    %v3786 = vunpack.c.l.b16 %v3254
    %v3787 = vunpack.c.h.b16 %v3254
    %v3788 = vunpack.c.l.b16 %v3255
    %v3789 = vunpack.c.h.b16 %v3255
    %v3790 = vunpack.c.l.b16 %v3256
    %v3791 = vunpack.c.h.b16 %v3256
    %v3792 = vunpack.c.l.b16 %v3257
    %v3793 = vunpack.c.h.b16 %v3257
    %v3794 = vunpack.c.l.b16 %v3258
    %v3795 = vunpack.c.h.b16 %v3258
    %v3796 = vunpack.c.l.b16 %v3259
    %v3797 = vunpack.c.h.b16 %v3259
    %v3798 = vunpack.c.l.b16 %v3260
    %v3799 = vunpack.c.h.b16 %v3260
    %v3800 = vunpack.c.l.b16 %v3261
    %v3801 = vunpack.c.h.b16 %v3261
    %v3802 = vunpack.c.l.b16 %v3262
    %v3803 = vunpack.c.h.b16 %v3262
    %v3804 = vunpack.c.l.b16 %v3263
    %v3805 = vunpack.c.h.b16 %v3263
    %v3806 = vunpack.c.l.b16 %v3264
    %v3807 = vunpack.c.h.b16 %v3264
    %v3808 = vunpack.c.l.b16 %v3265
    %v3809 = vunpack.c.h.b16 %v3265
    %v3810 = vunpack.c.l.b16 %v3266
    %v3811 = vunpack.c.h.b16 %v3266
    %v3812 = vunpack.c.l.b16 %v3267
    %v3813 = vunpack.c.h.b16 %v3267
    %v3814 = vunpack.c.l.b16 %v3268
    %v3815 = vunpack.c.h.b16 %v3268
    %v3816 = vunpack.c.l.b16 %v3269
    %v3817 = vunpack.c.h.b16 %v3269
    %v3818 = vunpack.c.l.b16 %v3270
    %v3819 = vunpack.c.h.b16 %v3270
    %v3820 = vunpack.c.l.b16 %v3271
    %v3821 = vunpack.c.h.b16 %v3271
    %v3822 = vunpack.c.l.b16 %v3272
    %v3823 = vunpack.c.h.b16 %v3272
    %v3824 = vunpack.c.l.b16 %v3273
    %v3825 = vunpack.c.h.b16 %v3273
    %v3826 = vunpack.c.l.b16 %v3274
    %v3827 = vunpack.c.h.b16 %v3274
    %v3828 = vunpack.c.l.b16 %v3275
    %v3829 = vunpack.c.h.b16 %v3275
    %v3830 = vunpack.c.l.b16 %v3276
    %v3831 = vunpack.c.h.b16 %v3276
    %v3832 = vunpack.c.l.b16 %v3277
    %v3833 = vunpack.c.h.b16 %v3277
    %v3834 = vunpack.c.l.b16 %v3278
    %v3835 = vunpack.c.h.b16 %v3278
    %v3836 = vunpack.c.l.b16 %v3279
    %v3837 = vunpack.c.h.b16 %v3279
    %v3838 = vunpack.c.l.b16 %v3280
    %v3839 = vunpack.c.h.b16 %v3280
    %v3840 = vpack.c.b16 %v3592, %v3584
    %v3841 = vpack.c.b16 %v3593, %v3585
    %v3842 = vpack.c.b16 %v3594, %v3586
    %v3843 = vpack.c.b16 %v3595, %v3587
    %v3844 = vpack.c.b16 %v3596, %v3588
    %v3845 = vpack.c.b16 %v3597, %v3589
    %v3846 = vpack.c.b16 %v3598, %v3590
    %v3847 = vpack.c.b16 %v3599, %v3591
    %v3848 = vpack.c.b16 %v3608, %v3600
    %v3849 = vpack.c.b16 %v3609, %v3601
    %v3850 = vpack.c.b16 %v3610, %v3602
    %v3851 = vpack.c.b16 %v3611, %v3603
    %v3852 = vpack.c.b16 %v3612, %v3604
    %v3853 = vpack.c.b16 %v3613, %v3605
    %v3854 = vpack.c.b16 %v3614, %v3606
    %v3855 = vpack.c.b16 %v3615, %v3607
    %v3856 = vpack.c.b16 %v3624, %v3616
    %v3857 = vpack.c.b16 %v3625, %v3617
    %v3858 = vpack.c.b16 %v3626, %v3618
    %v3859 = vpack.c.b16 %v3627, %v3619
    %v3860 = vpack.c.b16 %v3628, %v3620
    %v3861 = vpack.c.b16 %v3629, %v3621
    %v3862 = vpack.c.b16 %v3630, %v3622
    %v3863 = vpack.c.b16 %v3631, %v3623
    %v3864 = vpack.c.b16 %v3640, %v3632
    %v3865 = vpack.c.b16 %v3641, %v3633
    %v3866 = vpack.c.b16 %v3642, %v3634
    %v3867 = vpack.c.b16 %v3643, %v3635
    %v3868 = vpack.c.b16 %v3644, %v3636
    %v3869 = vpack.c.b16 %v3645, %v3637
    %v3870 = vpack.c.b16 %v3646, %v3638
    %v3871 = vpack.c.b16 %v3647, %v3639
    %v3872 = vpack.c.b16 %v3656, %v3648
    %v3873 = vpack.c.b16 %v3657, %v3649
    %v3874 = vpack.c.b16 %v3658, %v3650
    %v3875 = vpack.c.b16 %v3659, %v3651
    %v3876 = vpack.c.b16 %v3660, %v3652
    %v3877 = vpack.c.b16 %v3661, %v3653
    %v3878 = vpack.c.b16 %v3662, %v3654
    %v3879 = vpack.c.b16 %v3663, %v3655
    %v3880 = vpack.c.b16 %v3672, %v3664
    %v3881 = vpack.c.b16 %v3673, %v3665
    %v3882 = vpack.c.b16 %v3674, %v3666
    %v3883 = vpack.c.b16 %v3675, %v3667
    %v3884 = vpack.c.b16 %v3676, %v3668
    %v3885 = vpack.c.b16 %v3677, %v3669
    %v3886 = vpack.c.b16 %v3678, %v3670
    %v3887 = vpack.c.b16 %v3679, %v3671
    %v3888 = vpack.c.b16 %v3688, %v3680
    %v3889 = vpack.c.b16 %v3689, %v3681
    %v3890 = vpack.c.b16 %v3690, %v3682
    %v3891 = vpack.c.b16 %v3691, %v3683
    %v3892 = vpack.c.b16 %v3692, %v3684
    %v3893 = vpack.c.b16 %v3693, %v3685
    %v3894 = vpack.c.b16 %v3694, %v3686
    %v3895 = vpack.c.b16 %v3695, %v3687
    %v3896 = vpack.c.b16 %v3704, %v3696
    %v3897 = vpack.c.b16 %v3705, %v3697
    %v3898 = vpack.c.b16 %v3706, %v3698
    %v3899 = vpack.c.b16 %v3707, %v3699
    %v3900 = vpack.c.b16 %v3708, %v3700
    %v3901 = vpack.c.b16 %v3709, %v3701
    %v3902 = vpack.c.b16 %v3710, %v3702
    %v3903 = vpack.c.b16 %v3711, %v3703
    %v3904 = vpack.c.b16 %v3720, %v3712
    %v3905 = vpack.c.b16 %v3721, %v3713
    %v3906 = vpack.c.b16 %v3722, %v3714
    %v3907 = vpack.c.b16 %v3723, %v3715
    %v3908 = vpack.c.b16 %v3724, %v3716
    %v3909 = vpack.c.b16 %v3725, %v3717
    %v3910 = vpack.c.b16 %v3726, %v3718
    %v3911 = vpack.c.b16 %v3727, %v3719
    %v3912 = vpack.c.b16 %v3736, %v3728
    %v3913 = vpack.c.b16 %v3737, %v3729
    %v3914 = vpack.c.b16 %v3738, %v3730
    %v3915 = vpack.c.b16 %v3739, %v3731
    %v3916 = vpack.c.b16 %v3740, %v3732
    %v3917 = vpack.c.b16 %v3741, %v3733
    %v3918 = vpack.c.b16 %v3742, %v3734
    %v3919 = vpack.c.b16 %v3743, %v3735
    %v3920 = vpack.c.b16 %v3752, %v3744
    %v3921 = vpack.c.b16 %v3753, %v3745
    %v3922 = vpack.c.b16 %v3754, %v3746
    %v3923 = vpack.c.b16 %v3755, %v3747
    %v3924 = vpack.c.b16 %v3756, %v3748
    %v3925 = vpack.c.b16 %v3757, %v3749
    %v3926 = vpack.c.b16 %v3758, %v3750
    %v3927 = vpack.c.b16 %v3759, %v3751
    %v3928 = vpack.c.b16 %v3768, %v3760
    %v3929 = vpack.c.b16 %v3769, %v3761
    %v3930 = vpack.c.b16 %v3770, %v3762
    %v3931 = vpack.c.b16 %v3771, %v3763
    %v3932 = vpack.c.b16 %v3772, %v3764
    %v3933 = vpack.c.b16 %v3773, %v3765
    %v3934 = vpack.c.b16 %v3774, %v3766
    %v3935 = vpack.c.b16 %v3775, %v3767
    %v3936 = vpack.c.b16 %v3784, %v3776
    %v3937 = vpack.c.b16 %v3785, %v3777
    %v3938 = vpack.c.b16 %v3786, %v3778
    %v3939 = vpack.c.b16 %v3787, %v3779
    %v3940 = vpack.c.b16 %v3788, %v3780
    %v3941 = vpack.c.b16 %v3789, %v3781
    %v3942 = vpack.c.b16 %v3790, %v3782
    %v3943 = vpack.c.b16 %v3791, %v3783
    %v3944 = vpack.c.b16 %v3800, %v3792
    %v3945 = vpack.c.b16 %v3801, %v3793
    %v3946 = vpack.c.b16 %v3802, %v3794
    %v3947 = vpack.c.b16 %v3803, %v3795
    %v3948 = vpack.c.b16 %v3804, %v3796
    %v3949 = vpack.c.b16 %v3805, %v3797
    %v3950 = vpack.c.b16 %v3806, %v3798
    %v3951 = vpack.c.b16 %v3807, %v3799
    %v3952 = vpack.c.b16 %v3816, %v3808
    %v3953 = vpack.c.b16 %v3817, %v3809
    %v3954 = vpack.c.b16 %v3818, %v3810
    %v3955 = vpack.c.b16 %v3819, %v3811
    %v3956 = vpack.c.b16 %v3820, %v3812
    %v3957 = vpack.c.b16 %v3821, %v3813
    %v3958 = vpack.c.b16 %v3822, %v3814
    %v3959 = vpack.c.b16 %v3823, %v3815
    %v3960 = vpack.c.b16 %v3832, %v3824
    %v3961 = vpack.c.b16 %v3833, %v3825
    %v3962 = vpack.c.b16 %v3834, %v3826
    %v3963 = vpack.c.b16 %v3835, %v3827
    %v3964 = vpack.c.b16 %v3836, %v3828
    %v3965 = vpack.c.b16 %v3837, %v3829
    %v3966 = vpack.c.b16 %v3838, %v3830
    %v3967 = vpack.c.b16 %v3839, %v3831
    %4096 = vmatprep.subr.bf16.mxu0 %v3841
    %4097 = vmatpush1.bf16.msra.mxu0 %v3840
    %4098 = vmatprep.subr.bf16.mxu0 %v3849
    %4099 = vmatpush1.bf16.msra.mxu0 %v3848
    %4100 = vmatprep.subr.bf16.mxu0 %v3857
    %4101 = vmatpush1.bf16.msra.mxu0 %v3856
    %4102 = vmatprep.subr.bf16.mxu0 %v3865
    %4103 = vmatpush1.bf16.msra.mxu0 %v3864
    %4104 = vmatprep.subr.bf16.mxu0 %v3873
    %4105 = vmatpush1.bf16.msra.mxu0 %v3872
    %4106 = vmatprep.subr.bf16.mxu0 %v3881
    %4107 = vmatpush1.bf16.msra.mxu0 %v3880
    %4108 = vmatprep.subr.bf16.mxu0 %v3889
    %4109 = vmatpush1.bf16.msra.mxu0 %v3888
    %4110 = vmatprep.subr.bf16.mxu0 %v3897
    %4111 = vmatpush1.bf16.msra.mxu0 %v3896
    %4112 = vmatprep.subr.bf16.mxu0 %v3905
    %4113 = vmatpush1.bf16.msra.mxu0 %v3904
    %4114 = vmatprep.subr.bf16.mxu0 %v3913
    %4115 = vmatpush1.bf16.msra.mxu0 %v3912
    %4116 = vmatprep.subr.bf16.mxu0 %v3921
    %4117 = vmatpush1.bf16.msra.mxu0 %v3920
    %4118 = vmatprep.subr.bf16.mxu0 %v3929
    %4119 = vmatpush1.bf16.msra.mxu0 %v3928
    %4120 = vmatprep.subr.bf16.mxu0 %v3937
    %4121 = vmatpush1.bf16.msra.mxu0 %v3936
    %4122 = vmatprep.subr.bf16.mxu0 %v3945
    %4123 = vmatpush1.bf16.msra.mxu0 %v3944
    %4124 = vmatprep.subr.bf16.mxu0 %v3953
    %4125 = vmatpush1.bf16.msra.mxu0 %v3952
    %4126 = vmatprep.subr.bf16.mxu0 %v3961
    %4127 = vmatpush1.bf16.msra.mxu0 %v3960
    %4128 = vmatprep.mubr.bf16.mxu0 %v3414
    %4129 = vmatmul.mubr.bf16.gmra.mrb[0].mxu0 %v3413
    %v4130 = vpop.f32.mrb[0].mxu0
    %v4131 = vadd.f32 %v3419, %v4130
    %v4132 = vpop.f32.mrb[0].mxu0
    %v4133 = vadd.f32 %v3423, %v4132
    %v4134 = vpop.f32.mrb[0].mxu0
    %v4135 = vpop.f32.mrb[0].mxu0
    %4136 = vdwg.mxu0
    %4137 = vmatprep.subr.bf16.mxu0 %v3843
    %4138 = vmatpush1.bf16.msra.mxu0 %v3842
    %4139 = vmatprep.subr.bf16.mxu0 %v3851
    %4140 = vmatpush1.bf16.msra.mxu0 %v3850
    %4141 = vmatprep.subr.bf16.mxu0 %v3859
    %4142 = vmatpush1.bf16.msra.mxu0 %v3858
    %4143 = vmatprep.subr.bf16.mxu0 %v3867
    %4144 = vmatpush1.bf16.msra.mxu0 %v3866
    %4145 = vmatprep.subr.bf16.mxu0 %v3875
    %4146 = vmatpush1.bf16.msra.mxu0 %v3874
    %4147 = vmatprep.subr.bf16.mxu0 %v3883
    %4148 = vmatpush1.bf16.msra.mxu0 %v3882
    %4149 = vmatprep.subr.bf16.mxu0 %v3891
    %4150 = vmatpush1.bf16.msra.mxu0 %v3890
    %4151 = vmatprep.subr.bf16.mxu0 %v3899
    %4152 = vmatpush1.bf16.msra.mxu0 %v3898
    %4153 = vmatprep.subr.bf16.mxu0 %v3907
    %4154 = vmatpush1.bf16.msra.mxu0 %v3906
    %4155 = vmatprep.subr.bf16.mxu0 %v3915
    %4156 = vmatpush1.bf16.msra.mxu0 %v3914
    %4157 = vmatprep.subr.bf16.mxu0 %v3923
    %4158 = vmatpush1.bf16.msra.mxu0 %v3922
    %4159 = vmatprep.subr.bf16.mxu0 %v3931
    %4160 = vmatpush1.bf16.msra.mxu0 %v3930
    %4161 = vmatprep.subr.bf16.mxu0 %v3939
    %4162 = vmatpush1.bf16.msra.mxu0 %v3938
    %4163 = vmatprep.subr.bf16.mxu0 %v3947
    %4164 = vmatpush1.bf16.msra.mxu0 %v3946
    %4165 = vmatprep.subr.bf16.mxu0 %v3955
    %4166 = vmatpush1.bf16.msra.mxu0 %v3954
    %4167 = vmatprep.subr.bf16.mxu0 %v3963
    %4168 = vmatpush1.bf16.msra.mxu0 %v3962
    %4169 = vmatprep.mubr.bf16.mxu0 %v3414
    %4170 = vmatmul.mubr.bf16.gmra.mrb[0].mxu0 %v3413
    %v4171 = vpop.f32.mrb[0].mxu0
    %v4172 = vadd.f32 %v3427, %v4171
    %v4173 = vpop.f32.mrb[0].mxu0
    %v4174 = vadd.f32 %v3431, %v4173
    %v4175 = vpop.f32.mrb[0].mxu0
    %v4176 = vpop.f32.mrb[0].mxu0
    %4177 = vdwg.mxu0
    %4178 = vmatprep.subr.bf16.mxu0 %v3845
    %4179 = vmatpush1.bf16.msra.mxu0 %v3844
    %4180 = vmatprep.subr.bf16.mxu0 %v3853
    %4181 = vmatpush1.bf16.msra.mxu0 %v3852
    %4182 = vmatprep.subr.bf16.mxu0 %v3861
    %4183 = vmatpush1.bf16.msra.mxu0 %v3860
    %4184 = vmatprep.subr.bf16.mxu0 %v3869
    %4185 = vmatpush1.bf16.msra.mxu0 %v3868
    %4186 = vmatprep.subr.bf16.mxu0 %v3877
    %4187 = vmatpush1.bf16.msra.mxu0 %v3876
    %4188 = vmatprep.subr.bf16.mxu0 %v3885
    %4189 = vmatpush1.bf16.msra.mxu0 %v3884
    %4190 = vmatprep.subr.bf16.mxu0 %v3893
    %4191 = vmatpush1.bf16.msra.mxu0 %v3892
    %4192 = vmatprep.subr.bf16.mxu0 %v3901
    %4193 = vmatpush1.bf16.msra.mxu0 %v3900
    %4194 = vmatprep.subr.bf16.mxu0 %v3909
    %4195 = vmatpush1.bf16.msra.mxu0 %v3908
    %4196 = vmatprep.subr.bf16.mxu0 %v3917
    %4197 = vmatpush1.bf16.msra.mxu0 %v3916
    %4198 = vmatprep.subr.bf16.mxu0 %v3925
    %4199 = vmatpush1.bf16.msra.mxu0 %v3924
    %4200 = vmatprep.subr.bf16.mxu0 %v3933
    %4201 = vmatpush1.bf16.msra.mxu0 %v3932
    %4202 = vmatprep.subr.bf16.mxu0 %v3941
    %4203 = vmatpush1.bf16.msra.mxu0 %v3940
    %4204 = vmatprep.subr.bf16.mxu0 %v3949
    %4205 = vmatpush1.bf16.msra.mxu0 %v3948
    %4206 = vmatprep.subr.bf16.mxu0 %v3957
    %4207 = vmatpush1.bf16.msra.mxu0 %v3956
    %4208 = vmatprep.subr.bf16.mxu0 %v3965
    %4209 = vmatpush1.bf16.msra.mxu0 %v3964
    %4210 = vmatprep.mubr.bf16.mxu0 %v3414
    %4211 = vmatmul.mubr.bf16.gmra.mrb[0].mxu0 %v3413
    %v4212 = vpop.f32.mrb[0].mxu0
    %v4213 = vadd.f32 %v3435, %v4212
    %v4214 = vpop.f32.mrb[0].mxu0
    %v4215 = vadd.f32 %v3439, %v4214
    %v4216 = vpop.f32.mrb[0].mxu0
    %v4217 = vpop.f32.mrb[0].mxu0
    %4218 = vdwg.mxu0
    %4219 = vmatprep.subr.bf16.mxu0 %v3847
    %4220 = vmatpush1.bf16.msra.mxu0 %v3846
    %4221 = vmatprep.subr.bf16.mxu0 %v3855
    %4222 = vmatpush1.bf16.msra.mxu0 %v3854
    %4223 = vmatprep.subr.bf16.mxu0 %v3863
    %4224 = vmatpush1.bf16.msra.mxu0 %v3862
    %4225 = vmatprep.subr.bf16.mxu0 %v3871
    %4226 = vmatpush1.bf16.msra.mxu0 %v3870
    %4227 = vmatprep.subr.bf16.mxu0 %v3879
    %4228 = vmatpush1.bf16.msra.mxu0 %v3878
    %4229 = vmatprep.subr.bf16.mxu0 %v3887
    %4230 = vmatpush1.bf16.msra.mxu0 %v3886
    %4231 = vmatprep.subr.bf16.mxu0 %v3895
    %4232 = vmatpush1.bf16.msra.mxu0 %v3894
    %4233 = vmatprep.subr.bf16.mxu0 %v3903
    %4234 = vmatpush1.bf16.msra.mxu0 %v3902
    %4235 = vmatprep.subr.bf16.mxu0 %v3911
    %4236 = vmatpush1.bf16.msra.mxu0 %v3910
    %4237 = vmatprep.subr.bf16.mxu0 %v3919
    %4238 = vmatpush1.bf16.msra.mxu0 %v3918
    %4239 = vmatprep.subr.bf16.mxu0 %v3927
    %4240 = vmatpush1.bf16.msra.mxu0 %v3926
    %4241 = vmatprep.subr.bf16.mxu0 %v3935
    %4242 = vmatpush1.bf16.msra.mxu0 %v3934
    %4243 = vmatprep.subr.bf16.mxu0 %v3943
    %4244 = vmatpush1.bf16.msra.mxu0 %v3942
    %4245 = vmatprep.subr.bf16.mxu0 %v3951
    %4246 = vmatpush1.bf16.msra.mxu0 %v3950
    %4247 = vmatprep.subr.bf16.mxu0 %v3959
    %4248 = vmatpush1.bf16.msra.mxu0 %v3958
    %4249 = vmatprep.subr.bf16.mxu0 %v3967
    %4250 = vmatpush1.bf16.msra.mxu0 %v3966
    %4251 = vmatprep.mubr.bf16.mxu0 %v3414
    %4252 = vmatmul.mubr.bf16.gmra.mrb[0].mxu0 %v3413
    %v4253 = vpop.f32.mrb[0].mxu0
    %v4254 = vadd.f32 %v3443, %v4253
    %v4255 = vpop.f32.mrb[0].mxu0
    %v4256 = vadd.f32 %v3447, %v4255
    %v4257 = vpop.f32.mrb[0].mxu0
    %v4258 = vpop.f32.mrb[0].mxu0
    %4259 = vdwg.mxu0
    %v4260 = vmax.f32 %v4131, 0.0
    %v4261 = vmax.f32 %v4133, 0.0
    %v4262 = vmax.f32 %v4172, 0.0
    %v4263 = vmax.f32 %v4174, 0.0
    %v4264 = vmax.f32 %v4213, 0.0
    %v4265 = vmax.f32 %v4215, 0.0
    %v4266 = vmax.f32 %v4254, 0.0
    %v4267 = vmax.f32 %v4256, 0.0
    %v4268 = vpack.c.bf16 %v4260, %v4260
    %v4269 = vpack.c.bf16 %v4261, %v4261
    %v4270 = vpack.c.bf16 %v4262, %v4262
    %v4271 = vpack.c.bf16 %v4263, %v4263
    %v4272 = vpack.c.bf16 %v4264, %v4264
    %v4273 = vpack.c.bf16 %v4265, %v4265
    %v4274 = vpack.c.bf16 %v4266, %v4266
    %v4275 = vpack.c.bf16 %v4267, %v4267
    %v4277 = vlaneseq
    %v4278 = vshrl.u32 %v4277, 7
    %v4279 = vsub.s32 0, %v4278
    %v4280 = vrot.slane %v3412, %v4279
    %v4281 = vlaneseq
    %v4282 = vshrl.u32 %v4281, 7
    %v4283 = vsub.s32 1, %v4282
    %v4284 = vrot.slane %v3412, %v4283
    %v4415 = vunpack.c.l.b16 %v3281
    %v4416 = vunpack.c.h.b16 %v3281
    %v4417 = vunpack.c.l.b16 %v3282
    %v4418 = vunpack.c.h.b16 %v3282
    %v4419 = vunpack.c.l.b16 %v3283
    %v4420 = vunpack.c.h.b16 %v3283
    %v4421 = vunpack.c.l.b16 %v3284
    %v4422 = vunpack.c.h.b16 %v3284
    %v4423 = vunpack.c.l.b16 %v3285
    %v4424 = vunpack.c.h.b16 %v3285
    %v4425 = vunpack.c.l.b16 %v3286
    %v4426 = vunpack.c.h.b16 %v3286
    %v4427 = vunpack.c.l.b16 %v3287
    %v4428 = vunpack.c.h.b16 %v3287
    %v4429 = vunpack.c.l.b16 %v3288
    %v4430 = vunpack.c.h.b16 %v3288
    %v4431 = vunpack.c.l.b16 %v3289
    %v4432 = vunpack.c.h.b16 %v3289
    %v4433 = vunpack.c.l.b16 %v3290
    %v4434 = vunpack.c.h.b16 %v3290
    %v4435 = vunpack.c.l.b16 %v3291
    %v4436 = vunpack.c.h.b16 %v3291
    %v4437 = vunpack.c.l.b16 %v3292
    %v4438 = vunpack.c.h.b16 %v3292
    %v4439 = vunpack.c.l.b16 %v3293
    %v4440 = vunpack.c.h.b16 %v3293
    %v4441 = vunpack.c.l.b16 %v3294
    %v4442 = vunpack.c.h.b16 %v3294
    %v4443 = vunpack.c.l.b16 %v3295
    %v4444 = vunpack.c.h.b16 %v3295
    %v4445 = vunpack.c.l.b16 %v3296
    %v4446 = vunpack.c.h.b16 %v3296
    %v4447 = vunpack.c.l.b16 %v3297
    %v4448 = vunpack.c.h.b16 %v3297
    %v4449 = vunpack.c.l.b16 %v3298
    %v4450 = vunpack.c.h.b16 %v3298
    %v4451 = vunpack.c.l.b16 %v3299
    %v4452 = vunpack.c.h.b16 %v3299
    %v4453 = vunpack.c.l.b16 %v3300
    %v4454 = vunpack.c.h.b16 %v3300
    %v4455 = vunpack.c.l.b16 %v3301
    %v4456 = vunpack.c.h.b16 %v3301
    %v4457 = vunpack.c.l.b16 %v3302
    %v4458 = vunpack.c.h.b16 %v3302
    %v4459 = vunpack.c.l.b16 %v3303
    %v4460 = vunpack.c.h.b16 %v3303
    %v4461 = vunpack.c.l.b16 %v3304
    %v4462 = vunpack.c.h.b16 %v3304
    %v4463 = vunpack.c.l.b16 %v3305
    %v4464 = vunpack.c.h.b16 %v3305
    %v4465 = vunpack.c.l.b16 %v3306
    %v4466 = vunpack.c.h.b16 %v3306
    %v4467 = vunpack.c.l.b16 %v3307
    %v4468 = vunpack.c.h.b16 %v3307
    %v4469 = vunpack.c.l.b16 %v3308
    %v4470 = vunpack.c.h.b16 %v3308
    %v4471 = vunpack.c.l.b16 %v3309
    %v4472 = vunpack.c.h.b16 %v3309
    %v4473 = vunpack.c.l.b16 %v3310
    %v4474 = vunpack.c.h.b16 %v3310
    %v4475 = vunpack.c.l.b16 %v3311
    %v4476 = vunpack.c.h.b16 %v3311
    %v4477 = vunpack.c.l.b16 %v3312
    %v4478 = vunpack.c.h.b16 %v3312
    %v4479 = vunpack.c.l.b16 %v3313
    %v4480 = vunpack.c.h.b16 %v3313
    %v4481 = vunpack.c.l.b16 %v3314
    %v4482 = vunpack.c.h.b16 %v3314
    %v4483 = vunpack.c.l.b16 %v3315
    %v4484 = vunpack.c.h.b16 %v3315
    %v4485 = vunpack.c.l.b16 %v3316
    %v4486 = vunpack.c.h.b16 %v3316
    %v4487 = vunpack.c.l.b16 %v3317
    %v4488 = vunpack.c.h.b16 %v3317
    %v4489 = vunpack.c.l.b16 %v3318
    %v4490 = vunpack.c.h.b16 %v3318
    %v4491 = vunpack.c.l.b16 %v3319
    %v4492 = vunpack.c.h.b16 %v3319
    %v4493 = vunpack.c.l.b16 %v3320
    %v4494 = vunpack.c.h.b16 %v3320
    %v4495 = vunpack.c.l.b16 %v3321
    %v4496 = vunpack.c.h.b16 %v3321
    %v4497 = vunpack.c.l.b16 %v3322
    %v4498 = vunpack.c.h.b16 %v3322
    %v4499 = vunpack.c.l.b16 %v3323
    %v4500 = vunpack.c.h.b16 %v3323
    %v4501 = vunpack.c.l.b16 %v3324
    %v4502 = vunpack.c.h.b16 %v3324
    %v4503 = vunpack.c.l.b16 %v3325
    %v4504 = vunpack.c.h.b16 %v3325
    %v4505 = vunpack.c.l.b16 %v3326
    %v4506 = vunpack.c.h.b16 %v3326
    %v4507 = vunpack.c.l.b16 %v3327
    %v4508 = vunpack.c.h.b16 %v3327
    %v4509 = vunpack.c.l.b16 %v3328
    %v4510 = vunpack.c.h.b16 %v3328
    %v4511 = vunpack.c.l.b16 %v3329
    %v4512 = vunpack.c.h.b16 %v3329
    %v4513 = vunpack.c.l.b16 %v3330
    %v4514 = vunpack.c.h.b16 %v3330
    %v4515 = vunpack.c.l.b16 %v3331
    %v4516 = vunpack.c.h.b16 %v3331
    %v4517 = vunpack.c.l.b16 %v3332
    %v4518 = vunpack.c.h.b16 %v3332
    %v4519 = vunpack.c.l.b16 %v3333
    %v4520 = vunpack.c.h.b16 %v3333
    %v4521 = vunpack.c.l.b16 %v3334
    %v4522 = vunpack.c.h.b16 %v3334
    %v4523 = vunpack.c.l.b16 %v3335
    %v4524 = vunpack.c.h.b16 %v3335
    %v4525 = vunpack.c.l.b16 %v3336
    %v4526 = vunpack.c.h.b16 %v3336
    %v4527 = vunpack.c.l.b16 %v3337
    %v4528 = vunpack.c.h.b16 %v3337
    %v4529 = vunpack.c.l.b16 %v3338
    %v4530 = vunpack.c.h.b16 %v3338
    %v4531 = vunpack.c.l.b16 %v3339
    %v4532 = vunpack.c.h.b16 %v3339
    %v4533 = vunpack.c.l.b16 %v3340
    %v4534 = vunpack.c.h.b16 %v3340
    %v4535 = vunpack.c.l.b16 %v3341
    %v4536 = vunpack.c.h.b16 %v3341
    %v4537 = vunpack.c.l.b16 %v3342
    %v4538 = vunpack.c.h.b16 %v3342
    %v4539 = vunpack.c.l.b16 %v3343
    %v4540 = vunpack.c.h.b16 %v3343
    %v4541 = vunpack.c.l.b16 %v3344
    %v4542 = vunpack.c.h.b16 %v3344
    %v4543 = vunpack.c.l.b16 %v3345
    %v4544 = vunpack.c.h.b16 %v3345
    %v4545 = vunpack.c.l.b16 %v3346
    %v4546 = vunpack.c.h.b16 %v3346
    %v4547 = vunpack.c.l.b16 %v3347
    %v4548 = vunpack.c.h.b16 %v3347
    %v4549 = vunpack.c.l.b16 %v3348
    %v4550 = vunpack.c.h.b16 %v3348
    %v4551 = vunpack.c.l.b16 %v3349
    %v4552 = vunpack.c.h.b16 %v3349
    %v4553 = vunpack.c.l.b16 %v3350
    %v4554 = vunpack.c.h.b16 %v3350
    %v4555 = vunpack.c.l.b16 %v3351
    %v4556 = vunpack.c.h.b16 %v3351
    %v4557 = vunpack.c.l.b16 %v3352
    %v4558 = vunpack.c.h.b16 %v3352
    %v4559 = vunpack.c.l.b16 %v3353
    %v4560 = vunpack.c.h.b16 %v3353
    %v4561 = vunpack.c.l.b16 %v3354
    %v4562 = vunpack.c.h.b16 %v3354
    %v4563 = vunpack.c.l.b16 %v3355
    %v4564 = vunpack.c.h.b16 %v3355
    %v4565 = vunpack.c.l.b16 %v3356
    %v4566 = vunpack.c.h.b16 %v3356
    %v4567 = vunpack.c.l.b16 %v3357
    %v4568 = vunpack.c.h.b16 %v3357
    %v4569 = vunpack.c.l.b16 %v3358
    %v4570 = vunpack.c.h.b16 %v3358
    %v4571 = vunpack.c.l.b16 %v3359
    %v4572 = vunpack.c.h.b16 %v3359
    %v4573 = vunpack.c.l.b16 %v3360
    %v4574 = vunpack.c.h.b16 %v3360
    %v4575 = vunpack.c.l.b16 %v3361
    %v4576 = vunpack.c.h.b16 %v3361
    %v4577 = vunpack.c.l.b16 %v3362
    %v4578 = vunpack.c.h.b16 %v3362
    %v4579 = vunpack.c.l.b16 %v3363
    %v4580 = vunpack.c.h.b16 %v3363
    %v4581 = vunpack.c.l.b16 %v3364
    %v4582 = vunpack.c.h.b16 %v3364
    %v4583 = vunpack.c.l.b16 %v3365
    %v4584 = vunpack.c.h.b16 %v3365
    %v4585 = vunpack.c.l.b16 %v3366
    %v4586 = vunpack.c.h.b16 %v3366
    %v4587 = vunpack.c.l.b16 %v3367
    %v4588 = vunpack.c.h.b16 %v3367
    %v4589 = vunpack.c.l.b16 %v3368
    %v4590 = vunpack.c.h.b16 %v3368
    %v4591 = vunpack.c.l.b16 %v3369
    %v4592 = vunpack.c.h.b16 %v3369
    %v4593 = vunpack.c.l.b16 %v3370
    %v4594 = vunpack.c.h.b16 %v3370
    %v4595 = vunpack.c.l.b16 %v3371
    %v4596 = vunpack.c.h.b16 %v3371
    %v4597 = vunpack.c.l.b16 %v3372
    %v4598 = vunpack.c.h.b16 %v3372
    %v4599 = vunpack.c.l.b16 %v3373
    %v4600 = vunpack.c.h.b16 %v3373
    %v4601 = vunpack.c.l.b16 %v3374
    %v4602 = vunpack.c.h.b16 %v3374
    %v4603 = vunpack.c.l.b16 %v3375
    %v4604 = vunpack.c.h.b16 %v3375
    %v4605 = vunpack.c.l.b16 %v3376
    %v4606 = vunpack.c.h.b16 %v3376
    %v4607 = vunpack.c.l.b16 %v3377
    %v4608 = vunpack.c.h.b16 %v3377
    %v4609 = vunpack.c.l.b16 %v3378
    %v4610 = vunpack.c.h.b16 %v3378
    %v4611 = vunpack.c.l.b16 %v3379
    %v4612 = vunpack.c.h.b16 %v3379
    %v4613 = vunpack.c.l.b16 %v3380
    %v4614 = vunpack.c.h.b16 %v3380
    %v4615 = vunpack.c.l.b16 %v3381
    %v4616 = vunpack.c.h.b16 %v3381
    %v4617 = vunpack.c.l.b16 %v3382
    %v4618 = vunpack.c.h.b16 %v3382
    %v4619 = vunpack.c.l.b16 %v3383
    %v4620 = vunpack.c.h.b16 %v3383
    %v4621 = vunpack.c.l.b16 %v3384
    %v4622 = vunpack.c.h.b16 %v3384
    %v4623 = vunpack.c.l.b16 %v3385
    %v4624 = vunpack.c.h.b16 %v3385
    %v4625 = vunpack.c.l.b16 %v3386
    %v4626 = vunpack.c.h.b16 %v3386
    %v4627 = vunpack.c.l.b16 %v3387
    %v4628 = vunpack.c.h.b16 %v3387
    %v4629 = vunpack.c.l.b16 %v3388
    %v4630 = vunpack.c.h.b16 %v3388
    %v4631 = vunpack.c.l.b16 %v3389
    %v4632 = vunpack.c.h.b16 %v3389
    %v4633 = vunpack.c.l.b16 %v3390
    %v4634 = vunpack.c.h.b16 %v3390
    %v4635 = vunpack.c.l.b16 %v3391
    %v4636 = vunpack.c.h.b16 %v3391
    %v4637 = vunpack.c.l.b16 %v3392
    %v4638 = vunpack.c.h.b16 %v3392
    %v4639 = vunpack.c.l.b16 %v3393
    %v4640 = vunpack.c.h.b16 %v3393
    %v4641 = vunpack.c.l.b16 %v3394
    %v4642 = vunpack.c.h.b16 %v3394
    %v4643 = vunpack.c.l.b16 %v3395
    %v4644 = vunpack.c.h.b16 %v3395
    %v4645 = vunpack.c.l.b16 %v3396
    %v4646 = vunpack.c.h.b16 %v3396
    %v4647 = vunpack.c.l.b16 %v3397
    %v4648 = vunpack.c.h.b16 %v3397
    %v4649 = vunpack.c.l.b16 %v3398
    %v4650 = vunpack.c.h.b16 %v3398
    %v4651 = vunpack.c.l.b16 %v3399
    %v4652 = vunpack.c.h.b16 %v3399
    %v4653 = vunpack.c.l.b16 %v3400
    %v4654 = vunpack.c.h.b16 %v3400
    %v4655 = vunpack.c.l.b16 %v3401
    %v4656 = vunpack.c.h.b16 %v3401
    %v4657 = vunpack.c.l.b16 %v3402
    %v4658 = vunpack.c.h.b16 %v3402
    %v4659 = vunpack.c.l.b16 %v3403
    %v4660 = vunpack.c.h.b16 %v3403
    %v4661 = vunpack.c.l.b16 %v3404
    %v4662 = vunpack.c.h.b16 %v3404
    %v4663 = vunpack.c.l.b16 %v3405
    %v4664 = vunpack.c.h.b16 %v3405
    %v4665 = vunpack.c.l.b16 %v3406
    %v4666 = vunpack.c.h.b16 %v3406
    %v4667 = vunpack.c.l.b16 %v3407
    %v4668 = vunpack.c.h.b16 %v3407
    %v4669 = vunpack.c.l.b16 %v3408
    %v4670 = vunpack.c.h.b16 %v3408
    %v4671 = vpack.c.b16 %v4417, %v4415
    %v4672 = vpack.c.b16 %v4418, %v4416
    %v4673 = vpack.c.b16 %v4421, %v4419
    %v4674 = vpack.c.b16 %v4422, %v4420
    %v4675 = vpack.c.b16 %v4425, %v4423
    %v4676 = vpack.c.b16 %v4426, %v4424
    %v4677 = vpack.c.b16 %v4429, %v4427
    %v4678 = vpack.c.b16 %v4430, %v4428
    %v4679 = vpack.c.b16 %v4433, %v4431
    %v4680 = vpack.c.b16 %v4434, %v4432
    %v4681 = vpack.c.b16 %v4437, %v4435
    %v4682 = vpack.c.b16 %v4438, %v4436
    %v4683 = vpack.c.b16 %v4441, %v4439
    %v4684 = vpack.c.b16 %v4442, %v4440
    %v4685 = vpack.c.b16 %v4445, %v4443
    %v4686 = vpack.c.b16 %v4446, %v4444
    %v4687 = vpack.c.b16 %v4449, %v4447
    %v4688 = vpack.c.b16 %v4450, %v4448
    %v4689 = vpack.c.b16 %v4453, %v4451
    %v4690 = vpack.c.b16 %v4454, %v4452
    %v4691 = vpack.c.b16 %v4457, %v4455
    %v4692 = vpack.c.b16 %v4458, %v4456
    %v4693 = vpack.c.b16 %v4461, %v4459
    %v4694 = vpack.c.b16 %v4462, %v4460
    %v4695 = vpack.c.b16 %v4465, %v4463
    %v4696 = vpack.c.b16 %v4466, %v4464
    %v4697 = vpack.c.b16 %v4469, %v4467
    %v4698 = vpack.c.b16 %v4470, %v4468
    %v4699 = vpack.c.b16 %v4473, %v4471
    %v4700 = vpack.c.b16 %v4474, %v4472
    %v4701 = vpack.c.b16 %v4477, %v4475
    %v4702 = vpack.c.b16 %v4478, %v4476
    %v4703 = vpack.c.b16 %v4481, %v4479
    %v4704 = vpack.c.b16 %v4482, %v4480
    %v4705 = vpack.c.b16 %v4485, %v4483
    %v4706 = vpack.c.b16 %v4486, %v4484
    %v4707 = vpack.c.b16 %v4489, %v4487
    %v4708 = vpack.c.b16 %v4490, %v4488
    %v4709 = vpack.c.b16 %v4493, %v4491
    %v4710 = vpack.c.b16 %v4494, %v4492
    %v4711 = vpack.c.b16 %v4497, %v4495
    %v4712 = vpack.c.b16 %v4498, %v4496
    %v4713 = vpack.c.b16 %v4501, %v4499
    %v4714 = vpack.c.b16 %v4502, %v4500
    %v4715 = vpack.c.b16 %v4505, %v4503
    %v4716 = vpack.c.b16 %v4506, %v4504
    %v4717 = vpack.c.b16 %v4509, %v4507
    %v4718 = vpack.c.b16 %v4510, %v4508
    %v4719 = vpack.c.b16 %v4513, %v4511
    %v4720 = vpack.c.b16 %v4514, %v4512
    %v4721 = vpack.c.b16 %v4517, %v4515
    %v4722 = vpack.c.b16 %v4518, %v4516
    %v4723 = vpack.c.b16 %v4521, %v4519
    %v4724 = vpack.c.b16 %v4522, %v4520
    %v4725 = vpack.c.b16 %v4525, %v4523
    %v4726 = vpack.c.b16 %v4526, %v4524
    %v4727 = vpack.c.b16 %v4529, %v4527
    %v4728 = vpack.c.b16 %v4530, %v4528
    %v4729 = vpack.c.b16 %v4533, %v4531
    %v4730 = vpack.c.b16 %v4534, %v4532
    %v4731 = vpack.c.b16 %v4537, %v4535
    %v4732 = vpack.c.b16 %v4538, %v4536
    %v4733 = vpack.c.b16 %v4541, %v4539
    %v4734 = vpack.c.b16 %v4542, %v4540
    %v4735 = vpack.c.b16 %v4545, %v4543
    %v4736 = vpack.c.b16 %v4546, %v4544
    %v4737 = vpack.c.b16 %v4549, %v4547
    %v4738 = vpack.c.b16 %v4550, %v4548
    %v4739 = vpack.c.b16 %v4553, %v4551
    %v4740 = vpack.c.b16 %v4554, %v4552
    %v4741 = vpack.c.b16 %v4557, %v4555
    %v4742 = vpack.c.b16 %v4558, %v4556
    %v4743 = vpack.c.b16 %v4561, %v4559
    %v4744 = vpack.c.b16 %v4562, %v4560
    %v4745 = vpack.c.b16 %v4565, %v4563
    %v4746 = vpack.c.b16 %v4566, %v4564
    %v4747 = vpack.c.b16 %v4569, %v4567
    %v4748 = vpack.c.b16 %v4570, %v4568
    %v4749 = vpack.c.b16 %v4573, %v4571
    %v4750 = vpack.c.b16 %v4574, %v4572
    %v4751 = vpack.c.b16 %v4577, %v4575
    %v4752 = vpack.c.b16 %v4578, %v4576
    %v4753 = vpack.c.b16 %v4581, %v4579
    %v4754 = vpack.c.b16 %v4582, %v4580
    %v4755 = vpack.c.b16 %v4585, %v4583
    %v4756 = vpack.c.b16 %v4586, %v4584
    %v4757 = vpack.c.b16 %v4589, %v4587
    %v4758 = vpack.c.b16 %v4590, %v4588
    %v4759 = vpack.c.b16 %v4593, %v4591
    %v4760 = vpack.c.b16 %v4594, %v4592
    %v4761 = vpack.c.b16 %v4597, %v4595
    %v4762 = vpack.c.b16 %v4598, %v4596
    %v4763 = vpack.c.b16 %v4601, %v4599
    %v4764 = vpack.c.b16 %v4602, %v4600
    %v4765 = vpack.c.b16 %v4605, %v4603
    %v4766 = vpack.c.b16 %v4606, %v4604
    %v4767 = vpack.c.b16 %v4609, %v4607
    %v4768 = vpack.c.b16 %v4610, %v4608
    %v4769 = vpack.c.b16 %v4613, %v4611
    %v4770 = vpack.c.b16 %v4614, %v4612
    %v4771 = vpack.c.b16 %v4617, %v4615
    %v4772 = vpack.c.b16 %v4618, %v4616
    %v4773 = vpack.c.b16 %v4621, %v4619
    %v4774 = vpack.c.b16 %v4622, %v4620
    %v4775 = vpack.c.b16 %v4625, %v4623
    %v4776 = vpack.c.b16 %v4626, %v4624
    %v4777 = vpack.c.b16 %v4629, %v4627
    %v4778 = vpack.c.b16 %v4630, %v4628
    %v4779 = vpack.c.b16 %v4633, %v4631
    %v4780 = vpack.c.b16 %v4634, %v4632
    %v4781 = vpack.c.b16 %v4637, %v4635
    %v4782 = vpack.c.b16 %v4638, %v4636
    %v4783 = vpack.c.b16 %v4641, %v4639
    %v4784 = vpack.c.b16 %v4642, %v4640
    %v4785 = vpack.c.b16 %v4645, %v4643
    %v4786 = vpack.c.b16 %v4646, %v4644
    %v4787 = vpack.c.b16 %v4649, %v4647
    %v4788 = vpack.c.b16 %v4650, %v4648
    %v4789 = vpack.c.b16 %v4653, %v4651
    %v4790 = vpack.c.b16 %v4654, %v4652
    %v4791 = vpack.c.b16 %v4657, %v4655
    %v4792 = vpack.c.b16 %v4658, %v4656
    %v4793 = vpack.c.b16 %v4661, %v4659
    %v4794 = vpack.c.b16 %v4662, %v4660
    %v4795 = vpack.c.b16 %v4665, %v4663
    %v4796 = vpack.c.b16 %v4666, %v4664
    %v4797 = vpack.c.b16 %v4669, %v4667
    %v4798 = vpack.c.b16 %v4670, %v4668
    %4927 = vmatprep.subr.bf16.mxu0 %v4672
    %4928 = vmatpush1.bf16.msra.mxu0 %v4671
    %4929 = vmatprep.subr.bf16.mxu0 %v4674
    %4930 = vmatpush1.bf16.msra.mxu0 %v4673
    %4931 = vmatprep.subr.bf16.mxu0 %v4676
    %4932 = vmatpush1.bf16.msra.mxu0 %v4675
    %4933 = vmatprep.subr.bf16.mxu0 %v4678
    %4934 = vmatpush1.bf16.msra.mxu0 %v4677
    %4935 = vmatprep.subr.bf16.mxu0 %v4680
    %4936 = vmatpush1.bf16.msra.mxu0 %v4679
    %4937 = vmatprep.subr.bf16.mxu0 %v4682
    %4938 = vmatpush1.bf16.msra.mxu0 %v4681
    %4939 = vmatprep.subr.bf16.mxu0 %v4684
    %4940 = vmatpush1.bf16.msra.mxu0 %v4683
    %4941 = vmatprep.subr.bf16.mxu0 %v4686
    %4942 = vmatpush1.bf16.msra.mxu0 %v4685
    %4943 = vmatprep.subr.bf16.mxu0 %v4688
    %4944 = vmatpush1.bf16.msra.mxu0 %v4687
    %4945 = vmatprep.subr.bf16.mxu0 %v4690
    %4946 = vmatpush1.bf16.msra.mxu0 %v4689
    %4947 = vmatprep.subr.bf16.mxu0 %v4692
    %4948 = vmatpush1.bf16.msra.mxu0 %v4691
    %4949 = vmatprep.subr.bf16.mxu0 %v4694
    %4950 = vmatpush1.bf16.msra.mxu0 %v4693
    %4951 = vmatprep.subr.bf16.mxu0 %v4696
    %4952 = vmatpush1.bf16.msra.mxu0 %v4695
    %4953 = vmatprep.subr.bf16.mxu0 %v4698
    %4954 = vmatpush1.bf16.msra.mxu0 %v4697
    %4955 = vmatprep.subr.bf16.mxu0 %v4700
    %4956 = vmatpush1.bf16.msra.mxu0 %v4699
    %4957 = vmatprep.subr.bf16.mxu0 %v4702
    %4958 = vmatpush1.bf16.msra.mxu0 %v4701
    %4959 = vmatprep.mubr.bf16.mxu0 %v4269
    %4960 = vmatmul.mubr.bf16.gmra.mrb[0].mxu0 %v4268
    %v4961 = vpop.f32.mrb[0].mxu0
    %v4962 = vadd.f32 %v4280, %v4961
    %v4963 = vpop.f32.mrb[0].mxu0
    %v4964 = vadd.f32 %v4284, %v4963
    %v4965 = vpop.f32.mrb[0].mxu0
    %v4966 = vpop.f32.mrb[0].mxu0
    %4967 = vdwg.mxu0
    %4968 = vmatprep.subr.bf16.mxu0 %v4704
    %4969 = vmatpush1.bf16.msra.mxu0 %v4703
    %4970 = vmatprep.subr.bf16.mxu0 %v4706
    %4971 = vmatpush1.bf16.msra.mxu0 %v4705
    %4972 = vmatprep.subr.bf16.mxu0 %v4708
    %4973 = vmatpush1.bf16.msra.mxu0 %v4707
    %4974 = vmatprep.subr.bf16.mxu0 %v4710
    %4975 = vmatpush1.bf16.msra.mxu0 %v4709
    %4976 = vmatprep.subr.bf16.mxu0 %v4712
    %4977 = vmatpush1.bf16.msra.mxu0 %v4711
    %4978 = vmatprep.subr.bf16.mxu0 %v4714
    %4979 = vmatpush1.bf16.msra.mxu0 %v4713
    %4980 = vmatprep.subr.bf16.mxu0 %v4716
    %4981 = vmatpush1.bf16.msra.mxu0 %v4715
    %4982 = vmatprep.subr.bf16.mxu0 %v4718
    %4983 = vmatpush1.bf16.msra.mxu0 %v4717
    %4984 = vmatprep.subr.bf16.mxu0 %v4720
    %4985 = vmatpush1.bf16.msra.mxu0 %v4719
    %4986 = vmatprep.subr.bf16.mxu0 %v4722
    %4987 = vmatpush1.bf16.msra.mxu0 %v4721
    %4988 = vmatprep.subr.bf16.mxu0 %v4724
    %4989 = vmatpush1.bf16.msra.mxu0 %v4723
    %4990 = vmatprep.subr.bf16.mxu0 %v4726
    %4991 = vmatpush1.bf16.msra.mxu0 %v4725
    %4992 = vmatprep.subr.bf16.mxu0 %v4728
    %4993 = vmatpush1.bf16.msra.mxu0 %v4727
    %4994 = vmatprep.subr.bf16.mxu0 %v4730
    %4995 = vmatpush1.bf16.msra.mxu0 %v4729
    %4996 = vmatprep.subr.bf16.mxu0 %v4732
    %4997 = vmatpush1.bf16.msra.mxu0 %v4731
    %4998 = vmatprep.subr.bf16.mxu0 %v4734
    %4999 = vmatpush1.bf16.msra.mxu0 %v4733
    %5000 = vmatprep.mubr.bf16.mxu0 %v4271
    %5001 = vmatmul.mubr.bf16.gmra.mrb[0].mxu0 %v4270
    %v5002 = vpop.f32.mrb[0].mxu0
    %v5003 = vadd.f32 %v4962, %v5002
    %v5004 = vpop.f32.mrb[0].mxu0
    %v5005 = vadd.f32 %v4964, %v5004
    %v5006 = vpop.f32.mrb[0].mxu0
    %v5007 = vpop.f32.mrb[0].mxu0
    %5008 = vdwg.mxu0
    %5009 = vmatprep.subr.bf16.mxu0 %v4736
    %5010 = vmatpush1.bf16.msra.mxu0 %v4735
    %5011 = vmatprep.subr.bf16.mxu0 %v4738
    %5012 = vmatpush1.bf16.msra.mxu0 %v4737
    %5013 = vmatprep.subr.bf16.mxu0 %v4740
    %5014 = vmatpush1.bf16.msra.mxu0 %v4739
    %5015 = vmatprep.subr.bf16.mxu0 %v4742
    %5016 = vmatpush1.bf16.msra.mxu0 %v4741
    %5017 = vmatprep.subr.bf16.mxu0 %v4744
    %5018 = vmatpush1.bf16.msra.mxu0 %v4743
    %5019 = vmatprep.subr.bf16.mxu0 %v4746
    %5020 = vmatpush1.bf16.msra.mxu0 %v4745
    %5021 = vmatprep.subr.bf16.mxu0 %v4748
    %5022 = vmatpush1.bf16.msra.mxu0 %v4747
    %5023 = vmatprep.subr.bf16.mxu0 %v4750
    %5024 = vmatpush1.bf16.msra.mxu0 %v4749
    %5025 = vmatprep.subr.bf16.mxu0 %v4752
    %5026 = vmatpush1.bf16.msra.mxu0 %v4751
    %5027 = vmatprep.subr.bf16.mxu0 %v4754
    %5028 = vmatpush1.bf16.msra.mxu0 %v4753
    %5029 = vmatprep.subr.bf16.mxu0 %v4756
    %5030 = vmatpush1.bf16.msra.mxu0 %v4755
    %5031 = vmatprep.subr.bf16.mxu0 %v4758
    %5032 = vmatpush1.bf16.msra.mxu0 %v4757
    %5033 = vmatprep.subr.bf16.mxu0 %v4760
    %5034 = vmatpush1.bf16.msra.mxu0 %v4759
    %5035 = vmatprep.subr.bf16.mxu0 %v4762
    %5036 = vmatpush1.bf16.msra.mxu0 %v4761
    %5037 = vmatprep.subr.bf16.mxu0 %v4764
    %5038 = vmatpush1.bf16.msra.mxu0 %v4763
    %5039 = vmatprep.subr.bf16.mxu0 %v4766
    %5040 = vmatpush1.bf16.msra.mxu0 %v4765
    %5041 = vmatprep.mubr.bf16.mxu0 %v4273
    %5042 = vmatmul.mubr.bf16.gmra.mrb[0].mxu0 %v4272
    %v5043 = vpop.f32.mrb[0].mxu0
    %v5044 = vadd.f32 %v5003, %v5043
    %v5045 = vpop.f32.mrb[0].mxu0
    %v5046 = vadd.f32 %v5005, %v5045
    %v5047 = vpop.f32.mrb[0].mxu0
    %v5048 = vpop.f32.mrb[0].mxu0
    %5049 = vdwg.mxu0
    %5050 = vmatprep.subr.bf16.mxu0 %v4768
    %5051 = vmatpush1.bf16.msra.mxu0 %v4767
    %5052 = vmatprep.subr.bf16.mxu0 %v4770
    %5053 = vmatpush1.bf16.msra.mxu0 %v4769
    %5054 = vmatprep.subr.bf16.mxu0 %v4772
    %5055 = vmatpush1.bf16.msra.mxu0 %v4771
    %5056 = vmatprep.subr.bf16.mxu0 %v4774
    %5057 = vmatpush1.bf16.msra.mxu0 %v4773
    %5058 = vmatprep.subr.bf16.mxu0 %v4776
    %5059 = vmatpush1.bf16.msra.mxu0 %v4775
    %5060 = vmatprep.subr.bf16.mxu0 %v4778
    %5061 = vmatpush1.bf16.msra.mxu0 %v4777
    %5062 = vmatprep.subr.bf16.mxu0 %v4780
    %5063 = vmatpush1.bf16.msra.mxu0 %v4779
    %5064 = vmatprep.subr.bf16.mxu0 %v4782
    %5065 = vmatpush1.bf16.msra.mxu0 %v4781
    %5066 = vmatprep.subr.bf16.mxu0 %v4784
    %5067 = vmatpush1.bf16.msra.mxu0 %v4783
    %5068 = vmatprep.subr.bf16.mxu0 %v4786
    %5069 = vmatpush1.bf16.msra.mxu0 %v4785
    %5070 = vmatprep.subr.bf16.mxu0 %v4788
    %5071 = vmatpush1.bf16.msra.mxu0 %v4787
    %5072 = vmatprep.subr.bf16.mxu0 %v4790
    %5073 = vmatpush1.bf16.msra.mxu0 %v4789
    %5074 = vmatprep.subr.bf16.mxu0 %v4792
    %5075 = vmatpush1.bf16.msra.mxu0 %v4791
    %5076 = vmatprep.subr.bf16.mxu0 %v4794
    %5077 = vmatpush1.bf16.msra.mxu0 %v4793
    %5078 = vmatprep.subr.bf16.mxu0 %v4796
    %5079 = vmatpush1.bf16.msra.mxu0 %v4795
    %5080 = vmatprep.subr.bf16.mxu0 %v4798
    %5081 = vmatpush1.bf16.msra.mxu0 %v4797
    %5082 = vmatprep.mubr.bf16.mxu0 %v4275
    %5083 = vmatmul.mubr.bf16.gmra.mrb[0].mxu0 %v4274
    %v5084 = vpop.f32.mrb[0].mxu0
    %v5085 = vadd.f32 %v5044, %v5084
    %v5086 = vpop.f32.mrb[0].mxu0
    %v5087 = vadd.f32 %v5046, %v5086
    %v5088 = vpop.f32.mrb[0].mxu0
    %v5089 = vpop.f32.mrb[0].mxu0
    %5090 = vdwg.mxu0
    %v5091 = vadd.f32 %v3147, %v962
    %v5092 = vadd.f32 %v3149, %v963
    %s5093 = scalar_lea.vmem [#allocation11], 16
    %v5094 = vld [vmem:[%s5093] ss:$8 sm:$0x3]
    %s5095 = scalar_lea.vmem [#allocation11], 17
    %v5096 = vld [vmem:[%s5095] ss:$8 sm:$0x3]
    %v5097 = vadd.f32 %v5091, %v5092
    %5098 = vadd.xlane.f32.xlu0 %v5097
    %v5099 = vpop.xlane.xlu0 %5098
    %v5100 = vmul.f32 %v5099, %v624
    %v5101 = vsub.f32 %v5091, %v5100
    %v5102 = vsub.f32 %v5092, %v5100
    %v5103 = vmul.f32 %v5101, %v5101
    %v5104 = vmul.f32 %v5102, %v5102
    %v5105 = vadd.f32 %v5103, %v5104
    %5106 = vadd.xlane.f32.xlu0 %v5105
    %v5107 = vpop.xlane.xlu0 %5106
    %v5108 = vmul.f32 %v5107, %v624
    %v5109 = vadd.f32 %v5108, 1e-05
    %v5110 = vrsqrt.pop %v5109
    %v5111 = vmul.f32 %v5101, %v5110
    %v5112 = vmul.f32 %v5102, %v5110
    %v5114 = vlaneseq
    %v5115 = vshrl.u32 %v5114, 7
    %v5116 = vsub.s32 0, %v5115
    %v5117 = vrot.slane %v5094, %v5116
    %v5118 = vlaneseq
    %v5119 = vshrl.u32 %v5118, 7
    %v5120 = vsub.s32 1, %v5119
    %v5121 = vrot.slane %v5094, %v5120
    %v5124 = vmul.f32 %v5111, %v5117
    %v5125 = vmul.f32 %v5112, %v5121
    %v5127 = vlaneseq
    %v5128 = vshrl.u32 %v5127, 7
    %v5129 = vsub.s32 0, %v5128
    %v5130 = vrot.slane %v5096, %v5129
    %v5131 = vlaneseq
    %v5132 = vshrl.u32 %v5131, 7
    %v5133 = vsub.s32 1, %v5132
    %v5134 = vrot.slane %v5096, %v5133
    %v5137 = vadd.f32 %v5124, %v5130
    %v5138 = vadd.f32 %v5125, %v5134
    %5139 = vst [vmem:[#allocation13] sm:$0xff] %v5137
    %5140 = vst [vmem:[#allocation13 + $0x8] sm:$0xff] %v5138
    %v5141 = vadd.f32 %v5085, %v1214
    %v5142 = vadd.f32 %v5087, %v1215
    %s5143 = scalar_lea.vmem [#allocation11], 18
    %v5144 = vld [vmem:[%s5143] ss:$8 sm:$0x3]
    %s5145 = scalar_lea.vmem [#allocation11], 19
    %v5146 = vld [vmem:[%s5145] ss:$8 sm:$0x3]
    %v5147 = vadd.f32 %v5141, %v5142
    %5148 = vadd.xlane.f32.xlu0 %v5147
    %v5149 = vpop.xlane.xlu0 %5148
    %v5150 = vmul.f32 %v5149, %v624
    %v5151 = vsub.f32 %v5141, %v5150
    %v5152 = vsub.f32 %v5142, %v5150
    %v5153 = vmul.f32 %v5151, %v5151
    %v5154 = vmul.f32 %v5152, %v5152
    %v5155 = vadd.f32 %v5153, %v5154
    %5156 = vadd.xlane.f32.xlu0 %v5155
    %v5157 = vpop.xlane.xlu0 %5156
    %v5158 = vmul.f32 %v5157, %v624
    %v5159 = vadd.f32 %v5158, 1e-05
    %v5160 = vrsqrt.pop %v5159
    %v5161 = vmul.f32 %v5151, %v5160
    %v5162 = vmul.f32 %v5152, %v5160
    %v5164 = vlaneseq
    %v5165 = vshrl.u32 %v5164, 7
    %v5166 = vsub.s32 0, %v5165
    %v5167 = vrot.slane %v5144, %v5166
    %v5168 = vlaneseq
    %v5169 = vshrl.u32 %v5168, 7
    %v5170 = vsub.s32 1, %v5169
    %v5171 = vrot.slane %v5144, %v5170
    %v5174 = vmul.f32 %v5161, %v5167
    %v5175 = vmul.f32 %v5162, %v5171
    %v5177 = vlaneseq
    %v5178 = vshrl.u32 %v5177, 7
    %v5179 = vsub.s32 0, %v5178
    %v5180 = vrot.slane %v5146, %v5179
    %v5181 = vlaneseq
    %v5182 = vshrl.u32 %v5181, 7
    %v5183 = vsub.s32 1, %v5182
    %v5184 = vrot.slane %v5146, %v5183
    %v5187 = vadd.f32 %v5174, %v5180
    %v5188 = vadd.f32 %v5175, %v5184
    %5189 = vst [vmem:[#allocation14] sm:$0xff] %v5187
    %5190 = vst [vmem:[#allocation14 + $0x8] sm:$0xff] %v5188
    // Predicated region
    $region54: #{tpu_custom_call.1} parent=1 // pred_check
      _
    $region55: #{tpu_custom_call.1} parent=1 // pred_check_branch
      %5192 = sbr.rel (0) target = $region57
    $region56: #{tpu_custom_call.1} parent=1 // pred_region
      %s5194 = ssub.s32 256, 256
      %5195 = vsyncadd [#allocation4], %s5194
      %s5197 = sshll.u32 [#allocation13], 4
      %s5198 = int_to_ptr.vmem [resolvable:$true] %s5197
      %5200 = dma.vmem_to_hbm [thread:$0]  %s5198, 256, %s7, [#allocation4]
    $region57: #{tpu_custom_call.1} parent=1 // pred_fallthru
      _
    // Predicated region
    $region58: #{tpu_custom_call.1} parent=1 // pred_check
      _
    $region59: #{tpu_custom_call.1} parent=1 // pred_check_branch
      %5202 = sbr.rel (0) target = $region61
    $region60: #{tpu_custom_call.1} parent=1 // pred_region
      %s5204 = ssub.s32 256, 256
      %5205 = vsyncadd [#allocation15], %s5204
      %s5207 = sshll.u32 [#allocation14], 4
      %s5208 = int_to_ptr.vmem [resolvable:$true] %s5207
      %5210 = dma.vmem_to_hbm [thread:$0]  %s5208, 256, %s8, [#allocation15]
    $region61: #{tpu_custom_call.1} parent=1 // pred_fallthru
      _
    // Predicated region
    $region62: #{tpu_custom_call.1} parent=1 // pred_check
      _
    $region63: #{tpu_custom_call.1} parent=1 // pred_check_branch
      %5212 = sbr.rel (0) target = $region65
    $region64: #{tpu_custom_call.1} parent=1 // pred_region
      %5213 = dma.done [#allocation4], 256
    $region65: #{tpu_custom_call.1} parent=1 // pred_fallthru
      _
    // Predicated region
    $region66: #{tpu_custom_call.1} parent=1 // pred_check
      _
    $region67: #{tpu_custom_call.1} parent=1 // pred_check_branch
      %5215 = sbr.rel (0) target = $region69
    $region68: #{tpu_custom_call.1} parent=1 // pred_region
      %5216 = dma.done [#allocation15], 256
    $region69: #{tpu_custom_call.1} parent=1 // pred_fallthru
      _
    %5217 = vsyncpa [#allocation3], 1
    %5218 = vsyncpa [#allocation6], 1
    %5219 = vsyncpa [#allocation9], 1
    %5220 = vsyncpa [#allocation12], 1
    %5221 = vsyncpa [#allocation4], 1
    %5222 = vsyncpa [#allocation15], 1

</llo_original>
